<compile_context>
chip_gen: v5e
topology: v5e:2x2
jax: 0.10.0
libtpu: 0.0.40
codegen_flags: <defaults>
</compile_context>

<pallas_src>
import math
import functools

import numpy as np
import jax
import jax.numpy as jnp
from jax.experimental import pallas as pl
from jax.experimental.pallas import tpu as pltpu


_LN_EPS = 1e-5  # torch.nn.LayerNorm default


# ----------------------------- in-kernel helpers -----------------------------

def _ln_f32(x, g, b):
    """LayerNorm over the last dim (biased variance, eps=1e-5), f32 math."""
    m = jnp.mean(x, axis=-1, keepdims=True)
    v = jnp.mean((x - m) ** 2, axis=-1, keepdims=True)
    return (x - m) * jax.lax.rsqrt(v + _LN_EPS) * g + b


# ------------------------------- fused Pallas kernel -------------------------------

def _convtransformer_kernel(patch_ref, xtok_ref, conv_w_ref, conv_b_ref,
                            dng_ref, dnb_ref, ng_ref, nb_ref,
                            wq_ref, wkv_ref, wo_ref, bo_ref,
                            lng_ref, lnb_ref, w1_ref, b1_ref, w2_ref, b2_ref,
                            pg_ref, pb_ref, o_ref, *, depth, heads, dim_head, scale):
    """Full Convtransformer forward for one batch element, entirely in VMEM/vregs."""
    # ---- preamble: Conv2d(N,N,2,stride=2) as matmul over 2x2 patches + down LayerNorm ----
    p = patch_ref[0].astype(jnp.float32)                               # (n_ds, 4N)
    xc = jnp.dot(p, conv_w_ref[...], preferred_element_type=jnp.float32) + conv_b_ref[...]
    down = _ln_f32(xc, dng_ref[...], dnb_ref[...])                     # (n_ds, N)
    identity = down

    xt = xtok_ref[0].astype(jnp.float32)                               # (n_tok, N)
    xtn = _ln_f32(xt, ng_ref[...], nb_ref[...])                        # (n_tok, N)  (shared by all layers)

    inner = heads * dim_head
    n_ds, N = down.shape

    for d in range(depth):                                             # static unroll over layers
        # ---- Attention(down, xtn): to_q / to_kv are bias-free; scale folded into q ----
        q = jnp.dot(down, wq_ref[d], preferred_element_type=jnp.float32) * scale   # (n_ds, inner)
        kv = jnp.dot(xtn, wkv_ref[d], preferred_element_type=jnp.float32)          # (n_tok, 2*inner)
        wo_d = wo_ref[d]                                               # (inner, N)

        attn_out = jnp.zeros((n_ds, N), jnp.float32)
        for h in range(heads):                                         # static unroll over heads
            lo = h * dim_head
            qh = q[:, lo:lo + dim_head]                                # (n_ds, d)
            kh = kv[:, lo:lo + dim_head]                               # (n_tok, d)
            vh = kv[:, inner + lo:inner + lo + dim_head]               # (n_tok, d)
            # dots = qh @ kh^T (scale already applied to q)
            dots = jax.lax.dot_general(qh, kh, (((1,), (1,)), ((), ())),
                                       preferred_element_type=jnp.float32)  # (n_ds, n_tok)
            dots = dots - jnp.max(dots, axis=-1, keepdims=True)
            e = jnp.exp(dots)
            probs = e * pl.reciprocal(jnp.sum(e, axis=-1, keepdims=True), approx=True)
            oh = jnp.dot(probs, vh, preferred_element_type=jnp.float32)    # (n_ds, d)
            # merge heads directly through the per-head row-slice of the output projection
            attn_out = attn_out + jnp.dot(oh, wo_d[lo:lo + dim_head, :],
                                          preferred_element_type=jnp.float32)
        attn_out = attn_out + bo_ref[d]

        x1 = attn_out + down                                           # attention residual
        x2 = _ln_f32(x1, lng_ref[d], lnb_ref[d]) + x1                  # LayerNorm residual

        # ---- postNorm(FeedForward) residual (dropout = 0) ----
        h1 = jnp.dot(x2, w1_ref[d], preferred_element_type=jnp.float32) + b1_ref[d]
        # TODO(synk): torch nn.GELU defaults to exact erf; erf lowering is not guaranteed in
        # Mosaic, so the tanh-approx GELU (max abs dev ~3e-3, EUP tanh = free slot) is used.
        h1 = jax.nn.gelu(h1, approximate=True)
        ff = jnp.dot(h1, w2_ref[d], preferred_element_type=jnp.float32) + b2_ref[d]
        ff = _ln_f32(ff, pg_ref[d], pb_ref[d])
        down = ff + x2

    if depth:
        o_ref[0] = (down + identity).astype(o_ref.dtype)
    else:
        o_ref[0] = identity.astype(o_ref.dtype)


# ------------------------------- kernel wrapper -------------------------------

def convtransformer_pallas(patches, x_tok, params, *, depth, heads, dim_head, scale):
    """patches:(B,n_ds,4N), x_tok:(B,n_tok,N) -> (B,n_ds,N) final token slab."""
    B, n_ds, K4 = patches.shape
    _, n_tok, N = x_tok.shape
    inner = heads * dim_head
    dt = patches.dtype
    row = lambda a: a.reshape(1, -1)

    layers = params['layers']
    stk = lambda name: jnp.stack([lp[name] for lp in layers])                 # (D, ...)
    stk_row = lambda name: jnp.stack([lp[name].reshape(1, -1) for lp in layers])  # (D, 1, N)

    wq, wkv, wo = stk('wq'), stk('wkv'), stk('wo')
    bo = stk_row('bo')
    lng, lnb = stk_row('ln_g'), stk_row('ln_b')
    w1, b1 = stk('ff_w1'), stk_row('ff_b1')
    w2, b2 = stk('ff_w2'), stk_row('ff_b2')
    pg, pb = stk_row('post_g'), stk_row('post_b')

    def full_spec(a):
        nd = a.ndim
        return pl.BlockSpec(a.shape, lambda b, _nd=nd: (0,) * _nd)

    kernel = functools.partial(_convtransformer_kernel, depth=depth,
                               heads=heads, dim_head=dim_head, scale=scale)

    conv_b = row(params['conv_b'])
    dn_g, dn_b = row(params['down_norm_g']), row(params['down_norm_b'])
    n_g, n_b = row(params['norm_g']), row(params['norm_b'])

    return pl.pallas_call(
        kernel,
        out_shape=jax.ShapeDtypeStruct((B, n_ds, N), dt),
        grid=(B,),
        in_specs=[pl.BlockSpec((1, n_ds, K4), lambda b: (b, 0, 0)),     # patches
                  pl.BlockSpec((1, n_tok, N), lambda b: (b, 0, 0)),     # x_tok
                  full_spec(params['conv_w']),                          # (4N, N)
                  full_spec(conv_b), full_spec(dn_g), full_spec(dn_b),
                  full_spec(n_g), full_spec(n_b),
                  full_spec(wq), full_spec(wkv), full_spec(wo), full_spec(bo),
                  full_spec(lng), full_spec(lnb),
                  full_spec(w1), full_spec(b1), full_spec(w2), full_spec(b2),
                  full_spec(pg), full_spec(pb)],
        out_specs=pl.BlockSpec((1, n_ds, N), lambda b: (b, 0, 0)),
        compiler_params=pltpu.CompilerParams(dimension_semantics=("parallel",)),
    )(patches, x_tok, params['conv_w'], conv_b, dn_g, dn_b, n_g, n_b,
      wq, wkv, wo, bo, lng, lnb, w1, b1, w2, b2, pg, pb)


# ----------------------------- pure-JAX reference -----------------------------

def _ln_ref(x, g, b):
    m = jnp.mean(x, -1, keepdims=True)
    v = jnp.mean((x - m) ** 2, -1, keepdims=True)
    return (x - m) / jnp.sqrt(v + _LN_EPS) * g + b


def _forward_ref(patches, x_tok, params, *, heads, dim_head, scale):
    inner = heads * dim_head
    B, n_ds, _ = patches.shape
    n_tok = x_tok.shape[1]

    xc = patches @ params['conv_w'] + params['conv_b']
    down = _ln_ref(xc, params['down_norm_g'], params['down_norm_b'])
    identity = down
    xtn = _ln_ref(x_tok, params['norm_g'], params['norm_b'])

    for lp in params['layers']:
        q = down @ lp['wq']
        kv = xtn @ lp['wkv']
        k, v = kv[..., :inner], kv[..., inner:]
        qh = q.reshape(B, n_ds, heads, dim_head).transpose(0, 2, 1, 3)
        kh = k.reshape(B, n_tok, heads, dim_head).transpose(0, 2, 1, 3)
        vh = v.reshape(B, n_tok, heads, dim_head).transpose(0, 2, 1, 3)
        dots = jnp.einsum('bhqd,bhkd->bhqk', qh, kh) * scale
        attn = jax.nn.softmax(dots, axis=-1)
        oh = jnp.einsum('bhqk,bhkd->bhqd', attn, vh)
        o = oh.transpose(0, 2, 1, 3).reshape(B, n_ds, inner)
        down = (o @ lp['wo'] + lp['bo']) + down
        down = _ln_ref(down, lp['ln_g'], lp['ln_b']) + down
        h = down @ lp['ff_w1'] + lp['ff_b1']
        h = jax.nn.gelu(h, approximate=False)            # torch nn.GELU default (erf)
        ff = h @ lp['ff_w2'] + lp['ff_b2']
        ff = _ln_ref(ff, lp['post_g'], lp['post_b'])
        down = ff + down
    if params['layers']:
        return down + identity
    return identity


# --------------------------------- full forward ---------------------------------

def convtransformer_forward(x, params, *, heads, dim_head, use_pallas=True):
    B, C, H, W = x.shape
    assert H % 2 == 0 and W % 2 == 0, "2x2 stride-2 conv needs even H, W"
    N = C
    Hh, Wh = H // 2, W // 2
    n_ds, n_tok = Hh * Wh, H * W
    scale = dim_head ** (-0.5)
    depth = len(params['layers'])

    # space-to-depth patches for the stride-2 conv; last dim ordered (c, kh, kw)
    patches = (x.reshape(B, C, Hh, 2, Wh, 2)
                 .transpose(0, 2, 4, 1, 3, 5)
                 .reshape(B, n_ds, 4 * C))
    # 'b c h w -> b (h w) c'
    x_tok = x.reshape(B, C, n_tok).transpose(0, 2, 1)

    if use_pallas:
        out = convtransformer_pallas(patches, x_tok, params, depth=depth,
                                     heads=heads, dim_head=dim_head, scale=scale)
    else:
        out = _forward_ref(patches, x_tok, params,
                           heads=heads, dim_head=dim_head, scale=scale)

    # reverse: 'b (h w) c -> b c h w' with h=H//2, w=W//2
    return out.reshape(B, Hh, Wh, N).transpose(0, 3, 1, 2)


# -------------------------------- parameter init --------------------------------

def init_params(key, N, heads, dim_head, depth, dtype=jnp.float32):
    inner = heads * dim_head
    keys = iter(jax.random.split(key, 4 + depth * 8))

    def w(shape, fan_in):
        return jax.random.normal(next(keys), shape, dtype) / math.sqrt(fan_in)

    params = {
        'conv_w': w((4 * N, N), 4 * N),   # Conv2d(N,N,2,stride=2) weight flattened (c,kh,kw)
        'conv_b': w((N,), 4 * N),
        'down_norm_g': jnp.ones((N,), dtype), 'down_norm_b': jnp.zeros((N,), dtype),
        'norm_g': jnp.ones((N,), dtype), 'norm_b': jnp.zeros((N,), dtype),
        'layers': [],
    }
    for _ in range(depth):
        params['layers'].append({
            'wq': w((N, inner), N),
            'wkv': w((N, 2 * inner), N),
            'wo': w((inner, N), inner),
            'bo': w((N,), inner),
            'ln_g': jnp.ones((N,), dtype), 'ln_b': jnp.zeros((N,), dtype),
            'ff_w1': w((N, N), N), 'ff_b1': w((N,), N),
            'ff_w2': w((N, N), N), 'ff_b2': w((N,), N),
            'post_g': jnp.ones((N,), dtype), 'post_b': jnp.zeros((N,), dtype),
        })
    return params


# -------------------------------------- main --------------------------------------

if __name__ == "__main__":
    # lane-aligned small shapes: N = 128 channels, 8x8 spatial, 2 heads of 64
    B, N, H, W = 2, 128, 8, 8
    heads, dim_head, depth = 2, 64, 2

    key = jax.random.PRNGKey(0)
    kx, kp = jax.random.split(key)
    x = jax.random.normal(kx, (B, N, H, W), jnp.float32)
    params = init_params(kp, N, heads, dim_head, depth)

    pallas_fwd = jax.jit(functools.partial(
        convtransformer_forward, heads=heads, dim_head=dim_head, use_pallas=True))
    out = jax.block_until_ready(pallas_fwd(x, params))
    assert out.shape == (B, N, H // 2, W // 2), out.shape

    ref = jax.block_until_ready(convtransformer_forward(
        x, params, heads=heads, dim_head=dim_head, use_pallas=False))
    # tolerance covers the in-kernel tanh-GELU and approx-reciprocal softmax
    np.testing.assert_allclose(np.asarray(out), np.asarray(ref), rtol=2e-2, atol=2e-2)

    print("KERNEL_OK")
</pallas_src>

<mosaic_0001>
module attributes {stable_mosaic.version = 11 : i64} {
  func.func @_convtransformer_kernel(%arg0: i32, %arg1: memref<1x16x512xf32, #tpu.memory_space<vmem>>, %arg2: memref<1x64x128xf32, #tpu.memory_space<vmem>>, %arg3: memref<512x128xf32, #tpu.memory_space<vmem>>, %arg4: memref<1x128xf32, #tpu.memory_space<vmem>>, %arg5: memref<1x128xf32, #tpu.memory_space<vmem>>, %arg6: memref<1x128xf32, #tpu.memory_space<vmem>>, %arg7: memref<1x128xf32, #tpu.memory_space<vmem>>, %arg8: memref<1x128xf32, #tpu.memory_space<vmem>>, %arg9: memref<2x128x128xf32, #tpu.memory_space<vmem>>, %arg10: memref<2x128x256xf32, #tpu.memory_space<vmem>>, %arg11: memref<2x128x128xf32, #tpu.memory_space<vmem>>, %arg12: memref<2x1x128xf32, #tpu.memory_space<vmem>>, %arg13: memref<2x1x128xf32, #tpu.memory_space<vmem>>, %arg14: memref<2x1x128xf32, #tpu.memory_space<vmem>>, %arg15: memref<2x128x128xf32, #tpu.memory_space<vmem>>, %arg16: memref<2x1x128xf32, #tpu.memory_space<vmem>>, %arg17: memref<2x128x128xf32, #tpu.memory_space<vmem>>, %arg18: memref<2x1x128xf32, #tpu.memory_space<vmem>>, %arg19: memref<2x1x128xf32, #tpu.memory_space<vmem>>, %arg20: memref<2x1x128xf32, #tpu.memory_space<vmem>>, %arg21: memref<1x16x128xf32, #tpu.memory_space<vmem>>) attributes {dimension_semantics = [#tpu.dimension_semantics<parallel>], iteration_bounds = array<i64: 2>, scalar_prefetch = 0 : i64, scratch_operands = 0 : i64, tpu.core_type = #tpu.core_type<tc>, window_params = [{transform_indices = @transform_0, window_bounds = array<i64: 1, 16, 512>}, {transform_indices = @transform_1, window_bounds = array<i64: 1, 64, 128>}, {pipeline_mode = #tpu.pipeline_mode<synchronous>, transform_indices = @transform_2, window_bounds = array<i64: 512, 128>}, {pipeline_mode = #tpu.pipeline_mode<synchronous>, transform_indices = @transform_3, window_bounds = array<i64: 1, 128>}, {pipeline_mode = #tpu.pipeline_mode<synchronous>, transform_indices = @transform_4, window_bounds = array<i64: 1, 128>}, {pipeline_mode = #tpu.pipeline_mode<synchronous>, transform_indices = @transform_5, window_bounds = array<i64: 1, 128>}, {pipeline_mode = #tpu.pipeline_mode<synchronous>, transform_indices = @transform_6, window_bounds = array<i64: 1, 128>}, {pipeline_mode = #tpu.pipeline_mode<synchronous>, transform_indices = @transform_7, window_bounds = array<i64: 1, 128>}, {pipeline_mode = #tpu.pipeline_mode<synchronous>, transform_indices = @transform_8, window_bounds = array<i64: 2, 128, 128>}, {pipeline_mode = #tpu.pipeline_mode<synchronous>, transform_indices = @transform_9, window_bounds = array<i64: 2, 128, 256>}, {pipeline_mode = #tpu.pipeline_mode<synchronous>, transform_indices = @transform_10, window_bounds = array<i64: 2, 128, 128>}, {pipeline_mode = #tpu.pipeline_mode<synchronous>, transform_indices = @transform_11, window_bounds = array<i64: 2, 1, 128>}, {pipeline_mode = #tpu.pipeline_mode<synchronous>, transform_indices = @transform_12, window_bounds = array<i64: 2, 1, 128>}, {pipeline_mode = #tpu.pipeline_mode<synchronous>, transform_indices = @transform_13, window_bounds = array<i64: 2, 1, 128>}, {pipeline_mode = #tpu.pipeline_mode<synchronous>, transform_indices = @transform_14, window_bounds = array<i64: 2, 128, 128>}, {pipeline_mode = #tpu.pipeline_mode<synchronous>, transform_indices = @transform_15, window_bounds = array<i64: 2, 1, 128>}, {pipeline_mode = #tpu.pipeline_mode<synchronous>, transform_indices = @transform_16, window_bounds = array<i64: 2, 128, 128>}, {pipeline_mode = #tpu.pipeline_mode<synchronous>, transform_indices = @transform_17, window_bounds = array<i64: 2, 1, 128>}, {pipeline_mode = #tpu.pipeline_mode<synchronous>, transform_indices = @transform_18, window_bounds = array<i64: 2, 1, 128>}, {pipeline_mode = #tpu.pipeline_mode<synchronous>, transform_indices = @transform_19, window_bounds = array<i64: 2, 1, 128>}, {transform_indices = @transform_20, window_bounds = array<i64: 1, 16, 128>}]} {
    %c0 = arith.constant 0 : index
    %c0_0 = arith.constant 0 : index
    %c0_1 = arith.constant 0 : index
    %0 = vector.load %arg1[%c0, %c0_0, %c0_1] : memref<1x16x512xf32, #tpu.memory_space<vmem>>, vector<1x16x512xf32>
    %1 = vector.shape_cast %0 : vector<1x16x512xf32> to vector<16x512xf32>
    %c0_2 = arith.constant 0 : index
    %c0_3 = arith.constant 0 : index
    %2 = vector.load %arg3[%c0_2, %c0_3] : memref<512x128xf32, #tpu.memory_space<vmem>>, vector<512x128xf32>
    %cst = arith.constant dense<0.000000e+00> : vector<16x128xf32>
    %3 = tpu.matmul %1, %2, %cst {dimension_numbers = #tpu.dot_dimension_numbers<[1], [0], [0], [1], [0, 0, 1, 1], [], []>} : vector<16x512xf32>, vector<512x128xf32>, vector<16x128xf32> -> vector<16x128xf32>
    %c0_4 = arith.constant 0 : index
    %c0_5 = arith.constant 0 : index
    %4 = vector.load %arg4[%c0_4, %c0_5] : memref<1x128xf32, #tpu.memory_space<vmem>>, vector<1x128xf32>
    %5 = vector.broadcast %4 : vector<1x128xf32> to vector<16x128xf32>
    %6 = arith.addf %3, %5 : vector<16x128xf32>
    %c0_6 = arith.constant 0 : index
    %c0_7 = arith.constant 0 : index
    %7 = vector.load %arg5[%c0_6, %c0_7] : memref<1x128xf32, #tpu.memory_space<vmem>>, vector<1x128xf32>
    %c0_8 = arith.constant 0 : index
    %c0_9 = arith.constant 0 : index
    %8 = vector.load %arg6[%c0_8, %c0_9] : memref<1x128xf32, #tpu.memory_space<vmem>>, vector<1x128xf32>
    %cst_10 = arith.constant dense<0.000000e+00> : vector<16xf32>
    %9 = vector.multi_reduction <add>, %6, %cst_10 [1] : vector<16x128xf32> to vector<16xf32>
    %10 = vector.shape_cast %9 : vector<16xf32> to vector<16x1xf32>
    %cst_11 = arith.constant 1.280000e+02 : f32
    %11 = vector.broadcast %cst_11 : f32 to vector<16x1xf32>
    %12 = arith.divf %10, %11 : vector<16x1xf32>
    %13 = vector.broadcast %12 : vector<16x1xf32> to vector<16x128xf32>
    %14 = arith.subf %6, %13 : vector<16x128xf32>
    %15 = arith.mulf %14, %14 : vector<16x128xf32>
    %cst_12 = arith.constant dense<0.000000e+00> : vector<16xf32>
    %16 = vector.multi_reduction <add>, %15, %cst_12 [1] : vector<16x128xf32> to vector<16xf32>
    %17 = vector.shape_cast %16 : vector<16xf32> to vector<16x1xf32>
    %cst_13 = arith.constant 1.280000e+02 : f32
    %18 = vector.broadcast %cst_13 : f32 to vector<16x1xf32>
    %19 = arith.divf %17, %18 : vector<16x1xf32>
    %20 = vector.broadcast %12 : vector<16x1xf32> to vector<16x128xf32>
    %21 = arith.subf %6, %20 : vector<16x128xf32>
    %cst_14 = arith.constant 9.99999974E-6 : f32
    %22 = vector.broadcast %cst_14 : f32 to vector<16x1xf32>
    %23 = arith.addf %19, %22 : vector<16x1xf32>
    %24 = math.rsqrt %23 : vector<16x1xf32>
    %25 = vector.broadcast %24 : vector<16x1xf32> to vector<16x128xf32>
    %26 = arith.mulf %21, %25 : vector<16x128xf32>
    %27 = vector.broadcast %7 : vector<1x128xf32> to vector<16x128xf32>
    %28 = arith.mulf %26, %27 : vector<16x128xf32>
    %29 = vector.broadcast %8 : vector<1x128xf32> to vector<16x128xf32>
    %30 = arith.addf %28, %29 : vector<16x128xf32>
    %c0_15 = arith.constant 0 : index
    %c0_16 = arith.constant 0 : index
    %c0_17 = arith.constant 0 : index
    %31 = vector.load %arg2[%c0_15, %c0_16, %c0_17] : memref<1x64x128xf32, #tpu.memory_space<vmem>>, vector<1x64x128xf32>
    %32 = vector.shape_cast %31 : vector<1x64x128xf32> to vector<64x128xf32>
    %c0_18 = arith.constant 0 : index
    %c0_19 = arith.constant 0 : index
    %33 = vector.load %arg7[%c0_18, %c0_19] : memref<1x128xf32, #tpu.memory_space<vmem>>, vector<1x128xf32>
    %c0_20 = arith.constant 0 : index
    %c0_21 = arith.constant 0 : index
    %34 = vector.load %arg8[%c0_20, %c0_21] : memref<1x128xf32, #tpu.memory_space<vmem>>, vector<1x128xf32>
    %cst_22 = arith.constant dense<0.000000e+00> : vector<64xf32>
    %35 = vector.multi_reduction <add>, %32, %cst_22 [1] : vector<64x128xf32> to vector<64xf32>
    %36 = vector.shape_cast %35 : vector<64xf32> to vector<64x1xf32>
    %cst_23 = arith.constant 1.280000e+02 : f32
    %37 = vector.broadcast %cst_23 : f32 to vector<64x1xf32>
    %38 = arith.divf %36, %37 : vector<64x1xf32>
    %39 = vector.broadcast %38 : vector<64x1xf32> to vector<64x128xf32>
    %40 = arith.subf %32, %39 : vector<64x128xf32>
    %41 = arith.mulf %40, %40 : vector<64x128xf32>
    %cst_24 = arith.constant dense<0.000000e+00> : vector<64xf32>
    %42 = vector.multi_reduction <add>, %41, %cst_24 [1] : vector<64x128xf32> to vector<64xf32>
    %43 = vector.shape_cast %42 : vector<64xf32> to vector<64x1xf32>
    %cst_25 = arith.constant 1.280000e+02 : f32
    %44 = vector.broadcast %cst_25 : f32 to vector<64x1xf32>
    %45 = arith.divf %43, %44 : vector<64x1xf32>
    %46 = vector.broadcast %38 : vector<64x1xf32> to vector<64x128xf32>
    %47 = arith.subf %32, %46 : vector<64x128xf32>
    %cst_26 = arith.constant 9.99999974E-6 : f32
    %48 = vector.broadcast %cst_26 : f32 to vector<64x1xf32>
    %49 = arith.addf %45, %48 : vector<64x1xf32>
    %50 = math.rsqrt %49 : vector<64x1xf32>
    %51 = vector.broadcast %50 : vector<64x1xf32> to vector<64x128xf32>
    %52 = arith.mulf %47, %51 : vector<64x128xf32>
    %53 = vector.broadcast %33 : vector<1x128xf32> to vector<64x128xf32>
    %54 = arith.mulf %52, %53 : vector<64x128xf32>
    %55 = vector.broadcast %34 : vector<1x128xf32> to vector<64x128xf32>
    %56 = arith.addf %54, %55 : vector<64x128xf32>
    %c0_27 = arith.constant 0 : index
    %c0_28 = arith.constant 0 : index
    %c0_29 = arith.constant 0 : index
    %57 = vector.load %arg9[%c0_27, %c0_28, %c0_29] : memref<2x128x128xf32, #tpu.memory_space<vmem>>, vector<1x128x128xf32>
    %58 = vector.shape_cast %57 : vector<1x128x128xf32> to vector<128x128xf32>
    %cst_30 = arith.constant dense<0.000000e+00> : vector<16x128xf32>
    %59 = tpu.matmul %30, %58, %cst_30 {dimension_numbers = #tpu.dot_dimension_numbers<[1], [0], [0], [1], [0, 0, 1, 1], [], []>} : vector<16x128xf32>, vector<128x128xf32>, vector<16x128xf32> -> vector<16x128xf32>
    %cst_31 = arith.constant 1.250000e-01 : f32
    %60 = vector.broadcast %cst_31 : f32 to vector<16x128xf32>
    %61 = arith.mulf %59, %60 : vector<16x128xf32>
    %c0_32 = arith.constant 0 : index
    %c0_33 = arith.constant 0 : index
    %c0_34 = arith.constant 0 : index
    %62 = vector.load %arg10[%c0_32, %c0_33, %c0_34] : memref<2x128x256xf32, #tpu.memory_space<vmem>>, vector<1x128x256xf32>
    %63 = vector.shape_cast %62 : vector<1x128x256xf32> to vector<128x256xf32>
    %cst_35 = arith.constant dense<0.000000e+00> : vector<64x256xf32>
    %64 = tpu.matmul %56, %63, %cst_35 {dimension_numbers = #tpu.dot_dimension_numbers<[1], [0], [0], [1], [0, 0, 1, 1], [], []>} : vector<64x128xf32>, vector<128x256xf32>, vector<64x256xf32> -> vector<64x256xf32>
    %c0_36 = arith.constant 0 : index
    %c0_37 = arith.constant 0 : index
    %c0_38 = arith.constant 0 : index
    %65 = vector.load %arg11[%c0_36, %c0_37, %c0_38] : memref<2x128x128xf32, #tpu.memory_space<vmem>>, vector<1x128x128xf32>
    %66 = vector.shape_cast %65 : vector<1x128x128xf32> to vector<128x128xf32>
    %cst_39 = arith.constant 0.000000e+00 : f32
    %67 = vector.broadcast %cst_39 : f32 to vector<16x128xf32>
    %68 = vector.extract_strided_slice %61 {offsets = [0, 0], sizes = [16, 64], strides = [1, 1]} : vector<16x128xf32> to vector<16x64xf32>
    %69 = vector.extract_strided_slice %64 {offsets = [0, 0], sizes = [64, 64], strides = [1, 1]} : vector<64x256xf32> to vector<64x64xf32>
    %70 = vector.extract_strided_slice %64 {offsets = [0, 128], sizes = [64, 64], strides = [1, 1]} : vector<64x256xf32> to vector<64x64xf32>
    %cst_40 = arith.constant dense<0.000000e+00> : vector<16x64xf32>
    %71 = tpu.matmul %68, %69, %cst_40 {dimension_numbers = #tpu.dot_dimension_numbers<[1], [1], [0], [0], [0, 0, 1, 0], [], []>} : vector<16x64xf32>, vector<64x64xf32>, vector<16x64xf32> -> vector<16x64xf32>
    %cst_41 = arith.constant dense<0xFF800000> : vector<16xf32>
    %72 = vector.multi_reduction <maximumf>, %71, %cst_41 [1] : vector<16x64xf32> to vector<16xf32>
    %73 = vector.shape_cast %72 : vector<16xf32> to vector<16x1xf32>
    %74 = vector.broadcast %73 : vector<16x1xf32> to vector<16x64xf32>
    %75 = arith.subf %71, %74 : vector<16x64xf32>
    %76 = math.exp %75 : vector<16x64xf32>
    %cst_42 = arith.constant dense<0.000000e+00> : vector<16xf32>
    %77 = vector.multi_reduction <add>, %76, %cst_42 [1] : vector<16x64xf32> to vector<16xf32>
    %78 = vector.shape_cast %77 : vector<16xf32> to vector<16x1xf32>
    %79 = tpu.reciprocal %78 {approx = true} : vector<16x1xf32> -> vector<16x1xf32>
    %80 = vector.broadcast %79 : vector<16x1xf32> to vector<16x64xf32>
    %81 = arith.mulf %76, %80 : vector<16x64xf32>
    %cst_43 = arith.constant dense<0.000000e+00> : vector<16x64xf32>
    %82 = tpu.matmul %81, %70, %cst_43 {dimension_numbers = #tpu.dot_dimension_numbers<[1], [0], [0], [1], [0, 0, 1, 1], [], []>} : vector<16x64xf32>, vector<64x64xf32>, vector<16x64xf32> -> vector<16x64xf32>
    %83 = vector.extract_strided_slice %66 {offsets = [0, 0], sizes = [64, 128], strides = [1, 1]} : vector<128x128xf32> to vector<64x128xf32>
    %cst_44 = arith.constant dense<0.000000e+00> : vector<16x128xf32>
    %84 = tpu.matmul %82, %83, %cst_44 {dimension_numbers = #tpu.dot_dimension_numbers<[1], [0], [0], [1], [0, 0, 1, 1], [], []>} : vector<16x64xf32>, vector<64x128xf32>, vector<16x128xf32> -> vector<16x128xf32>
    %85 = arith.addf %67, %84 : vector<16x128xf32>
    %86 = vector.extract_strided_slice %61 {offsets = [0, 64], sizes = [16, 64], strides = [1, 1]} : vector<16x128xf32> to vector<16x64xf32>
    %87 = vector.extract_strided_slice %64 {offsets = [0, 64], sizes = [64, 64], strides = [1, 1]} : vector<64x256xf32> to vector<64x64xf32>
    %88 = vector.extract_strided_slice %64 {offsets = [0, 192], sizes = [64, 64], strides = [1, 1]} : vector<64x256xf32> to vector<64x64xf32>
    %cst_45 = arith.constant dense<0.000000e+00> : vector<16x64xf32>
    %89 = tpu.matmul %86, %87, %cst_45 {dimension_numbers = #tpu.dot_dimension_numbers<[1], [1], [0], [0], [0, 0, 1, 0], [], []>} : vector<16x64xf32>, vector<64x64xf32>, vector<16x64xf32> -> vector<16x64xf32>
    %cst_46 = arith.constant dense<0xFF800000> : vector<16xf32>
    %90 = vector.multi_reduction <maximumf>, %89, %cst_46 [1] : vector<16x64xf32> to vector<16xf32>
    %91 = vector.shape_cast %90 : vector<16xf32> to vector<16x1xf32>
    %92 = vector.broadcast %91 : vector<16x1xf32> to vector<16x64xf32>
    %93 = arith.subf %89, %92 : vector<16x64xf32>
    %94 = math.exp %93 : vector<16x64xf32>
    %cst_47 = arith.constant dense<0.000000e+00> : vector<16xf32>
    %95 = vector.multi_reduction <add>, %94, %cst_47 [1] : vector<16x64xf32> to vector<16xf32>
    %96 = vector.shape_cast %95 : vector<16xf32> to vector<16x1xf32>
    %97 = tpu.reciprocal %96 {approx = true} : vector<16x1xf32> -> vector<16x1xf32>
    %98 = vector.broadcast %97 : vector<16x1xf32> to vector<16x64xf32>
    %99 = arith.mulf %94, %98 : vector<16x64xf32>
    %cst_48 = arith.constant dense<0.000000e+00> : vector<16x64xf32>
    %100 = tpu.matmul %99, %88, %cst_48 {dimension_numbers = #tpu.dot_dimension_numbers<[1], [0], [0], [1], [0, 0, 1, 1], [], []>} : vector<16x64xf32>, vector<64x64xf32>, vector<16x64xf32> -> vector<16x64xf32>
    %101 = vector.extract_strided_slice %66 {offsets = [64, 0], sizes = [64, 128], strides = [1, 1]} : vector<128x128xf32> to vector<64x128xf32>
    %cst_49 = arith.constant dense<0.000000e+00> : vector<16x128xf32>
    %102 = tpu.matmul %100, %101, %cst_49 {dimension_numbers = #tpu.dot_dimension_numbers<[1], [0], [0], [1], [0, 0, 1, 1], [], []>} : vector<16x64xf32>, vector<64x128xf32>, vector<16x128xf32> -> vector<16x128xf32>
    %103 = arith.addf %85, %102 : vector<16x128xf32>
    %c0_50 = arith.constant 0 : index
    %c0_51 = arith.constant 0 : index
    %c0_52 = arith.constant 0 : index
    %104 = vector.load %arg12[%c0_50, %c0_51, %c0_52] : memref<2x1x128xf32, #tpu.memory_space<vmem>>, vector<1x1x128xf32>
    %105 = vector.shape_cast %104 : vector<1x1x128xf32> to vector<1x128xf32>
    %106 = vector.broadcast %105 : vector<1x128xf32> to vector<16x128xf32>
    %107 = arith.addf %103, %106 : vector<16x128xf32>
    %108 = arith.addf %107, %30 : vector<16x128xf32>
    %c0_53 = arith.constant 0 : index
    %c0_54 = arith.constant 0 : index
    %c0_55 = arith.constant 0 : index
    %109 = vector.load %arg13[%c0_53, %c0_54, %c0_55] : memref<2x1x128xf32, #tpu.memory_space<vmem>>, vector<1x1x128xf32>
    %110 = vector.shape_cast %109 : vector<1x1x128xf32> to vector<1x128xf32>
    %c0_56 = arith.constant 0 : index
    %c0_57 = arith.constant 0 : index
    %c0_58 = arith.constant 0 : index
    %111 = vector.load %arg14[%c0_56, %c0_57, %c0_58] : memref<2x1x128xf32, #tpu.memory_space<vmem>>, vector<1x1x128xf32>
    %112 = vector.shape_cast %111 : vector<1x1x128xf32> to vector<1x128xf32>
    %cst_59 = arith.constant dense<0.000000e+00> : vector<16xf32>
    %113 = vector.multi_reduction <add>, %108, %cst_59 [1] : vector<16x128xf32> to vector<16xf32>
    %114 = vector.shape_cast %113 : vector<16xf32> to vector<16x1xf32>
    %cst_60 = arith.constant 1.280000e+02 : f32
    %115 = vector.broadcast %cst_60 : f32 to vector<16x1xf32>
    %116 = arith.divf %114, %115 : vector<16x1xf32>
    %117 = vector.broadcast %116 : vector<16x1xf32> to vector<16x128xf32>
    %118 = arith.subf %108, %117 : vector<16x128xf32>
    %119 = arith.mulf %118, %118 : vector<16x128xf32>
    %cst_61 = arith.constant dense<0.000000e+00> : vector<16xf32>
    %120 = vector.multi_reduction <add>, %119, %cst_61 [1] : vector<16x128xf32> to vector<16xf32>
    %121 = vector.shape_cast %120 : vector<16xf32> to vector<16x1xf32>
    %cst_62 = arith.constant 1.280000e+02 : f32
    %122 = vector.broadcast %cst_62 : f32 to vector<16x1xf32>
    %123 = arith.divf %121, %122 : vector<16x1xf32>
    %124 = vector.broadcast %116 : vector<16x1xf32> to vector<16x128xf32>
    %125 = arith.subf %108, %124 : vector<16x128xf32>
    %cst_63 = arith.constant 9.99999974E-6 : f32
    %126 = vector.broadcast %cst_63 : f32 to vector<16x1xf32>
    %127 = arith.addf %123, %126 : vector<16x1xf32>
    %128 = math.rsqrt %127 : vector<16x1xf32>
    %129 = vector.broadcast %128 : vector<16x1xf32> to vector<16x128xf32>
    %130 = arith.mulf %125, %129 : vector<16x128xf32>
    %131 = vector.broadcast %110 : vector<1x128xf32> to vector<16x128xf32>
    %132 = arith.mulf %130, %131 : vector<16x128xf32>
    %133 = vector.broadcast %112 : vector<1x128xf32> to vector<16x128xf32>
    %134 = arith.addf %132, %133 : vector<16x128xf32>
    %135 = arith.addf %134, %108 : vector<16x128xf32>
    %c0_64 = arith.constant 0 : index
    %c0_65 = arith.constant 0 : index
    %c0_66 = arith.constant 0 : index
    %136 = vector.load %arg15[%c0_64, %c0_65, %c0_66] : memref<2x128x128xf32, #tpu.memory_space<vmem>>, vector<1x128x128xf32>
    %137 = vector.shape_cast %136 : vector<1x128x128xf32> to vector<128x128xf32>
    %cst_67 = arith.constant dense<0.000000e+00> : vector<16x128xf32>
    %138 = tpu.matmul %135, %137, %cst_67 {dimension_numbers = #tpu.dot_dimension_numbers<[1], [0], [0], [1], [0, 0, 1, 1], [], []>} : vector<16x128xf32>, vector<128x128xf32>, vector<16x128xf32> -> vector<16x128xf32>
    %c0_68 = arith.constant 0 : index
    %c0_69 = arith.constant 0 : index
    %c0_70 = arith.constant 0 : index
    %139 = vector.load %arg16[%c0_68, %c0_69, %c0_70] : memref<2x1x128xf32, #tpu.memory_space<vmem>>, vector<1x1x128xf32>
    %140 = vector.shape_cast %139 : vector<1x1x128xf32> to vector<1x128xf32>
    %141 = vector.broadcast %140 : vector<1x128xf32> to vector<16x128xf32>
    %142 = arith.addf %138, %141 : vector<16x128xf32>
    %143 = arith.mulf %142, %142 : vector<16x128xf32>
    %144 = arith.mulf %142, %143 : vector<16x128xf32>
    %cst_71 = arith.constant 4.471500e-02 : f32
    %145 = vector.broadcast %cst_71 : f32 to vector<16x128xf32>
    %146 = arith.mulf %145, %144 : vector<16x128xf32>
    %147 = arith.addf %142, %146 : vector<16x128xf32>
    %cst_72 = arith.constant 0.797884583 : f32
    %148 = vector.broadcast %cst_72 : f32 to vector<16x128xf32>
    %149 = arith.mulf %148, %147 : vector<16x128xf32>
    %150 = math.tanh %149 : vector<16x128xf32>
    %cst_73 = arith.constant 1.000000e+00 : f32
    %151 = vector.broadcast %cst_73 : f32 to vector<16x128xf32>
    %152 = arith.addf %151, %150 : vector<16x128xf32>
    %cst_74 = arith.constant 5.000000e-01 : f32
    %153 = vector.broadcast %cst_74 : f32 to vector<16x128xf32>
    %154 = arith.mulf %153, %152 : vector<16x128xf32>
    %155 = arith.mulf %142, %154 : vector<16x128xf32>
    %c0_75 = arith.constant 0 : index
    %c0_76 = arith.constant 0 : index
    %c0_77 = arith.constant 0 : index
    %156 = vector.load %arg17[%c0_75, %c0_76, %c0_77] : memref<2x128x128xf32, #tpu.memory_space<vmem>>, vector<1x128x128xf32>
    %157 = vector.shape_cast %156 : vector<1x128x128xf32> to vector<128x128xf32>
    %cst_78 = arith.constant dense<0.000000e+00> : vector<16x128xf32>
    %158 = tpu.matmul %155, %157, %cst_78 {dimension_numbers = #tpu.dot_dimension_numbers<[1], [0], [0], [1], [0, 0, 1, 1], [], []>} : vector<16x128xf32>, vector<128x128xf32>, vector<16x128xf32> -> vector<16x128xf32>
    %c0_79 = arith.constant 0 : index
    %c0_80 = arith.constant 0 : index
    %c0_81 = arith.constant 0 : index
    %159 = vector.load %arg18[%c0_79, %c0_80, %c0_81] : memref<2x1x128xf32, #tpu.memory_space<vmem>>, vector<1x1x128xf32>
    %160 = vector.shape_cast %159 : vector<1x1x128xf32> to vector<1x128xf32>
    %161 = vector.broadcast %160 : vector<1x128xf32> to vector<16x128xf32>
    %162 = arith.addf %158, %161 : vector<16x128xf32>
    %c0_82 = arith.constant 0 : index
    %c0_83 = arith.constant 0 : index
    %c0_84 = arith.constant 0 : index
    %163 = vector.load %arg19[%c0_82, %c0_83, %c0_84] : memref<2x1x128xf32, #tpu.memory_space<vmem>>, vector<1x1x128xf32>
    %164 = vector.shape_cast %163 : vector<1x1x128xf32> to vector<1x128xf32>
    %c0_85 = arith.constant 0 : index
    %c0_86 = arith.constant 0 : index
    %c0_87 = arith.constant 0 : index
    %165 = vector.load %arg20[%c0_85, %c0_86, %c0_87] : memref<2x1x128xf32, #tpu.memory_space<vmem>>, vector<1x1x128xf32>
    %166 = vector.shape_cast %165 : vector<1x1x128xf32> to vector<1x128xf32>
    %cst_88 = arith.constant dense<0.000000e+00> : vector<16xf32>
    %167 = vector.multi_reduction <add>, %162, %cst_88 [1] : vector<16x128xf32> to vector<16xf32>
    %168 = vector.shape_cast %167 : vector<16xf32> to vector<16x1xf32>
    %cst_89 = arith.constant 1.280000e+02 : f32
    %169 = vector.broadcast %cst_89 : f32 to vector<16x1xf32>
    %170 = arith.divf %168, %169 : vector<16x1xf32>
    %171 = vector.broadcast %170 : vector<16x1xf32> to vector<16x128xf32>
    %172 = arith.subf %162, %171 : vector<16x128xf32>
    %173 = arith.mulf %172, %172 : vector<16x128xf32>
    %cst_90 = arith.constant dense<0.000000e+00> : vector<16xf32>
    %174 = vector.multi_reduction <add>, %173, %cst_90 [1] : vector<16x128xf32> to vector<16xf32>
    %175 = vector.shape_cast %174 : vector<16xf32> to vector<16x1xf32>
    %cst_91 = arith.constant 1.280000e+02 : f32
    %176 = vector.broadcast %cst_91 : f32 to vector<16x1xf32>
    %177 = arith.divf %175, %176 : vector<16x1xf32>
    %178 = vector.broadcast %170 : vector<16x1xf32> to vector<16x128xf32>
    %179 = arith.subf %162, %178 : vector<16x128xf32>
    %cst_92 = arith.constant 9.99999974E-6 : f32
    %180 = vector.broadcast %cst_92 : f32 to vector<16x1xf32>
    %181 = arith.addf %177, %180 : vector<16x1xf32>
    %182 = math.rsqrt %181 : vector<16x1xf32>
    %183 = vector.broadcast %182 : vector<16x1xf32> to vector<16x128xf32>
    %184 = arith.mulf %179, %183 : vector<16x128xf32>
    %185 = vector.broadcast %164 : vector<1x128xf32> to vector<16x128xf32>
    %186 = arith.mulf %184, %185 : vector<16x128xf32>
    %187 = vector.broadcast %166 : vector<1x128xf32> to vector<16x128xf32>
    %188 = arith.addf %186, %187 : vector<16x128xf32>
    %189 = arith.addf %188, %135 : vector<16x128xf32>
    %c1 = arith.constant 1 : index
    %c0_93 = arith.constant 0 : index
    %c0_94 = arith.constant 0 : index
    %190 = vector.load %arg9[%c1, %c0_93, %c0_94] : memref<2x128x128xf32, #tpu.memory_space<vmem>>, vector<1x128x128xf32>
    %191 = vector.shape_cast %190 : vector<1x128x128xf32> to vector<128x128xf32>
    %cst_95 = arith.constant dense<0.000000e+00> : vector<16x128xf32>
    %192 = tpu.matmul %189, %191, %cst_95 {dimension_numbers = #tpu.dot_dimension_numbers<[1], [0], [0], [1], [0, 0, 1, 1], [], []>} : vector<16x128xf32>, vector<128x128xf32>, vector<16x128xf32> -> vector<16x128xf32>
    %cst_96 = arith.constant 1.250000e-01 : f32
    %193 = vector.broadcast %cst_96 : f32 to vector<16x128xf32>
    %194 = arith.mulf %192, %193 : vector<16x128xf32>
    %c1_97 = arith.constant 1 : index
    %c0_98 = arith.constant 0 : index
    %c0_99 = arith.constant 0 : index
    %195 = vector.load %arg10[%c1_97, %c0_98, %c0_99] : memref<2x128x256xf32, #tpu.memory_space<vmem>>, vector<1x128x256xf32>
    %196 = vector.shape_cast %195 : vector<1x128x256xf32> to vector<128x256xf32>
    %cst_100 = arith.constant dense<0.000000e+00> : vector<64x256xf32>
    %197 = tpu.matmul %56, %196, %cst_100 {dimension_numbers = #tpu.dot_dimension_numbers<[1], [0], [0], [1], [0, 0, 1, 1], [], []>} : vector<64x128xf32>, vector<128x256xf32>, vector<64x256xf32> -> vector<64x256xf32>
    %c1_101 = arith.constant 1 : index
    %c0_102 = arith.constant 0 : index
    %c0_103 = arith.constant 0 : index
    %198 = vector.load %arg11[%c1_101, %c0_102, %c0_103] : memref<2x128x128xf32, #tpu.memory_space<vmem>>, vector<1x128x128xf32>
    %199 = vector.shape_cast %198 : vector<1x128x128xf32> to vector<128x128xf32>
    %cst_104 = arith.constant 0.000000e+00 : f32
    %200 = vector.broadcast %cst_104 : f32 to vector<16x128xf32>
    %201 = vector.extract_strided_slice %194 {offsets = [0, 0], sizes = [16, 64], strides = [1, 1]} : vector<16x128xf32> to vector<16x64xf32>
    %202 = vector.extract_strided_slice %197 {offsets = [0, 0], sizes = [64, 64], strides = [1, 1]} : vector<64x256xf32> to vector<64x64xf32>
    %203 = vector.extract_strided_slice %197 {offsets = [0, 128], sizes = [64, 64], strides = [1, 1]} : vector<64x256xf32> to vector<64x64xf32>
    %cst_105 = arith.constant dense<0.000000e+00> : vector<16x64xf32>
    %204 = tpu.matmul %201, %202, %cst_105 {dimension_numbers = #tpu.dot_dimension_numbers<[1], [1], [0], [0], [0, 0, 1, 0], [], []>} : vector<16x64xf32>, vector<64x64xf32>, vector<16x64xf32> -> vector<16x64xf32>
    %cst_106 = arith.constant dense<0xFF800000> : vector<16xf32>
    %205 = vector.multi_reduction <maximumf>, %204, %cst_106 [1] : vector<16x64xf32> to vector<16xf32>
    %206 = vector.shape_cast %205 : vector<16xf32> to vector<16x1xf32>
    %207 = vector.broadcast %206 : vector<16x1xf32> to vector<16x64xf32>
    %208 = arith.subf %204, %207 : vector<16x64xf32>
    %209 = math.exp %208 : vector<16x64xf32>
    %cst_107 = arith.constant dense<0.000000e+00> : vector<16xf32>
    %210 = vector.multi_reduction <add>, %209, %cst_107 [1] : vector<16x64xf32> to vector<16xf32>
    %211 = vector.shape_cast %210 : vector<16xf32> to vector<16x1xf32>
    %212 = tpu.reciprocal %211 {approx = true} : vector<16x1xf32> -> vector<16x1xf32>
    %213 = vector.broadcast %212 : vector<16x1xf32> to vector<16x64xf32>
    %214 = arith.mulf %209, %213 : vector<16x64xf32>
    %cst_108 = arith.constant dense<0.000000e+00> : vector<16x64xf32>
    %215 = tpu.matmul %214, %203, %cst_108 {dimension_numbers = #tpu.dot_dimension_numbers<[1], [0], [0], [1], [0, 0, 1, 1], [], []>} : vector<16x64xf32>, vector<64x64xf32>, vector<16x64xf32> -> vector<16x64xf32>
    %216 = vector.extract_strided_slice %199 {offsets = [0, 0], sizes = [64, 128], strides = [1, 1]} : vector<128x128xf32> to vector<64x128xf32>
    %cst_109 = arith.constant dense<0.000000e+00> : vector<16x128xf32>
    %217 = tpu.matmul %215, %216, %cst_109 {dimension_numbers = #tpu.dot_dimension_numbers<[1], [0], [0], [1], [0, 0, 1, 1], [], []>} : vector<16x64xf32>, vector<64x128xf32>, vector<16x128xf32> -> vector<16x128xf32>
    %218 = arith.addf %200, %217 : vector<16x128xf32>
    %219 = vector.extract_strided_slice %194 {offsets = [0, 64], sizes = [16, 64], strides = [1, 1]} : vector<16x128xf32> to vector<16x64xf32>
    %220 = vector.extract_strided_slice %197 {offsets = [0, 64], sizes = [64, 64], strides = [1, 1]} : vector<64x256xf32> to vector<64x64xf32>
    %221 = vector.extract_strided_slice %197 {offsets = [0, 192], sizes = [64, 64], strides = [1, 1]} : vector<64x256xf32> to vector<64x64xf32>
    %cst_110 = arith.constant dense<0.000000e+00> : vector<16x64xf32>
    %222 = tpu.matmul %219, %220, %cst_110 {dimension_numbers = #tpu.dot_dimension_numbers<[1], [1], [0], [0], [0, 0, 1, 0], [], []>} : vector<16x64xf32>, vector<64x64xf32>, vector<16x64xf32> -> vector<16x64xf32>
    %cst_111 = arith.constant dense<0xFF800000> : vector<16xf32>
    %223 = vector.multi_reduction <maximumf>, %222, %cst_111 [1] : vector<16x64xf32> to vector<16xf32>
    %224 = vector.shape_cast %223 : vector<16xf32> to vector<16x1xf32>
    %225 = vector.broadcast %224 : vector<16x1xf32> to vector<16x64xf32>
    %226 = arith.subf %222, %225 : vector<16x64xf32>
    %227 = math.exp %226 : vector<16x64xf32>
    %cst_112 = arith.constant dense<0.000000e+00> : vector<16xf32>
    %228 = vector.multi_reduction <add>, %227, %cst_112 [1] : vector<16x64xf32> to vector<16xf32>
    %229 = vector.shape_cast %228 : vector<16xf32> to vector<16x1xf32>
    %230 = tpu.reciprocal %229 {approx = true} : vector<16x1xf32> -> vector<16x1xf32>
    %231 = vector.broadcast %230 : vector<16x1xf32> to vector<16x64xf32>
    %232 = arith.mulf %227, %231 : vector<16x64xf32>
    %cst_113 = arith.constant dense<0.000000e+00> : vector<16x64xf32>
    %233 = tpu.matmul %232, %221, %cst_113 {dimension_numbers = #tpu.dot_dimension_numbers<[1], [0], [0], [1], [0, 0, 1, 1], [], []>} : vector<16x64xf32>, vector<64x64xf32>, vector<16x64xf32> -> vector<16x64xf32>
    %234 = vector.extract_strided_slice %199 {offsets = [64, 0], sizes = [64, 128], strides = [1, 1]} : vector<128x128xf32> to vector<64x128xf32>
    %cst_114 = arith.constant dense<0.000000e+00> : vector<16x128xf32>
    %235 = tpu.matmul %233, %234, %cst_114 {dimension_numbers = #tpu.dot_dimension_numbers<[1], [0], [0], [1], [0, 0, 1, 1], [], []>} : vector<16x64xf32>, vector<64x128xf32>, vector<16x128xf32> -> vector<16x128xf32>
    %236 = arith.addf %218, %235 : vector<16x128xf32>
    %c1_115 = arith.constant 1 : index
    %c0_116 = arith.constant 0 : index
    %c0_117 = arith.constant 0 : index
    %237 = vector.load %arg12[%c1_115, %c0_116, %c0_117] : memref<2x1x128xf32, #tpu.memory_space<vmem>>, vector<1x1x128xf32>
    %238 = vector.shape_cast %237 : vector<1x1x128xf32> to vector<1x128xf32>
    %239 = vector.broadcast %238 : vector<1x128xf32> to vector<16x128xf32>
    %240 = arith.addf %236, %239 : vector<16x128xf32>
    %241 = arith.addf %240, %189 : vector<16x128xf32>
    %c1_118 = arith.constant 1 : index
    %c0_119 = arith.constant 0 : index
    %c0_120 = arith.constant 0 : index
    %242 = vector.load %arg13[%c1_118, %c0_119, %c0_120] : memref<2x1x128xf32, #tpu.memory_space<vmem>>, vector<1x1x128xf32>
    %243 = vector.shape_cast %242 : vector<1x1x128xf32> to vector<1x128xf32>
    %c1_121 = arith.constant 1 : index
    %c0_122 = arith.constant 0 : index
    %c0_123 = arith.constant 0 : index
    %244 = vector.load %arg14[%c1_121, %c0_122, %c0_123] : memref<2x1x128xf32, #tpu.memory_space<vmem>>, vector<1x1x128xf32>
    %245 = vector.shape_cast %244 : vector<1x1x128xf32> to vector<1x128xf32>
    %cst_124 = arith.constant dense<0.000000e+00> : vector<16xf32>
    %246 = vector.multi_reduction <add>, %241, %cst_124 [1] : vector<16x128xf32> to vector<16xf32>
    %247 = vector.shape_cast %246 : vector<16xf32> to vector<16x1xf32>
    %cst_125 = arith.constant 1.280000e+02 : f32
    %248 = vector.broadcast %cst_125 : f32 to vector<16x1xf32>
    %249 = arith.divf %247, %248 : vector<16x1xf32>
    %250 = vector.broadcast %249 : vector<16x1xf32> to vector<16x128xf32>
    %251 = arith.subf %241, %250 : vector<16x128xf32>
    %252 = arith.mulf %251, %251 : vector<16x128xf32>
    %cst_126 = arith.constant dense<0.000000e+00> : vector<16xf32>
    %253 = vector.multi_reduction <add>, %252, %cst_126 [1] : vector<16x128xf32> to vector<16xf32>
    %254 = vector.shape_cast %253 : vector<16xf32> to vector<16x1xf32>
    %cst_127 = arith.constant 1.280000e+02 : f32
    %255 = vector.broadcast %cst_127 : f32 to vector<16x1xf32>
    %256 = arith.divf %254, %255 : vector<16x1xf32>
    %257 = vector.broadcast %249 : vector<16x1xf32> to vector<16x128xf32>
    %258 = arith.subf %241, %257 : vector<16x128xf32>
    %cst_128 = arith.constant 9.99999974E-6 : f32
    %259 = vector.broadcast %cst_128 : f32 to vector<16x1xf32>
    %260 = arith.addf %256, %259 : vector<16x1xf32>
    %261 = math.rsqrt %260 : vector<16x1xf32>
    %262 = vector.broadcast %261 : vector<16x1xf32> to vector<16x128xf32>
    %263 = arith.mulf %258, %262 : vector<16x128xf32>
    %264 = vector.broadcast %243 : vector<1x128xf32> to vector<16x128xf32>
    %265 = arith.mulf %263, %264 : vector<16x128xf32>
    %266 = vector.broadcast %245 : vector<1x128xf32> to vector<16x128xf32>
    %267 = arith.addf %265, %266 : vector<16x128xf32>
    %268 = arith.addf %267, %241 : vector<16x128xf32>
    %c1_129 = arith.constant 1 : index
    %c0_130 = arith.constant 0 : index
    %c0_131 = arith.constant 0 : index
    %269 = vector.load %arg15[%c1_129, %c0_130, %c0_131] : memref<2x128x128xf32, #tpu.memory_space<vmem>>, vector<1x128x128xf32>
    %270 = vector.shape_cast %269 : vector<1x128x128xf32> to vector<128x128xf32>
    %cst_132 = arith.constant dense<0.000000e+00> : vector<16x128xf32>
    %271 = tpu.matmul %268, %270, %cst_132 {dimension_numbers = #tpu.dot_dimension_numbers<[1], [0], [0], [1], [0, 0, 1, 1], [], []>} : vector<16x128xf32>, vector<128x128xf32>, vector<16x128xf32> -> vector<16x128xf32>
    %c1_133 = arith.constant 1 : index
    %c0_134 = arith.constant 0 : index
    %c0_135 = arith.constant 0 : index
    %272 = vector.load %arg16[%c1_133, %c0_134, %c0_135] : memref<2x1x128xf32, #tpu.memory_space<vmem>>, vector<1x1x128xf32>
    %273 = vector.shape_cast %272 : vector<1x1x128xf32> to vector<1x128xf32>
    %274 = vector.broadcast %273 : vector<1x128xf32> to vector<16x128xf32>
    %275 = arith.addf %271, %274 : vector<16x128xf32>
    %276 = arith.mulf %275, %275 : vector<16x128xf32>
    %277 = arith.mulf %275, %276 : vector<16x128xf32>
    %cst_136 = arith.constant 4.471500e-02 : f32
    %278 = vector.broadcast %cst_136 : f32 to vector<16x128xf32>
    %279 = arith.mulf %278, %277 : vector<16x128xf32>
    %280 = arith.addf %275, %279 : vector<16x128xf32>
    %cst_137 = arith.constant 0.797884583 : f32
    %281 = vector.broadcast %cst_137 : f32 to vector<16x128xf32>
    %282 = arith.mulf %281, %280 : vector<16x128xf32>
    %283 = math.tanh %282 : vector<16x128xf32>
    %cst_138 = arith.constant 1.000000e+00 : f32
    %284 = vector.broadcast %cst_138 : f32 to vector<16x128xf32>
    %285 = arith.addf %284, %283 : vector<16x128xf32>
    %cst_139 = arith.constant 5.000000e-01 : f32
    %286 = vector.broadcast %cst_139 : f32 to vector<16x128xf32>
    %287 = arith.mulf %286, %285 : vector<16x128xf32>
    %288 = arith.mulf %275, %287 : vector<16x128xf32>
    %c1_140 = arith.constant 1 : index
    %c0_141 = arith.constant 0 : index
    %c0_142 = arith.constant 0 : index
    %289 = vector.load %arg17[%c1_140, %c0_141, %c0_142] : memref<2x128x128xf32, #tpu.memory_space<vmem>>, vector<1x128x128xf32>
    %290 = vector.shape_cast %289 : vector<1x128x128xf32> to vector<128x128xf32>
    %cst_143 = arith.constant dense<0.000000e+00> : vector<16x128xf32>
    %291 = tpu.matmul %288, %290, %cst_143 {dimension_numbers = #tpu.dot_dimension_numbers<[1], [0], [0], [1], [0, 0, 1, 1], [], []>} : vector<16x128xf32>, vector<128x128xf32>, vector<16x128xf32> -> vector<16x128xf32>
    %c1_144 = arith.constant 1 : index
    %c0_145 = arith.constant 0 : index
    %c0_146 = arith.constant 0 : index
    %292 = vector.load %arg18[%c1_144, %c0_145, %c0_146] : memref<2x1x128xf32, #tpu.memory_space<vmem>>, vector<1x1x128xf32>
    %293 = vector.shape_cast %292 : vector<1x1x128xf32> to vector<1x128xf32>
    %294 = vector.broadcast %293 : vector<1x128xf32> to vector<16x128xf32>
    %295 = arith.addf %291, %294 : vector<16x128xf32>
    %c1_147 = arith.constant 1 : index
    %c0_148 = arith.constant 0 : index
    %c0_149 = arith.constant 0 : index
    %296 = vector.load %arg19[%c1_147, %c0_148, %c0_149] : memref<2x1x128xf32, #tpu.memory_space<vmem>>, vector<1x1x128xf32>
    %297 = vector.shape_cast %296 : vector<1x1x128xf32> to vector<1x128xf32>
    %c1_150 = arith.constant 1 : index
    %c0_151 = arith.constant 0 : index
    %c0_152 = arith.constant 0 : index
    %298 = vector.load %arg20[%c1_150, %c0_151, %c0_152] : memref<2x1x128xf32, #tpu.memory_space<vmem>>, vector<1x1x128xf32>
    %299 = vector.shape_cast %298 : vector<1x1x128xf32> to vector<1x128xf32>
    %cst_153 = arith.constant dense<0.000000e+00> : vector<16xf32>
    %300 = vector.multi_reduction <add>, %295, %cst_153 [1] : vector<16x128xf32> to vector<16xf32>
    %301 = vector.shape_cast %300 : vector<16xf32> to vector<16x1xf32>
    %cst_154 = arith.constant 1.280000e+02 : f32
    %302 = vector.broadcast %cst_154 : f32 to vector<16x1xf32>
    %303 = arith.divf %301, %302 : vector<16x1xf32>
    %304 = vector.broadcast %303 : vector<16x1xf32> to vector<16x128xf32>
    %305 = arith.subf %295, %304 : vector<16x128xf32>
    %306 = arith.mulf %305, %305 : vector<16x128xf32>
    %cst_155 = arith.constant dense<0.000000e+00> : vector<16xf32>
    %307 = vector.multi_reduction <add>, %306, %cst_155 [1] : vector<16x128xf32> to vector<16xf32>
    %308 = vector.shape_cast %307 : vector<16xf32> to vector<16x1xf32>
    %cst_156 = arith.constant 1.280000e+02 : f32
    %309 = vector.broadcast %cst_156 : f32 to vector<16x1xf32>
    %310 = arith.divf %308, %309 : vector<16x1xf32>
    %311 = vector.broadcast %303 : vector<16x1xf32> to vector<16x128xf32>
    %312 = arith.subf %295, %311 : vector<16x128xf32>
    %cst_157 = arith.constant 9.99999974E-6 : f32
    %313 = vector.broadcast %cst_157 : f32 to vector<16x1xf32>
    %314 = arith.addf %310, %313 : vector<16x1xf32>
    %315 = math.rsqrt %314 : vector<16x1xf32>
    %316 = vector.broadcast %315 : vector<16x1xf32> to vector<16x128xf32>
    %317 = arith.mulf %312, %316 : vector<16x128xf32>
    %318 = vector.broadcast %297 : vector<1x128xf32> to vector<16x128xf32>
    %319 = arith.mulf %317, %318 : vector<16x128xf32>
    %320 = vector.broadcast %299 : vector<1x128xf32> to vector<16x128xf32>
    %321 = arith.addf %319, %320 : vector<16x128xf32>
    %322 = arith.addf %321, %268 : vector<16x128xf32>
    %323 = arith.addf %322, %30 : vector<16x128xf32>
    %c0_158 = arith.constant 0 : index
    %c0_159 = arith.constant 0 : index
    %c0_160 = arith.constant 0 : index
    %324 = vector.load %arg21[%c0_158, %c0_159, %c0_160] : memref<1x16x128xf32, #tpu.memory_space<vmem>>, vector<1x16x128xf32>
    %325 = vector.shape_cast %324 : vector<1x16x128xf32> to vector<16x128xf32>
    %326 = vector.shape_cast %323 : vector<16x128xf32> to vector<1x16x128xf32>
    tpu.vector_store %arg21[%c0_158, %c0_159, %c0_160], %326 {strides = array<i32>} : memref<1x16x128xf32, #tpu.memory_space<vmem>>, vector<1x16x128xf32>,
    return
  }
  func.func @transform_0(%arg0: i32) -> (i32, i32, i32) {
    %c0_i32 = arith.constant 0 : i32
    %c0_i32_0 = arith.constant 0 : i32
    %c0_i32_1 = arith.constant 0 : i32
    return %arg0, %c0_i32, %c0_i32_0 : i32, i32, i32
  }
  func.func @transform_1(%arg0: i32) -> (i32, i32, i32) {
    %c0_i32 = arith.constant 0 : i32
    %c0_i32_0 = arith.constant 0 : i32
    %c0_i32_1 = arith.constant 0 : i32
    return %arg0, %c0_i32, %c0_i32_0 : i32, i32, i32
  }
  func.func @transform_2(%arg0: i32) -> (i32, i32) {
    %c0_i32 = arith.constant 0 : i32
    %c0_i32_0 = arith.constant 0 : i32
    %c0_i32_1 = arith.constant 0 : i32
    return %c0_i32, %c0_i32_0 : i32, i32
  }
  func.func @transform_3(%arg0: i32) -> (i32, i32) {
    %c0_i32 = arith.constant 0 : i32
    %c0_i32_0 = arith.constant 0 : i32
    %c0_i32_1 = arith.constant 0 : i32
    return %c0_i32, %c0_i32_0 : i32, i32
  }
  func.func @transform_4(%arg0: i32) -> (i32, i32) {
    %c0_i32 = arith.constant 0 : i32
    %c0_i32_0 = arith.constant 0 : i32
    %c0_i32_1 = arith.constant 0 : i32
    return %c0_i32, %c0_i32_0 : i32, i32
  }
  func.func @transform_5(%arg0: i32) -> (i32, i32) {
    %c0_i32 = arith.constant 0 : i32
    %c0_i32_0 = arith.constant 0 : i32
    %c0_i32_1 = arith.constant 0 : i32
    return %c0_i32, %c0_i32_0 : i32, i32
  }
  func.func @transform_6(%arg0: i32) -> (i32, i32) {
    %c0_i32 = arith.constant 0 : i32
    %c0_i32_0 = arith.constant 0 : i32
    %c0_i32_1 = arith.constant 0 : i32
    return %c0_i32, %c0_i32_0 : i32, i32
  }
  func.func @transform_7(%arg0: i32) -> (i32, i32) {
    %c0_i32 = arith.constant 0 : i32
    %c0_i32_0 = arith.constant 0 : i32
    %c0_i32_1 = arith.constant 0 : i32
    return %c0_i32, %c0_i32_0 : i32, i32
  }
  func.func @transform_8(%arg0: i32) -> (i32, i32, i32) {
    %c0_i32 = arith.constant 0 : i32
    %c0_i32_0 = arith.constant 0 : i32
    %c0_i32_1 = arith.constant 0 : i32
    %c0_i32_2 = arith.constant 0 : i32
    return %c0_i32, %c0_i32_0, %c0_i32_1 : i32, i32, i32
  }
  func.func @transform_9(%arg0: i32) -> (i32, i32, i32) {
    %c0_i32 = arith.constant 0 : i32
    %c0_i32_0 = arith.constant 0 : i32
    %c0_i32_1 = arith.constant 0 : i32
    %c0_i32_2 = arith.constant 0 : i32
    return %c0_i32, %c0_i32_0, %c0_i32_1 : i32, i32, i32
  }
  func.func @transform_10(%arg0: i32) -> (i32, i32, i32) {
    %c0_i32 = arith.constant 0 : i32
    %c0_i32_0 = arith.constant 0 : i32
    %c0_i32_1 = arith.constant 0 : i32
    %c0_i32_2 = arith.constant 0 : i32
    return %c0_i32, %c0_i32_0, %c0_i32_1 : i32, i32, i32
  }
  func.func @transform_11(%arg0: i32) -> (i32, i32, i32) {
    %c0_i32 = arith.constant 0 : i32
    %c0_i32_0 = arith.constant 0 : i32
    %c0_i32_1 = arith.constant 0 : i32
    %c0_i32_2 = arith.constant 0 : i32
    return %c0_i32, %c0_i32_0, %c0_i32_1 : i32, i32, i32
  }
  func.func @transform_12(%arg0: i32) -> (i32, i32, i32) {
    %c0_i32 = arith.constant 0 : i32
    %c0_i32_0 = arith.constant 0 : i32
    %c0_i32_1 = arith.constant 0 : i32
    %c0_i32_2 = arith.constant 0 : i32
    return %c0_i32, %c0_i32_0, %c0_i32_1 : i32, i32, i32
  }
  func.func @transform_13(%arg0: i32) -> (i32, i32, i32) {
    %c0_i32 = arith.constant 0 : i32
    %c0_i32_0 = arith.constant 0 : i32
    %c0_i32_1 = arith.constant 0 : i32
    %c0_i32_2 = arith.constant 0 : i32
    return %c0_i32, %c0_i32_0, %c0_i32_1 : i32, i32, i32
  }
  func.func @transform_14(%arg0: i32) -> (i32, i32, i32) {
    %c0_i32 = arith.constant 0 : i32
    %c0_i32_0 = arith.constant 0 : i32
    %c0_i32_1 = arith.constant 0 : i32
    %c0_i32_2 = arith.constant 0 : i32
    return %c0_i32, %c0_i32_0, %c0_i32_1 : i32, i32, i32
  }
  func.func @transform_15(%arg0: i32) -> (i32, i32, i32) {
    %c0_i32 = arith.constant 0 : i32
    %c0_i32_0 = arith.constant 0 : i32
    %c0_i32_1 = arith.constant 0 : i32
    %c0_i32_2 = arith.constant 0 : i32
    return %c0_i32, %c0_i32_0, %c0_i32_1 : i32, i32, i32
  }
  func.func @transform_16(%arg0: i32) -> (i32, i32, i32) {
    %c0_i32 = arith.constant 0 : i32
    %c0_i32_0 = arith.constant 0 : i32
    %c0_i32_1 = arith.constant 0 : i32
    %c0_i32_2 = arith.constant 0 : i32
    return %c0_i32, %c0_i32_0, %c0_i32_1 : i32, i32, i32
  }
  func.func @transform_17(%arg0: i32) -> (i32, i32, i32) {
    %c0_i32 = arith.constant 0 : i32
    %c0_i32_0 = arith.constant 0 : i32
    %c0_i32_1 = arith.constant 0 : i32
    %c0_i32_2 = arith.constant 0 : i32
    return %c0_i32, %c0_i32_0, %c0_i32_1 : i32, i32, i32
  }
  func.func @transform_18(%arg0: i32) -> (i32, i32, i32) {
    %c0_i32 = arith.constant 0 : i32
    %c0_i32_0 = arith.constant 0 : i32
    %c0_i32_1 = arith.constant 0 : i32
    %c0_i32_2 = arith.constant 0 : i32
    return %c0_i32, %c0_i32_0, %c0_i32_1 : i32, i32, i32
  }
  func.func @transform_19(%arg0: i32) -> (i32, i32, i32) {
    %c0_i32 = arith.constant 0 : i32
    %c0_i32_0 = arith.constant 0 : i32
    %c0_i32_1 = arith.constant 0 : i32
    %c0_i32_2 = arith.constant 0 : i32
    return %c0_i32, %c0_i32_0, %c0_i32_1 : i32, i32, i32
  }
  func.func @transform_20(%arg0: i32) -> (i32, i32, i32) {
    %c0_i32 = arith.constant 0 : i32
    %c0_i32_0 = arith.constant 0 : i32
    %c0_i32_1 = arith.constant 0 : i32
    return %arg0, %c0_i32, %c0_i32_0 : i32, i32, i32
  }
}

</mosaic_0001>

<llo_original>
// kernel: convtransformer_forward.1
$region0: #{convtransformer_forward.1}
  #allocation0 [shape = 'u32[]', space=smem, size = 0x4, offset = 0x4, fixed_abs, tag = 'smem constant byte address 0x4 - core index']
  #allocation1 [shape = 'u32[72,128]{1,0:T(1,128)}', space=vmem, size = 0x9000, scoped, tag = 'internal scratch']
  %s0 = inlined_call_operand.vmem [shape: f32[2,16,512], index: 0, kind: input, shape index: {}]
  %s1 = inlined_call_operand.vmem [shape: f32[2,64,128], index: 1, kind: input, shape index: {}]
  %s2 = inlined_call_operand.vmem [shape: f32[512,128], index: 2, kind: input, shape index: {}]
  %s3 = inlined_call_operand.vmem [shape: f32[1,128], index: 3, kind: input, shape index: {}]
  %s4 = inlined_call_operand.vmem [shape: f32[1,128], index: 4, kind: input, shape index: {}]
  %s5 = inlined_call_operand.vmem [shape: f32[1,128], index: 5, kind: input, shape index: {}]
  %s6 = inlined_call_operand.vmem [shape: f32[1,128], index: 6, kind: input, shape index: {}]
  %s7 = inlined_call_operand.vmem [shape: f32[1,128], index: 7, kind: input, shape index: {}]
  %s8 = inlined_call_operand.vmem [shape: f32[2,128,128], index: 8, kind: input, shape index: {}]
  %s9 = inlined_call_operand.vmem [shape: f32[2,128,256], index: 9, kind: input, shape index: {}]
  %s10 = inlined_call_operand.vmem [shape: f32[2,128,128], index: 10, kind: input, shape index: {}]
  %s11 = inlined_call_operand.vmem [shape: f32[2,1,128], index: 11, kind: input, shape index: {}]
  %s12 = inlined_call_operand.vmem [shape: f32[2,1,128], index: 12, kind: input, shape index: {}]
  %s13 = inlined_call_operand.vmem [shape: f32[2,1,128], index: 13, kind: input, shape index: {}]
  %s14 = inlined_call_operand.vmem [shape: f32[2,128,128], index: 14, kind: input, shape index: {}]
  %s15 = inlined_call_operand.vmem [shape: f32[2,1,128], index: 15, kind: input, shape index: {}]
  %s16 = inlined_call_operand.vmem [shape: f32[2,128,128], index: 16, kind: input, shape index: {}]
  %s17 = inlined_call_operand.vmem [shape: f32[2,1,128], index: 17, kind: input, shape index: {}]
  %s18 = inlined_call_operand.vmem [shape: f32[2,1,128], index: 18, kind: input, shape index: {}]
  %s19 = inlined_call_operand.vmem [shape: f32[2,1,128], index: 19, kind: input, shape index: {}]
  %s20 = inlined_call_operand.hbm [shape: f32[2,16,128], index: 20, kind: output, shape index: {}]
  %s21 = sld [smem:[#allocation0]]
  $region113: #{convtransformer_forward.1} parent=0
    _
  %s23 = ssub.s32 1, %s21
  %s24 = scalar_select 0, %s23, %s21
  $region1: #{convtransformer_forward.1} parent=0
    #allocation2 [shape = 'u8[16384]{0}', space=vmem, size = 0x4000, scoped, tag = 'output window, operand 0']
    #allocation3 [shape = 's32[2]{0}', space=sflag, size = 0x8, scoped, tag = 'scoped memory for convtransformer_forward.1']
    %25 = vsyncpa [#allocation3], 0
    %s26 = scalar_lea.sflag [#allocation3], 1
    %27 = vsyncpa %s26, 0
    loop: start=0, step=1, limit=4
    $region2: #{convtransformer_forward.1} parent=1 // loop_pre_header
      _
    $region3: #{convtransformer_forward.1} parent=1 // loop_header
      %s29 = sphi 0, %s33
      %p30 = scmp.ge.s32.totalorder %s29, 4
      %s39 = sphi 0, %s41
      %s42 = sphi 0, %s39
      %s43 = sphi 0, %s42
      %s59 = sphi 0, %s43
      %s65 = sphi 0, %s67
      %s68 = sphi 0, %s65
      %s69 = sphi 0, %s68
      %s85 = sphi 0, %s69
      %s89 = sphi 0, %s89
      %s91 = sphi 0, %s89
      %s92 = sphi 0, %s91
      %s106 = sphi 0, %s92
      %s110 = sphi 0, %s110
      %s112 = sphi 0, %s110
      %s113 = sphi 0, %s112
      %s127 = sphi 0, %s113
      %s131 = sphi 0, %s131
      %s133 = sphi 0, %s131
      %s134 = sphi 0, %s133
      %s148 = sphi 0, %s134
      %s152 = sphi 0, %s152
      %s154 = sphi 0, %s152
      %s155 = sphi 0, %s154
      %s169 = sphi 0, %s155
      %s173 = sphi 0, %s173
      %s175 = sphi 0, %s173
      %s176 = sphi 0, %s175
      %s190 = sphi 0, %s176
      %s194 = sphi 0, %s194
      %s196 = sphi 0, %s194
      %s197 = sphi 0, %s196
      %s211 = sphi 0, %s197
      %s215 = sphi 0, %s215
      %s217 = sphi 0, %s215
      %s218 = sphi 0, %s217
      %s232 = sphi 0, %s218
      %s236 = sphi 0, %s236
      %s238 = sphi 0, %s236
      %s239 = sphi 0, %s238
      %s253 = sphi 0, %s239
      %s257 = sphi 0, %s257
      %s259 = sphi 0, %s257
      %s260 = sphi 0, %s259
      %s274 = sphi 0, %s260
      %s278 = sphi 0, %s278
      %s280 = sphi 0, %s278
      %s281 = sphi 0, %s280
      %s295 = sphi 0, %s281
      %s299 = sphi 0, %s299
      %s301 = sphi 0, %s299
      %s302 = sphi 0, %s301
      %s316 = sphi 0, %s302
      %s320 = sphi 0, %s320
      %s322 = sphi 0, %s320
      %s323 = sphi 0, %s322
      %s337 = sphi 0, %s323
      %s341 = sphi 0, %s341
      %s343 = sphi 0, %s341
      %s344 = sphi 0, %s343
      %s358 = sphi 0, %s344
      %s362 = sphi 0, %s362
      %s364 = sphi 0, %s362
      %s365 = sphi 0, %s364
      %s379 = sphi 0, %s365
      %s383 = sphi 0, %s383
      %s385 = sphi 0, %s383
      %s386 = sphi 0, %s385
      %s400 = sphi 0, %s386
      %s404 = sphi 0, %s404
      %s406 = sphi 0, %s404
      %s407 = sphi 0, %s406
      %s421 = sphi 0, %s407
      %s425 = sphi 0, %s425
      %s427 = sphi 0, %s425
      %s428 = sphi 0, %s427
      %s442 = sphi 0, %s428
      %s446 = sphi 0, %s446
      %s448 = sphi 0, %s446
      %s449 = sphi 0, %s448
      %s463 = sphi 0, %s449
      %s469 = sphi 0, %s471
      %s472 = sphi 0, %s469
      %s473 = sphi 0, %s472
      %s489 = sphi 0, %s473
    $region4: #{convtransformer_forward.1} parent=1 // loop_header_branch
      %32 = sbr.rel (%p30) target = $region8
    $region5: #{convtransformer_forward.1} parent=1 // loop_body
      %s34 = ssub.s32 %s29, 1
      %s35 = ssub.s32 %s29, 2
      %s36 = sadd.s32 %s29, 1
      %s37 = ssub.s32 %s29, %s36
      %p38 = scmp.eq.s32.totalorder %s37, 0
      %s40 = sadd.s32 %s39, 1
      %s41 = scalar_select %p38, %s39, %s40
      %p44 = pneg %p38
      %p45 = scmp.eq.s32.totalorder %s29, 1
      %p46 = por %p44, %p45
      %p47 = scmp.ne.s32.totalorder %s39, %s42
      %p48 = scmp.eq.s32.totalorder %s29, 0
      %p49 = por %p47, %p48
      %p50 = scmp.ne.s32.totalorder %s39, %s42
      %p51 = scmp.eq.s32.totalorder %s34, 1
      %p52 = por %p50, %p51
      %p53 = scmp.ne.s32.totalorder %s42, %s43
      %p54 = scmp.eq.s32.totalorder %s34, 0
      %p55 = por %p53, %p54
      %p56 = scmp.ne.s32.totalorder %s42, %s43
      %p57 = scmp.eq.s32.totalorder %s35, 1
      %p58 = por %p56, %p57
      %p60 = scmp.ne.s32.totalorder %s43, %s59
      %p61 = scmp.eq.s32.totalorder %s35, 0
      %p62 = por %p60, %p61
      %s63 = ssub.s32 %s29, %s36
      %p64 = scmp.eq.s32.totalorder %s63, 0
      %s66 = sadd.s32 %s65, 1
      %s67 = scalar_select %p64, %s65, %s66
      %p70 = pneg %p64
      %p71 = scmp.eq.s32.totalorder %s29, 1
      %p72 = por %p70, %p71
      %p73 = scmp.ne.s32.totalorder %s65, %s68
      %p74 = scmp.eq.s32.totalorder %s29, 0
      %p75 = por %p73, %p74
      %p76 = scmp.ne.s32.totalorder %s65, %s68
      %p77 = scmp.eq.s32.totalorder %s34, 1
      %p78 = por %p76, %p77
      %p79 = scmp.ne.s32.totalorder %s68, %s69
      %p80 = scmp.eq.s32.totalorder %s34, 0
      %p81 = por %p79, %p80
      %p82 = scmp.ne.s32.totalorder %s68, %s69
      %p83 = scmp.eq.s32.totalorder %s35, 1
      %p84 = por %p82, %p83
      %p86 = scmp.ne.s32.totalorder %s69, %s85
      %p87 = scmp.eq.s32.totalorder %s35, 0
      %p88 = por %p86, %p87
      %s90 = sadd.s32 %s89, 1
      %p93 = scmp.eq.s32.totalorder %s29, 1
      %p94 = scmp.ne.s32.totalorder %s89, %s91
      %p95 = scmp.eq.s32.totalorder %s29, 0
      %p96 = por %p94, %p95
      %p97 = scmp.ne.s32.totalorder %s89, %s91
      %p98 = scmp.eq.s32.totalorder %s34, 1
      %p99 = por %p97, %p98
      %p100 = scmp.ne.s32.totalorder %s91, %s92
      %p101 = scmp.eq.s32.totalorder %s34, 0
      %p102 = por %p100, %p101
      %p103 = scmp.ne.s32.totalorder %s91, %s92
      %p104 = scmp.eq.s32.totalorder %s35, 1
      %p105 = por %p103, %p104
      %p107 = scmp.ne.s32.totalorder %s92, %s106
      %p108 = scmp.eq.s32.totalorder %s35, 0
      %p109 = por %p107, %p108
      %s111 = sadd.s32 %s110, 1
      %p114 = scmp.eq.s32.totalorder %s29, 1
      %p115 = scmp.ne.s32.totalorder %s110, %s112
      %p116 = scmp.eq.s32.totalorder %s29, 0
      %p117 = por %p115, %p116
      %p118 = scmp.ne.s32.totalorder %s110, %s112
      %p119 = scmp.eq.s32.totalorder %s34, 1
      %p120 = por %p118, %p119
      %p121 = scmp.ne.s32.totalorder %s112, %s113
      %p122 = scmp.eq.s32.totalorder %s34, 0
      %p123 = por %p121, %p122
      %p124 = scmp.ne.s32.totalorder %s112, %s113
      %p125 = scmp.eq.s32.totalorder %s35, 1
      %p126 = por %p124, %p125
      %p128 = scmp.ne.s32.totalorder %s113, %s127
      %p129 = scmp.eq.s32.totalorder %s35, 0
      %p130 = por %p128, %p129
      %s132 = sadd.s32 %s131, 1
      %p135 = scmp.eq.s32.totalorder %s29, 1
      %p136 = scmp.ne.s32.totalorder %s131, %s133
      %p137 = scmp.eq.s32.totalorder %s29, 0
      %p138 = por %p136, %p137
      %p139 = scmp.ne.s32.totalorder %s131, %s133
      %p140 = scmp.eq.s32.totalorder %s34, 1
      %p141 = por %p139, %p140
      %p142 = scmp.ne.s32.totalorder %s133, %s134
      %p143 = scmp.eq.s32.totalorder %s34, 0
      %p144 = por %p142, %p143
      %p145 = scmp.ne.s32.totalorder %s133, %s134
      %p146 = scmp.eq.s32.totalorder %s35, 1
      %p147 = por %p145, %p146
      %p149 = scmp.ne.s32.totalorder %s134, %s148
      %p150 = scmp.eq.s32.totalorder %s35, 0
      %p151 = por %p149, %p150
      %s153 = sadd.s32 %s152, 1
      %p156 = scmp.eq.s32.totalorder %s29, 1
      %p157 = scmp.ne.s32.totalorder %s152, %s154
      %p158 = scmp.eq.s32.totalorder %s29, 0
      %p159 = por %p157, %p158
      %p160 = scmp.ne.s32.totalorder %s152, %s154
      %p161 = scmp.eq.s32.totalorder %s34, 1
      %p162 = por %p160, %p161
      %p163 = scmp.ne.s32.totalorder %s154, %s155
      %p164 = scmp.eq.s32.totalorder %s34, 0
      %p165 = por %p163, %p164
      %p166 = scmp.ne.s32.totalorder %s154, %s155
      %p167 = scmp.eq.s32.totalorder %s35, 1
      %p168 = por %p166, %p167
      %p170 = scmp.ne.s32.totalorder %s155, %s169
      %p171 = scmp.eq.s32.totalorder %s35, 0
      %p172 = por %p170, %p171
      %s174 = sadd.s32 %s173, 1
      %p177 = scmp.eq.s32.totalorder %s29, 1
      %p178 = scmp.ne.s32.totalorder %s173, %s175
      %p179 = scmp.eq.s32.totalorder %s29, 0
      %p180 = por %p178, %p179
      %p181 = scmp.ne.s32.totalorder %s173, %s175
      %p182 = scmp.eq.s32.totalorder %s34, 1
      %p183 = por %p181, %p182
      %p184 = scmp.ne.s32.totalorder %s175, %s176
      %p185 = scmp.eq.s32.totalorder %s34, 0
      %p186 = por %p184, %p185
      %p187 = scmp.ne.s32.totalorder %s175, %s176
      %p188 = scmp.eq.s32.totalorder %s35, 1
      %p189 = por %p187, %p188
      %p191 = scmp.ne.s32.totalorder %s176, %s190
      %p192 = scmp.eq.s32.totalorder %s35, 0
      %p193 = por %p191, %p192
      %s195 = sadd.s32 %s194, 1
      %p198 = scmp.eq.s32.totalorder %s29, 1
      %p199 = scmp.ne.s32.totalorder %s194, %s196
      %p200 = scmp.eq.s32.totalorder %s29, 0
      %p201 = por %p199, %p200
      %p202 = scmp.ne.s32.totalorder %s194, %s196
      %p203 = scmp.eq.s32.totalorder %s34, 1
      %p204 = por %p202, %p203
      %p205 = scmp.ne.s32.totalorder %s196, %s197
      %p206 = scmp.eq.s32.totalorder %s34, 0
      %p207 = por %p205, %p206
      %p208 = scmp.ne.s32.totalorder %s196, %s197
      %p209 = scmp.eq.s32.totalorder %s35, 1
      %p210 = por %p208, %p209
      %p212 = scmp.ne.s32.totalorder %s197, %s211
      %p213 = scmp.eq.s32.totalorder %s35, 0
      %p214 = por %p212, %p213
      %s216 = sadd.s32 %s215, 1
      %p219 = scmp.eq.s32.totalorder %s29, 1
      %p220 = scmp.ne.s32.totalorder %s215, %s217
      %p221 = scmp.eq.s32.totalorder %s29, 0
      %p222 = por %p220, %p221
      %p223 = scmp.ne.s32.totalorder %s215, %s217
      %p224 = scmp.eq.s32.totalorder %s34, 1
      %p225 = por %p223, %p224
      %p226 = scmp.ne.s32.totalorder %s217, %s218
      %p227 = scmp.eq.s32.totalorder %s34, 0
      %p228 = por %p226, %p227
      %p229 = scmp.ne.s32.totalorder %s217, %s218
      %p230 = scmp.eq.s32.totalorder %s35, 1
      %p231 = por %p229, %p230
      %p233 = scmp.ne.s32.totalorder %s218, %s232
      %p234 = scmp.eq.s32.totalorder %s35, 0
      %p235 = por %p233, %p234
      %s237 = sadd.s32 %s236, 1
      %p240 = scmp.eq.s32.totalorder %s29, 1
      %p241 = scmp.ne.s32.totalorder %s236, %s238
      %p242 = scmp.eq.s32.totalorder %s29, 0
      %p243 = por %p241, %p242
      %p244 = scmp.ne.s32.totalorder %s236, %s238
      %p245 = scmp.eq.s32.totalorder %s34, 1
      %p246 = por %p244, %p245
      %p247 = scmp.ne.s32.totalorder %s238, %s239
      %p248 = scmp.eq.s32.totalorder %s34, 0
      %p249 = por %p247, %p248
      %p250 = scmp.ne.s32.totalorder %s238, %s239
      %p251 = scmp.eq.s32.totalorder %s35, 1
      %p252 = por %p250, %p251
      %p254 = scmp.ne.s32.totalorder %s239, %s253
      %p255 = scmp.eq.s32.totalorder %s35, 0
      %p256 = por %p254, %p255
      %s258 = sadd.s32 %s257, 1
      %p261 = scmp.eq.s32.totalorder %s29, 1
      %p262 = scmp.ne.s32.totalorder %s257, %s259
      %p263 = scmp.eq.s32.totalorder %s29, 0
      %p264 = por %p262, %p263
      %p265 = scmp.ne.s32.totalorder %s257, %s259
      %p266 = scmp.eq.s32.totalorder %s34, 1
      %p267 = por %p265, %p266
      %p268 = scmp.ne.s32.totalorder %s259, %s260
      %p269 = scmp.eq.s32.totalorder %s34, 0
      %p270 = por %p268, %p269
      %p271 = scmp.ne.s32.totalorder %s259, %s260
      %p272 = scmp.eq.s32.totalorder %s35, 1
      %p273 = por %p271, %p272
      %p275 = scmp.ne.s32.totalorder %s260, %s274
      %p276 = scmp.eq.s32.totalorder %s35, 0
      %p277 = por %p275, %p276
      %s279 = sadd.s32 %s278, 1
      %p282 = scmp.eq.s32.totalorder %s29, 1
      %p283 = scmp.ne.s32.totalorder %s278, %s280
      %p284 = scmp.eq.s32.totalorder %s29, 0
      %p285 = por %p283, %p284
      %p286 = scmp.ne.s32.totalorder %s278, %s280
      %p287 = scmp.eq.s32.totalorder %s34, 1
      %p288 = por %p286, %p287
      %p289 = scmp.ne.s32.totalorder %s280, %s281
      %p290 = scmp.eq.s32.totalorder %s34, 0
      %p291 = por %p289, %p290
      %p292 = scmp.ne.s32.totalorder %s280, %s281
      %p293 = scmp.eq.s32.totalorder %s35, 1
      %p294 = por %p292, %p293
      %p296 = scmp.ne.s32.totalorder %s281, %s295
      %p297 = scmp.eq.s32.totalorder %s35, 0
      %p298 = por %p296, %p297
      %s300 = sadd.s32 %s299, 1
      %p303 = scmp.eq.s32.totalorder %s29, 1
      %p304 = scmp.ne.s32.totalorder %s299, %s301
      %p305 = scmp.eq.s32.totalorder %s29, 0
      %p306 = por %p304, %p305
      %p307 = scmp.ne.s32.totalorder %s299, %s301
      %p308 = scmp.eq.s32.totalorder %s34, 1
      %p309 = por %p307, %p308
      %p310 = scmp.ne.s32.totalorder %s301, %s302
      %p311 = scmp.eq.s32.totalorder %s34, 0
      %p312 = por %p310, %p311
      %p313 = scmp.ne.s32.totalorder %s301, %s302
      %p314 = scmp.eq.s32.totalorder %s35, 1
      %p315 = por %p313, %p314
      %p317 = scmp.ne.s32.totalorder %s302, %s316
      %p318 = scmp.eq.s32.totalorder %s35, 0
      %p319 = por %p317, %p318
      %s321 = sadd.s32 %s320, 1
      %p324 = scmp.eq.s32.totalorder %s29, 1
      %p325 = scmp.ne.s32.totalorder %s320, %s322
      %p326 = scmp.eq.s32.totalorder %s29, 0
      %p327 = por %p325, %p326
      %p328 = scmp.ne.s32.totalorder %s320, %s322
      %p329 = scmp.eq.s32.totalorder %s34, 1
      %p330 = por %p328, %p329
      %p331 = scmp.ne.s32.totalorder %s322, %s323
      %p332 = scmp.eq.s32.totalorder %s34, 0
      %p333 = por %p331, %p332
      %p334 = scmp.ne.s32.totalorder %s322, %s323
      %p335 = scmp.eq.s32.totalorder %s35, 1
      %p336 = por %p334, %p335
      %p338 = scmp.ne.s32.totalorder %s323, %s337
      %p339 = scmp.eq.s32.totalorder %s35, 0
      %p340 = por %p338, %p339
      %s342 = sadd.s32 %s341, 1
      %p345 = scmp.eq.s32.totalorder %s29, 1
      %p346 = scmp.ne.s32.totalorder %s341, %s343
      %p347 = scmp.eq.s32.totalorder %s29, 0
      %p348 = por %p346, %p347
      %p349 = scmp.ne.s32.totalorder %s341, %s343
      %p350 = scmp.eq.s32.totalorder %s34, 1
      %p351 = por %p349, %p350
      %p352 = scmp.ne.s32.totalorder %s343, %s344
      %p353 = scmp.eq.s32.totalorder %s34, 0
      %p354 = por %p352, %p353
      %p355 = scmp.ne.s32.totalorder %s343, %s344
      %p356 = scmp.eq.s32.totalorder %s35, 1
      %p357 = por %p355, %p356
      %p359 = scmp.ne.s32.totalorder %s344, %s358
      %p360 = scmp.eq.s32.totalorder %s35, 0
      %p361 = por %p359, %p360
      %s363 = sadd.s32 %s362, 1
      %p366 = scmp.eq.s32.totalorder %s29, 1
      %p367 = scmp.ne.s32.totalorder %s362, %s364
      %p368 = scmp.eq.s32.totalorder %s29, 0
      %p369 = por %p367, %p368
      %p370 = scmp.ne.s32.totalorder %s362, %s364
      %p371 = scmp.eq.s32.totalorder %s34, 1
      %p372 = por %p370, %p371
      %p373 = scmp.ne.s32.totalorder %s364, %s365
      %p374 = scmp.eq.s32.totalorder %s34, 0
      %p375 = por %p373, %p374
      %p376 = scmp.ne.s32.totalorder %s364, %s365
      %p377 = scmp.eq.s32.totalorder %s35, 1
      %p378 = por %p376, %p377
      %p380 = scmp.ne.s32.totalorder %s365, %s379
      %p381 = scmp.eq.s32.totalorder %s35, 0
      %p382 = por %p380, %p381
      %s384 = sadd.s32 %s383, 1
      %p387 = scmp.eq.s32.totalorder %s29, 1
      %p388 = scmp.ne.s32.totalorder %s383, %s385
      %p389 = scmp.eq.s32.totalorder %s29, 0
      %p390 = por %p388, %p389
      %p391 = scmp.ne.s32.totalorder %s383, %s385
      %p392 = scmp.eq.s32.totalorder %s34, 1
      %p393 = por %p391, %p392
      %p394 = scmp.ne.s32.totalorder %s385, %s386
      %p395 = scmp.eq.s32.totalorder %s34, 0
      %p396 = por %p394, %p395
      %p397 = scmp.ne.s32.totalorder %s385, %s386
      %p398 = scmp.eq.s32.totalorder %s35, 1
      %p399 = por %p397, %p398
      %p401 = scmp.ne.s32.totalorder %s386, %s400
      %p402 = scmp.eq.s32.totalorder %s35, 0
      %p403 = por %p401, %p402
      %s405 = sadd.s32 %s404, 1
      %p408 = scmp.eq.s32.totalorder %s29, 1
      %p409 = scmp.ne.s32.totalorder %s404, %s406
      %p410 = scmp.eq.s32.totalorder %s29, 0
      %p411 = por %p409, %p410
      %p412 = scmp.ne.s32.totalorder %s404, %s406
      %p413 = scmp.eq.s32.totalorder %s34, 1
      %p414 = por %p412, %p413
      %p415 = scmp.ne.s32.totalorder %s406, %s407
      %p416 = scmp.eq.s32.totalorder %s34, 0
      %p417 = por %p415, %p416
      %p418 = scmp.ne.s32.totalorder %s406, %s407
      %p419 = scmp.eq.s32.totalorder %s35, 1
      %p420 = por %p418, %p419
      %p422 = scmp.ne.s32.totalorder %s407, %s421
      %p423 = scmp.eq.s32.totalorder %s35, 0
      %p424 = por %p422, %p423
      %s426 = sadd.s32 %s425, 1
      %p429 = scmp.eq.s32.totalorder %s29, 1
      %p430 = scmp.ne.s32.totalorder %s425, %s427
      %p431 = scmp.eq.s32.totalorder %s29, 0
      %p432 = por %p430, %p431
      %p433 = scmp.ne.s32.totalorder %s425, %s427
      %p434 = scmp.eq.s32.totalorder %s34, 1
      %p435 = por %p433, %p434
      %p436 = scmp.ne.s32.totalorder %s427, %s428
      %p437 = scmp.eq.s32.totalorder %s34, 0
      %p438 = por %p436, %p437
      %p439 = scmp.ne.s32.totalorder %s427, %s428
      %p440 = scmp.eq.s32.totalorder %s35, 1
      %p441 = por %p439, %p440
      %p443 = scmp.ne.s32.totalorder %s428, %s442
      %p444 = scmp.eq.s32.totalorder %s35, 0
      %p445 = por %p443, %p444
      %s447 = sadd.s32 %s446, 1
      %p450 = scmp.eq.s32.totalorder %s29, 1
      %p451 = scmp.ne.s32.totalorder %s446, %s448
      %p452 = scmp.eq.s32.totalorder %s29, 0
      %p453 = por %p451, %p452
      %p454 = scmp.ne.s32.totalorder %s446, %s448
      %p455 = scmp.eq.s32.totalorder %s34, 1
      %p456 = por %p454, %p455
      %p457 = scmp.ne.s32.totalorder %s448, %s449
      %p458 = scmp.eq.s32.totalorder %s34, 0
      %p459 = por %p457, %p458
      %p460 = scmp.ne.s32.totalorder %s448, %s449
      %p461 = scmp.eq.s32.totalorder %s35, 1
      %p462 = por %p460, %p461
      %p464 = scmp.ne.s32.totalorder %s449, %s463
      %p465 = scmp.eq.s32.totalorder %s35, 0
      %p466 = por %p464, %p465
      %s467 = ssub.s32 %s29, %s36
      %p468 = scmp.eq.s32.totalorder %s467, 0
      %s470 = sadd.s32 %s469, 1
      %s471 = scalar_select %p468, %s469, %s470
      %p474 = pneg %p468
      %p475 = scmp.eq.s32.totalorder %s29, 1
      %p476 = por %p474, %p475
      %p477 = scmp.ne.s32.totalorder %s469, %s472
      %p478 = scmp.eq.s32.totalorder %s29, 0
      %p479 = por %p477, %p478
      %p480 = scmp.ne.s32.totalorder %s469, %s472
      %p481 = scmp.eq.s32.totalorder %s34, 1
      %p482 = por %p480, %p481
      %p483 = scmp.ne.s32.totalorder %s472, %s473
      %p484 = scmp.eq.s32.totalorder %s34, 0
      %p485 = por %p483, %p484
      %p486 = scmp.ne.s32.totalorder %s472, %s473
      %p487 = scmp.eq.s32.totalorder %s35, 1
      %p488 = por %p486, %p487
      %p490 = scmp.ne.s32.totalorder %s473, %s489
      %p491 = scmp.eq.s32.totalorder %s35, 0
      %p492 = por %p490, %p491
      %p493 = scmp.le.s32.totalorder 1, %s29
      %p494 = scmp.lt.s32.totalorder %s29, 3
      %p495 = pnand %p493, %p494
      %p496 = pneg %p495
      // Predicated region
      $region9: #{convtransformer_forward.1} parent=5 // pred_check
        _
      $region10: #{convtransformer_forward.1} parent=5 // pred_check_branch
        %498 = sbr.rel (%p495) target = $region12
      $region11: #{convtransformer_forward.1} parent=5 // pred_region
        %s499 = ssub.s32 %s29, 1
        // Predicated region
        $region13: #{convtransformer_forward.1} parent=11 // pred_check
          %p500 = pneg %p102
        $region14: #{convtransformer_forward.1} parent=11 // pred_check_branch
          %502 = sbr.rel (%p500) target = $region16
        $region15: #{convtransformer_forward.1} parent=11 // pred_region
          _
        $region16: #{convtransformer_forward.1} parent=11 // pred_fallthru
          _
        // Predicated region
        $region17: #{convtransformer_forward.1} parent=11 // pred_check
          %p503 = pneg %p123
        $region18: #{convtransformer_forward.1} parent=11 // pred_check_branch
          %505 = sbr.rel (%p503) target = $region20
        $region19: #{convtransformer_forward.1} parent=11 // pred_region
          _
        $region20: #{convtransformer_forward.1} parent=11 // pred_fallthru
          _
        // Predicated region
        $region21: #{convtransformer_forward.1} parent=11 // pred_check
          %p506 = pneg %p144
        $region22: #{convtransformer_forward.1} parent=11 // pred_check_branch
          %508 = sbr.rel (%p506) target = $region24
        $region23: #{convtransformer_forward.1} parent=11 // pred_region
          _
        $region24: #{convtransformer_forward.1} parent=11 // pred_fallthru
          _
        // Predicated region
        $region25: #{convtransformer_forward.1} parent=11 // pred_check
          %p509 = pneg %p165
        $region26: #{convtransformer_forward.1} parent=11 // pred_check_branch
          %511 = sbr.rel (%p509) target = $region28
        $region27: #{convtransformer_forward.1} parent=11 // pred_region
          _
        $region28: #{convtransformer_forward.1} parent=11 // pred_fallthru
          _
        // Predicated region
        $region29: #{convtransformer_forward.1} parent=11 // pred_check
          %p512 = pneg %p186
        $region30: #{convtransformer_forward.1} parent=11 // pred_check_branch
          %514 = sbr.rel (%p512) target = $region32
        $region31: #{convtransformer_forward.1} parent=11 // pred_region
          _
        $region32: #{convtransformer_forward.1} parent=11 // pred_fallthru
          _
        // Predicated region
        $region33: #{convtransformer_forward.1} parent=11 // pred_check
          %p515 = pneg %p207
        $region34: #{convtransformer_forward.1} parent=11 // pred_check_branch
          %517 = sbr.rel (%p515) target = $region36
        $region35: #{convtransformer_forward.1} parent=11 // pred_region
          _
        $region36: #{convtransformer_forward.1} parent=11 // pred_fallthru
          _
        // Predicated region
        $region37: #{convtransformer_forward.1} parent=11 // pred_check
          %p518 = pneg %p228
        $region38: #{convtransformer_forward.1} parent=11 // pred_check_branch
          %520 = sbr.rel (%p518) target = $region40
        $region39: #{convtransformer_forward.1} parent=11 // pred_region
          _
        $region40: #{convtransformer_forward.1} parent=11 // pred_fallthru
          _
        // Predicated region
        $region41: #{convtransformer_forward.1} parent=11 // pred_check
          %p521 = pneg %p249
        $region42: #{convtransformer_forward.1} parent=11 // pred_check_branch
          %523 = sbr.rel (%p521) target = $region44
        $region43: #{convtransformer_forward.1} parent=11 // pred_region
          _
        $region44: #{convtransformer_forward.1} parent=11 // pred_fallthru
          _
        // Predicated region
        $region45: #{convtransformer_forward.1} parent=11 // pred_check
          %p524 = pneg %p270
        $region46: #{convtransformer_forward.1} parent=11 // pred_check_branch
          %526 = sbr.rel (%p524) target = $region48
        $region47: #{convtransformer_forward.1} parent=11 // pred_region
          _
        $region48: #{convtransformer_forward.1} parent=11 // pred_fallthru
          _
        // Predicated region
        $region49: #{convtransformer_forward.1} parent=11 // pred_check
          %p527 = pneg %p291
        $region50: #{convtransformer_forward.1} parent=11 // pred_check_branch
          %529 = sbr.rel (%p527) target = $region52
        $region51: #{convtransformer_forward.1} parent=11 // pred_region
          _
        $region52: #{convtransformer_forward.1} parent=11 // pred_fallthru
          _
        // Predicated region
        $region53: #{convtransformer_forward.1} parent=11 // pred_check
          %p530 = pneg %p312
        $region54: #{convtransformer_forward.1} parent=11 // pred_check_branch
          %532 = sbr.rel (%p530) target = $region56
        $region55: #{convtransformer_forward.1} parent=11 // pred_region
          _
        $region56: #{convtransformer_forward.1} parent=11 // pred_fallthru
          _
        // Predicated region
        $region57: #{convtransformer_forward.1} parent=11 // pred_check
          %p533 = pneg %p333
        $region58: #{convtransformer_forward.1} parent=11 // pred_check_branch
          %535 = sbr.rel (%p533) target = $region60
        $region59: #{convtransformer_forward.1} parent=11 // pred_region
          _
        $region60: #{convtransformer_forward.1} parent=11 // pred_fallthru
          _
        // Predicated region
        $region61: #{convtransformer_forward.1} parent=11 // pred_check
          %p536 = pneg %p354
        $region62: #{convtransformer_forward.1} parent=11 // pred_check_branch
          %538 = sbr.rel (%p536) target = $region64
        $region63: #{convtransformer_forward.1} parent=11 // pred_region
          _
        $region64: #{convtransformer_forward.1} parent=11 // pred_fallthru
          _
        // Predicated region
        $region65: #{convtransformer_forward.1} parent=11 // pred_check
          %p539 = pneg %p375
        $region66: #{convtransformer_forward.1} parent=11 // pred_check_branch
          %541 = sbr.rel (%p539) target = $region68
        $region67: #{convtransformer_forward.1} parent=11 // pred_region
          _
        $region68: #{convtransformer_forward.1} parent=11 // pred_fallthru
          _
        // Predicated region
        $region69: #{convtransformer_forward.1} parent=11 // pred_check
          %p542 = pneg %p396
        $region70: #{convtransformer_forward.1} parent=11 // pred_check_branch
          %544 = sbr.rel (%p542) target = $region72
        $region71: #{convtransformer_forward.1} parent=11 // pred_region
          _
        $region72: #{convtransformer_forward.1} parent=11 // pred_fallthru
          _
        // Predicated region
        $region73: #{convtransformer_forward.1} parent=11 // pred_check
          %p545 = pneg %p417
        $region74: #{convtransformer_forward.1} parent=11 // pred_check_branch
          %547 = sbr.rel (%p545) target = $region76
        $region75: #{convtransformer_forward.1} parent=11 // pred_region
          _
        $region76: #{convtransformer_forward.1} parent=11 // pred_fallthru
          _
        // Predicated region
        $region77: #{convtransformer_forward.1} parent=11 // pred_check
          %p548 = pneg %p438
        $region78: #{convtransformer_forward.1} parent=11 // pred_check_branch
          %550 = sbr.rel (%p548) target = $region80
        $region79: #{convtransformer_forward.1} parent=11 // pred_region
          _
        $region80: #{convtransformer_forward.1} parent=11 // pred_fallthru
          _
        // Predicated region
        $region81: #{convtransformer_forward.1} parent=11 // pred_check
          %p551 = pneg %p459
        $region82: #{convtransformer_forward.1} parent=11 // pred_check_branch
          %553 = sbr.rel (%p551) target = $region84
        $region83: #{convtransformer_forward.1} parent=11 // pred_region
          _
        $region84: #{convtransformer_forward.1} parent=11 // pred_fallthru
          _
      $region12: #{convtransformer_forward.1} parent=5 // pred_fallthru
        _
      %p554 = scmp.lt.s32.totalorder %s29, 2
      // Predicated region
      $region85: #{convtransformer_forward.1} parent=5 // pred_check
        %p555 = pneg %p554
      $region86: #{convtransformer_forward.1} parent=5 // pred_check_branch
        %557 = sbr.rel (%p555) target = $region88
      $region87: #{convtransformer_forward.1} parent=5 // pred_region
        // Predicated region
        $region89: #{convtransformer_forward.1} parent=87 // pred_check
          %p558 = pneg %p49
        $region90: #{convtransformer_forward.1} parent=87 // pred_check_branch
          %560 = sbr.rel (%p558) target = $region92
        $region91: #{convtransformer_forward.1} parent=87 // pred_region
          %p561 = scmp.lt.s32.totalorder %s29, 1
          %s562 = scalar_select %p561, %s29, 1
          %s563 = smul.addr %s562, 8
          %s564 = smul.addr %s563, 8
          %s565 = scalar_lea.vmem %s0, %s564
        $region92: #{convtransformer_forward.1} parent=87 // pred_fallthru
          _
        // Predicated region
        $region93: #{convtransformer_forward.1} parent=87 // pred_check
          %p566 = pneg %p75
        $region94: #{convtransformer_forward.1} parent=87 // pred_check_branch
          %568 = sbr.rel (%p566) target = $region96
        $region95: #{convtransformer_forward.1} parent=87 // pred_region
          %p569 = scmp.lt.s32.totalorder %s29, 1
          %s570 = scalar_select %p569, %s29, 1
          %s571 = smul.addr %s570, 8
          %s572 = smul.addr %s571, 8
          %s573 = scalar_lea.vmem %s1, %s572
        $region96: #{convtransformer_forward.1} parent=87 // pred_fallthru
          _
      $region88: #{convtransformer_forward.1} parent=5 // pred_fallthru
        _
      %p574 = scmp.le.s32.totalorder 1, %s29
      %p575 = scmp.lt.s32.totalorder %s29, 3
      %p576 = pnand %p574, %p575
      %p577 = pneg %p576
      // Predicated region
      $region97: #{convtransformer_forward.1} parent=5 // pred_check
        _
      $region98: #{convtransformer_forward.1} parent=5 // pred_check_branch
        %579 = sbr.rel (%p576) target = $region100
      $region99: #{convtransformer_forward.1} parent=5 // pred_region
        %s580 = ssub.s32 %s29, 1
        %p581 = scmp.lt.s32.totalorder %s34, 1
        %s582 = scalar_select %p581, %s34, 1
        %s583 = smul.addr %s582, 8
        %s584 = smul.addr %s583, 8
        %s585 = scalar_lea.vmem %s0, %s584
        %p586 = pneg %p55
        %p587 = pneg %p52
        %p588 = scmp.lt.s32.totalorder %s34, 1
        %s589 = scalar_select %p588, %s34, 1
        %s590 = smul.addr %s589, 8
        %s591 = smul.addr %s590, 8
        %s592 = scalar_lea.vmem %s1, %s591
        %p593 = pneg %p81
        %p594 = pneg %p78
        %p595 = pneg %p102
        %p596 = pneg %p99
        %p597 = pneg %p123
        %p598 = pneg %p120
        %p599 = pneg %p144
        %p600 = pneg %p141
        %p601 = pneg %p165
        %p602 = pneg %p162
        %p603 = pneg %p186
        %p604 = pneg %p183
        %p605 = pneg %p207
        %p606 = pneg %p204
        %p607 = pneg %p228
        %p608 = pneg %p225
        %p609 = pneg %p249
        %p610 = pneg %p246
        %p611 = pneg %p270
        %p612 = pneg %p267
        %p613 = pneg %p291
        %p614 = pneg %p288
        %p615 = pneg %p312
        %p616 = pneg %p309
        %p617 = pneg %p333
        %p618 = pneg %p330
        %p619 = pneg %p354
        %p620 = pneg %p351
        %p621 = pneg %p375
        %p622 = pneg %p372
        %p623 = pneg %p396
        %p624 = pneg %p393
        %p625 = pneg %p417
        %p626 = pneg %p414
        %p627 = pneg %p438
        %p628 = pneg %p435
        %p629 = pneg %p459
        %p630 = pneg %p456
        %p631 = pneg %p485
        %p632 = pneg %p482
        %s633 = sand.u32 %s472, 1
        %s634 = scalar_lea.sflag [#allocation3], %s633
        %s635 = sand.u32 %s472, 1
        %s636 = smul.addr %s635, 16
        %s637 = scalar_lea.vmem [#allocation2], %s636
        %p638 = scmp.lt.s32.totalorder %s34, 1
        %s639 = scalar_select %p638, %s34, 1
        %s640 = smul.addr %s639, 8
        %s641 = smul.addr %s640, 8
        %s642 = scalar_lea.vmem %s0, %s641
        %p643 = scmp.lt.s32.totalorder %s34, 1
        %s644 = scalar_select %p643, %s34, 1
        %s645 = smul.addr %s644, 8
        %s646 = smul.addr %s645, 8
        %s647 = scalar_lea.vmem %s1, %s646
        %v648 = vld [vmem:[%s642] sm:$0xff]
        %v649 = vld [vmem:[%s642 + $0x8] sm:$0xff]
        %v650 = vld [vmem:[%s642 + $0x10] sm:$0xff]
        %v651 = vld [vmem:[%s642 + $0x18] sm:$0xff]
        %v652 = vld [vmem:[%s642 + $0x20] sm:$0xff]
        %v653 = vld [vmem:[%s642 + $0x28] sm:$0xff]
        %v654 = vld [vmem:[%s642 + $0x30] sm:$0xff]
        %v655 = vld [vmem:[%s642 + $0x38] sm:$0xff]
        %v656 = vld [vmem:[%s2] sm:$0xff]
        %v657 = vld [vmem:[%s2 + $0x8] sm:$0xff]
        %v658 = vld [vmem:[%s2 + $0x10] sm:$0xff]
        %v659 = vld [vmem:[%s2 + $0x18] sm:$0xff]
        %v660 = vld [vmem:[%s2 + $0x20] sm:$0xff]
        %v661 = vld [vmem:[%s2 + $0x28] sm:$0xff]
        %v662 = vld [vmem:[%s2 + $0x30] sm:$0xff]
        %v663 = vld [vmem:[%s2 + $0x38] sm:$0xff]
        %v664 = vld [vmem:[%s2 + $0x40] sm:$0xff]
        %v665 = vld [vmem:[%s2 + $0x48] sm:$0xff]
        %v666 = vld [vmem:[%s2 + $0x50] sm:$0xff]
        %v667 = vld [vmem:[%s2 + $0x58] sm:$0xff]
        %v668 = vld [vmem:[%s2 + $0x60] sm:$0xff]
        %v669 = vld [vmem:[%s2 + $0x68] sm:$0xff]
        %v670 = vld [vmem:[%s2 + $0x70] sm:$0xff]
        %v671 = vld [vmem:[%s2 + $0x78] sm:$0xff]
        %v672 = vld [vmem:[%s2 + $0x80] sm:$0xff]
        %v673 = vld [vmem:[%s2 + $0x88] sm:$0xff]
        %v674 = vld [vmem:[%s2 + $0x90] sm:$0xff]
        %v675 = vld [vmem:[%s2 + $0x98] sm:$0xff]
        %v676 = vld [vmem:[%s2 + $0xa0] sm:$0xff]
        %v677 = vld [vmem:[%s2 + $0xa8] sm:$0xff]
        %v678 = vld [vmem:[%s2 + $0xb0] sm:$0xff]
        %v679 = vld [vmem:[%s2 + $0xb8] sm:$0xff]
        %v680 = vld [vmem:[%s2 + $0xc0] sm:$0xff]
        %v681 = vld [vmem:[%s2 + $0xc8] sm:$0xff]
        %v682 = vld [vmem:[%s2 + $0xd0] sm:$0xff]
        %v683 = vld [vmem:[%s2 + $0xd8] sm:$0xff]
        %v684 = vld [vmem:[%s2 + $0xe0] sm:$0xff]
        %v685 = vld [vmem:[%s2 + $0xe8] sm:$0xff]
        %v686 = vld [vmem:[%s2 + $0xf0] sm:$0xff]
        %v687 = vld [vmem:[%s2 + $0xf8] sm:$0xff]
        %v688 = vld [vmem:[%s2 + $0x100] sm:$0xff]
        %v689 = vld [vmem:[%s2 + $0x108] sm:$0xff]
        %v690 = vld [vmem:[%s2 + $0x110] sm:$0xff]
        %v691 = vld [vmem:[%s2 + $0x118] sm:$0xff]
        %v692 = vld [vmem:[%s2 + $0x120] sm:$0xff]
        %v693 = vld [vmem:[%s2 + $0x128] sm:$0xff]
        %v694 = vld [vmem:[%s2 + $0x130] sm:$0xff]
        %v695 = vld [vmem:[%s2 + $0x138] sm:$0xff]
        %v696 = vld [vmem:[%s2 + $0x140] sm:$0xff]
        %v697 = vld [vmem:[%s2 + $0x148] sm:$0xff]
        %v698 = vld [vmem:[%s2 + $0x150] sm:$0xff]
        %v699 = vld [vmem:[%s2 + $0x158] sm:$0xff]
        %v700 = vld [vmem:[%s2 + $0x160] sm:$0xff]
        %v701 = vld [vmem:[%s2 + $0x168] sm:$0xff]
        %v702 = vld [vmem:[%s2 + $0x170] sm:$0xff]
        %v703 = vld [vmem:[%s2 + $0x178] sm:$0xff]
        %v704 = vld [vmem:[%s2 + $0x180] sm:$0xff]
        %v705 = vld [vmem:[%s2 + $0x188] sm:$0xff]
        %v706 = vld [vmem:[%s2 + $0x190] sm:$0xff]
        %v707 = vld [vmem:[%s2 + $0x198] sm:$0xff]
        %v708 = vld [vmem:[%s2 + $0x1a0] sm:$0xff]
        %v709 = vld [vmem:[%s2 + $0x1a8] sm:$0xff]
        %v710 = vld [vmem:[%s2 + $0x1b0] sm:$0xff]
        %v711 = vld [vmem:[%s2 + $0x1b8] sm:$0xff]
        %v712 = vld [vmem:[%s2 + $0x1c0] sm:$0xff]
        %v713 = vld [vmem:[%s2 + $0x1c8] sm:$0xff]
        %v714 = vld [vmem:[%s2 + $0x1d0] sm:$0xff]
        %v715 = vld [vmem:[%s2 + $0x1d8] sm:$0xff]
        %v716 = vld [vmem:[%s2 + $0x1e0] sm:$0xff]
        %v717 = vld [vmem:[%s2 + $0x1e8] sm:$0xff]
        %v718 = vld [vmem:[%s2 + $0x1f0] sm:$0xff]
        %v719 = vld [vmem:[%s2 + $0x1f8] sm:$0xff]
        %v720 = vld [vmem:[%s3] sm:$0x1]
        %v722 = vperm.slane %v720, 0
        %724 = vmatpush.msra.mxu0 %v671
        %725 = vmatpush.msra.mxu0 %v670
        %726 = vmatpush.msra.mxu0 %v669
        %727 = vmatpush.msra.mxu0 %v668
        %728 = vmatpush.msra.mxu0 %v667
        %729 = vmatpush.msra.mxu0 %v666
        %730 = vmatpush.msra.mxu0 %v665
        %731 = vmatpush.msra.mxu0 %v664
        %732 = vmatpush.msra.mxu0 %v663
        %733 = vmatpush.msra.mxu0 %v662
        %734 = vmatpush.msra.mxu0 %v661
        %735 = vmatpush.msra.mxu0 %v660
        %736 = vmatpush.msra.mxu0 %v659
        %737 = vmatpush.msra.mxu0 %v658
        %738 = vmatpush.msra.mxu0 %v657
        %739 = vmatpush.msra.mxu0 %v656
        %740 = vmatmul.f32.gmra.mxu0 %v648
        %v741 = vpop.f32.mrf.mxu0
        %v742 = vadd.f32 %v722, %v741
        %743 = vmatmul.f32.gmra.mxu0 %v652
        %v744 = vpop.f32.mrf.mxu0
        %v745 = vadd.f32 %v722, %v744
        %746 = vdwg.mxu0
        %747 = vmatpush.msra.mxu0 %v687
        %748 = vmatpush.msra.mxu0 %v686
        %749 = vmatpush.msra.mxu0 %v685
        %750 = vmatpush.msra.mxu0 %v684
        %751 = vmatpush.msra.mxu0 %v683
        %752 = vmatpush.msra.mxu0 %v682
        %753 = vmatpush.msra.mxu0 %v681
        %754 = vmatpush.msra.mxu0 %v680
        %755 = vmatpush.msra.mxu0 %v679
        %756 = vmatpush.msra.mxu0 %v678
        %757 = vmatpush.msra.mxu0 %v677
        %758 = vmatpush.msra.mxu0 %v676
        %759 = vmatpush.msra.mxu0 %v675
        %760 = vmatpush.msra.mxu0 %v674
        %761 = vmatpush.msra.mxu0 %v673
        %762 = vmatpush.msra.mxu0 %v672
        %763 = vmatmul.f32.gmra.mxu0 %v649
        %v764 = vpop.f32.mrf.mxu0
        %v765 = vadd.f32 %v742, %v764
        %766 = vmatmul.f32.gmra.mxu0 %v653
        %v767 = vpop.f32.mrf.mxu0
        %v768 = vadd.f32 %v745, %v767
        %769 = vdwg.mxu0
        %770 = vmatpush.msra.mxu0 %v703
        %771 = vmatpush.msra.mxu0 %v702
        %772 = vmatpush.msra.mxu0 %v701
        %773 = vmatpush.msra.mxu0 %v700
        %774 = vmatpush.msra.mxu0 %v699
        %775 = vmatpush.msra.mxu0 %v698
        %776 = vmatpush.msra.mxu0 %v697
        %777 = vmatpush.msra.mxu0 %v696
        %778 = vmatpush.msra.mxu0 %v695
        %779 = vmatpush.msra.mxu0 %v694
        %780 = vmatpush.msra.mxu0 %v693
        %781 = vmatpush.msra.mxu0 %v692
        %782 = vmatpush.msra.mxu0 %v691
        %783 = vmatpush.msra.mxu0 %v690
        %784 = vmatpush.msra.mxu0 %v689
        %785 = vmatpush.msra.mxu0 %v688
        %786 = vmatmul.f32.gmra.mxu0 %v650
        %v787 = vpop.f32.mrf.mxu0
        %v788 = vadd.f32 %v765, %v787
        %789 = vmatmul.f32.gmra.mxu0 %v654
        %v790 = vpop.f32.mrf.mxu0
        %v791 = vadd.f32 %v768, %v790
        %792 = vdwg.mxu0
        %793 = vmatpush.msra.mxu0 %v719
        %794 = vmatpush.msra.mxu0 %v718
        %795 = vmatpush.msra.mxu0 %v717
        %796 = vmatpush.msra.mxu0 %v716
        %797 = vmatpush.msra.mxu0 %v715
        %798 = vmatpush.msra.mxu0 %v714
        %799 = vmatpush.msra.mxu0 %v713
        %800 = vmatpush.msra.mxu0 %v712
        %801 = vmatpush.msra.mxu0 %v711
        %802 = vmatpush.msra.mxu0 %v710
        %803 = vmatpush.msra.mxu0 %v709
        %804 = vmatpush.msra.mxu0 %v708
        %805 = vmatpush.msra.mxu0 %v707
        %806 = vmatpush.msra.mxu0 %v706
        %807 = vmatpush.msra.mxu0 %v705
        %808 = vmatpush.msra.mxu0 %v704
        %809 = vmatmul.f32.gmra.mxu0 %v651
        %v810 = vpop.f32.mrf.mxu0
        %v811 = vadd.f32 %v788, %v810
        %812 = vmatmul.f32.gmra.mxu0 %v655
        %v813 = vpop.f32.mrf.mxu0
        %v814 = vadd.f32 %v791, %v813
        %815 = vdwg.mxu0
        %v816 = vld [vmem:[%s4] sm:$0x1]
        %v817 = vld [vmem:[%s5] sm:$0x1]
        %818 = vadd.xlane.f32.xlu0 %v811
        %v819 = vpop.xlane.xlu0 %818
        %820 = vadd.xlane.f32.xlu0 %v814
        %v821 = vpop.xlane.xlu0 %820
        %v822 = vrcp.pop 128.0
        %v823 = vmul.f32 128.0, %v822
        %v824 = vsub.f32 1.0, %v823
        %v825 = vmul.f32 %v822, %v824
        %v826 = vadd.f32 %v822, %v825
        %vm827 = vweird.f32 %v822
        %v828 = vsel %vm827, %v822, %v826
        %v829 = vmul.f32 %v819, %v828
        %v830 = vmul.f32 %v821, %v828
        %v831 = vsub.f32 %v811, %v829
        %v832 = vsub.f32 %v814, %v830
        %v833 = vmul.f32 %v831, %v831
        %v834 = vmul.f32 %v832, %v832
        %835 = vadd.xlane.f32.xlu0 %v833
        %v836 = vpop.xlane.xlu0 %835
        %837 = vadd.xlane.f32.xlu0 %v834
        %v838 = vpop.xlane.xlu0 %837
        %v839 = vmul.f32 %v836, %v828
        %v840 = vmul.f32 %v838, %v828
        %v841 = vadd.f32 %v839, 1e-05
        %v842 = vadd.f32 %v840, 1e-05
        %v843 = vrsqrt.pop %v841
        %v844 = vmul.f32 %v843, %v841
        %v845 = vmul.f32 %v844, %v843
        %v846 = vmul.f32 0.5, %v845
        %v847 = vsub.f32 1.5, %v846
        %v848 = vmul.f32 %v843, %v847
        %vm849 = vweird.f32 %v841
        %vm850 = vweird.f32 %v843
        %vm851 = vmor %vm849, %vm850
        %v852 = vsel %vm851, %v843, %v848
        %v853 = vrsqrt.pop %v842
        %v854 = vmul.f32 %v853, %v842
        %v855 = vmul.f32 %v854, %v853
        %v856 = vmul.f32 0.5, %v855
        %v857 = vsub.f32 1.5, %v856
        %v858 = vmul.f32 %v853, %v857
        %vm859 = vweird.f32 %v842
        %vm860 = vweird.f32 %v853
        %vm861 = vmor %vm859, %vm860
        %v862 = vsel %vm861, %v853, %v858
        %v863 = vmul.f32 %v831, %v852
        %v864 = vmul.f32 %v832, %v862
        %v866 = vperm.slane %v816, 0
        %v868 = vmul.f32 %v863, %v866
        %v869 = vmul.f32 %v864, %v866
        %v871 = vperm.slane %v817, 0
        %v873 = vadd.f32 %v868, %v871
        %v874 = vadd.f32 %v869, %v871
        %v875 = vld [vmem:[%s647] sm:$0xff]
        %v876 = vld [vmem:[%s647 + $0x8] sm:$0xff]
        %v877 = vld [vmem:[%s647 + $0x10] sm:$0xff]
        %v878 = vld [vmem:[%s647 + $0x18] sm:$0xff]
        %v879 = vld [vmem:[%s647 + $0x20] sm:$0xff]
        %v880 = vld [vmem:[%s647 + $0x28] sm:$0xff]
        %v881 = vld [vmem:[%s647 + $0x30] sm:$0xff]
        %v882 = vld [vmem:[%s647 + $0x38] sm:$0xff]
        %v883 = vld [vmem:[%s6] sm:$0x1]
        %v884 = vld [vmem:[%s7] sm:$0x1]
        %885 = vadd.xlane.f32.xlu0 %v875
        %v886 = vpop.xlane.xlu0 %885
        %887 = vadd.xlane.f32.xlu0 %v876
        %v888 = vpop.xlane.xlu0 %887
        %889 = vadd.xlane.f32.xlu0 %v877
        %v890 = vpop.xlane.xlu0 %889
        %891 = vadd.xlane.f32.xlu0 %v878
        %v892 = vpop.xlane.xlu0 %891
        %893 = vadd.xlane.f32.xlu0 %v879
        %v894 = vpop.xlane.xlu0 %893
        %895 = vadd.xlane.f32.xlu0 %v880
        %v896 = vpop.xlane.xlu0 %895
        %897 = vadd.xlane.f32.xlu0 %v881
        %v898 = vpop.xlane.xlu0 %897
        %899 = vadd.xlane.f32.xlu0 %v882
        %v900 = vpop.xlane.xlu0 %899
        %v901 = vmul.f32 %v886, %v828
        %v902 = vmul.f32 %v888, %v828
        %v903 = vmul.f32 %v890, %v828
        %v904 = vmul.f32 %v892, %v828
        %v905 = vmul.f32 %v894, %v828
        %v906 = vmul.f32 %v896, %v828
        %v907 = vmul.f32 %v898, %v828
        %v908 = vmul.f32 %v900, %v828
        %v909 = vsub.f32 %v875, %v901
        %v910 = vsub.f32 %v876, %v902
        %v911 = vsub.f32 %v877, %v903
        %v912 = vsub.f32 %v878, %v904
        %v913 = vsub.f32 %v879, %v905
        %v914 = vsub.f32 %v880, %v906
        %v915 = vsub.f32 %v881, %v907
        %v916 = vsub.f32 %v882, %v908
        %v917 = vmul.f32 %v909, %v909
        %v918 = vmul.f32 %v910, %v910
        %v919 = vmul.f32 %v911, %v911
        %v920 = vmul.f32 %v912, %v912
        %v921 = vmul.f32 %v913, %v913
        %v922 = vmul.f32 %v914, %v914
        %v923 = vmul.f32 %v915, %v915
        %v924 = vmul.f32 %v916, %v916
        %925 = vadd.xlane.f32.xlu0 %v917
        %v926 = vpop.xlane.xlu0 %925
        %927 = vadd.xlane.f32.xlu0 %v918
        %v928 = vpop.xlane.xlu0 %927
        %929 = vadd.xlane.f32.xlu0 %v919
        %v930 = vpop.xlane.xlu0 %929
        %931 = vadd.xlane.f32.xlu0 %v920
        %v932 = vpop.xlane.xlu0 %931
        %933 = vadd.xlane.f32.xlu0 %v921
        %v934 = vpop.xlane.xlu0 %933
        %935 = vadd.xlane.f32.xlu0 %v922
        %v936 = vpop.xlane.xlu0 %935
        %937 = vadd.xlane.f32.xlu0 %v923
        %v938 = vpop.xlane.xlu0 %937
        %939 = vadd.xlane.f32.xlu0 %v924
        %v940 = vpop.xlane.xlu0 %939
        %v941 = vmul.f32 %v926, %v828
        %v942 = vmul.f32 %v928, %v828
        %v943 = vmul.f32 %v930, %v828
        %v944 = vmul.f32 %v932, %v828
        %v945 = vmul.f32 %v934, %v828
        %v946 = vmul.f32 %v936, %v828
        %v947 = vmul.f32 %v938, %v828
        %v948 = vmul.f32 %v940, %v828
        %v949 = vadd.f32 %v941, 1e-05
        %v950 = vadd.f32 %v942, 1e-05
        %v951 = vadd.f32 %v943, 1e-05
        %v952 = vadd.f32 %v944, 1e-05
        %v953 = vadd.f32 %v945, 1e-05
        %v954 = vadd.f32 %v946, 1e-05
        %v955 = vadd.f32 %v947, 1e-05
        %v956 = vadd.f32 %v948, 1e-05
        %v957 = vrsqrt.pop %v949
        %v958 = vmul.f32 %v957, %v949
        %v959 = vmul.f32 %v958, %v957
        %v960 = vmul.f32 0.5, %v959
        %v961 = vsub.f32 1.5, %v960
        %v962 = vmul.f32 %v957, %v961
        %vm963 = vweird.f32 %v949
        %vm964 = vweird.f32 %v957
        %vm965 = vmor %vm963, %vm964
        %v966 = vsel %vm965, %v957, %v962
        %v967 = vrsqrt.pop %v950
        %v968 = vmul.f32 %v967, %v950
        %v969 = vmul.f32 %v968, %v967
        %v970 = vmul.f32 0.5, %v969
        %v971 = vsub.f32 1.5, %v970
        %v972 = vmul.f32 %v967, %v971
        %vm973 = vweird.f32 %v950
        %vm974 = vweird.f32 %v967
        %vm975 = vmor %vm973, %vm974
        %v976 = vsel %vm975, %v967, %v972
        %v977 = vrsqrt.pop %v951
        %v978 = vmul.f32 %v977, %v951
        %v979 = vmul.f32 %v978, %v977
        %v980 = vmul.f32 0.5, %v979
        %v981 = vsub.f32 1.5, %v980
        %v982 = vmul.f32 %v977, %v981
        %vm983 = vweird.f32 %v951
        %vm984 = vweird.f32 %v977
        %vm985 = vmor %vm983, %vm984
        %v986 = vsel %vm985, %v977, %v982
        %v987 = vrsqrt.pop %v952
        %v988 = vmul.f32 %v987, %v952
        %v989 = vmul.f32 %v988, %v987
        %v990 = vmul.f32 0.5, %v989
        %v991 = vsub.f32 1.5, %v990
        %v992 = vmul.f32 %v987, %v991
        %vm993 = vweird.f32 %v952
        %vm994 = vweird.f32 %v987
        %vm995 = vmor %vm993, %vm994
        %v996 = vsel %vm995, %v987, %v992
        %v997 = vrsqrt.pop %v953
        %v998 = vmul.f32 %v997, %v953
        %v999 = vmul.f32 %v998, %v997
        %v1000 = vmul.f32 0.5, %v999
        %v1001 = vsub.f32 1.5, %v1000
        %v1002 = vmul.f32 %v997, %v1001
        %vm1003 = vweird.f32 %v953
        %vm1004 = vweird.f32 %v997
        %vm1005 = vmor %vm1003, %vm1004
        %v1006 = vsel %vm1005, %v997, %v1002
        %v1007 = vrsqrt.pop %v954
        %v1008 = vmul.f32 %v1007, %v954
        %v1009 = vmul.f32 %v1008, %v1007
        %v1010 = vmul.f32 0.5, %v1009
        %v1011 = vsub.f32 1.5, %v1010
        %v1012 = vmul.f32 %v1007, %v1011
        %vm1013 = vweird.f32 %v954
        %vm1014 = vweird.f32 %v1007
        %vm1015 = vmor %vm1013, %vm1014
        %v1016 = vsel %vm1015, %v1007, %v1012
        %v1017 = vrsqrt.pop %v955
        %v1018 = vmul.f32 %v1017, %v955
        %v1019 = vmul.f32 %v1018, %v1017
        %v1020 = vmul.f32 0.5, %v1019
        %v1021 = vsub.f32 1.5, %v1020
        %v1022 = vmul.f32 %v1017, %v1021
        %vm1023 = vweird.f32 %v955
        %vm1024 = vweird.f32 %v1017
        %vm1025 = vmor %vm1023, %vm1024
        %v1026 = vsel %vm1025, %v1017, %v1022
        %v1027 = vrsqrt.pop %v956
        %v1028 = vmul.f32 %v1027, %v956
        %v1029 = vmul.f32 %v1028, %v1027
        %v1030 = vmul.f32 0.5, %v1029
        %v1031 = vsub.f32 1.5, %v1030
        %v1032 = vmul.f32 %v1027, %v1031
        %vm1033 = vweird.f32 %v956
        %vm1034 = vweird.f32 %v1027
        %vm1035 = vmor %vm1033, %vm1034
        %v1036 = vsel %vm1035, %v1027, %v1032
        %v1037 = vmul.f32 %v909, %v966
        %v1038 = vmul.f32 %v910, %v976
        %v1039 = vmul.f32 %v911, %v986
        %v1040 = vmul.f32 %v912, %v996
        %v1041 = vmul.f32 %v913, %v1006
        %v1042 = vmul.f32 %v914, %v1016
        %v1043 = vmul.f32 %v915, %v1026
        %v1044 = vmul.f32 %v916, %v1036
        %v1046 = vperm.slane %v883, 0
        %v1048 = vmul.f32 %v1037, %v1046
        %v1049 = vmul.f32 %v1038, %v1046
        %v1050 = vmul.f32 %v1039, %v1046
        %v1051 = vmul.f32 %v1040, %v1046
        %v1052 = vmul.f32 %v1041, %v1046
        %v1053 = vmul.f32 %v1042, %v1046
        %v1054 = vmul.f32 %v1043, %v1046
        %v1055 = vmul.f32 %v1044, %v1046
        %v1057 = vperm.slane %v884, 0
        %v1059 = vadd.f32 %v1048, %v1057
        %v1060 = vadd.f32 %v1049, %v1057
        %v1061 = vadd.f32 %v1050, %v1057
        %v1062 = vadd.f32 %v1051, %v1057
        %v1063 = vadd.f32 %v1052, %v1057
        %v1064 = vadd.f32 %v1053, %v1057
        %v1065 = vadd.f32 %v1054, %v1057
        %v1066 = vadd.f32 %v1055, %v1057
        %v1067 = vld [vmem:[%s8] sm:$0xff]
        %v1068 = vld [vmem:[%s8 + $0x8] sm:$0xff]
        %v1069 = vld [vmem:[%s8 + $0x10] sm:$0xff]
        %v1070 = vld [vmem:[%s8 + $0x18] sm:$0xff]
        %v1071 = vld [vmem:[%s8 + $0x20] sm:$0xff]
        %v1072 = vld [vmem:[%s8 + $0x28] sm:$0xff]
        %v1073 = vld [vmem:[%s8 + $0x30] sm:$0xff]
        %v1074 = vld [vmem:[%s8 + $0x38] sm:$0xff]
        %v1075 = vld [vmem:[%s8 + $0x40] sm:$0xff]
        %v1076 = vld [vmem:[%s8 + $0x48] sm:$0xff]
        %v1077 = vld [vmem:[%s8 + $0x50] sm:$0xff]
        %v1078 = vld [vmem:[%s8 + $0x58] sm:$0xff]
        %v1079 = vld [vmem:[%s8 + $0x60] sm:$0xff]
        %v1080 = vld [vmem:[%s8 + $0x68] sm:$0xff]
        %v1081 = vld [vmem:[%s8 + $0x70] sm:$0xff]
        %v1082 = vld [vmem:[%s8 + $0x78] sm:$0xff]
        %1083 = vmatpush.msra.mxu0 %v1082
        %1084 = vmatpush.msra.mxu0 %v1081
        %1085 = vmatpush.msra.mxu0 %v1080
        %1086 = vmatpush.msra.mxu0 %v1079
        %1087 = vmatpush.msra.mxu0 %v1078
        %1088 = vmatpush.msra.mxu0 %v1077
        %1089 = vmatpush.msra.mxu0 %v1076
        %1090 = vmatpush.msra.mxu0 %v1075
        %1091 = vmatpush.msra.mxu0 %v1074
        %1092 = vmatpush.msra.mxu0 %v1073
        %1093 = vmatpush.msra.mxu0 %v1072
        %1094 = vmatpush.msra.mxu0 %v1071
        %1095 = vmatpush.msra.mxu0 %v1070
        %1096 = vmatpush.msra.mxu0 %v1069
        %1097 = vmatpush.msra.mxu0 %v1068
        %1098 = vmatpush.msra.mxu0 %v1067
        %1099 = vmatmul.f32.gmra.mxu0 %v873
        %v1100 = vpop.f32.mrf.mxu0
        %v1101 = vadd.f32 0.0, %v1100
        %1102 = vmatmul.f32.gmra.mxu0 %v874
        %v1103 = vpop.f32.mrf.mxu0
        %v1104 = vadd.f32 0.0, %v1103
        %1105 = vdwg.mxu0
        %v1106 = vmul.f32 %v1101, 0.125
        %v1107 = vmul.f32 %v1104, 0.125
        %v1108 = vld [vmem:[%s9] sm:$0xff]
        %v1109 = vld [vmem:[%s9 + $0x8] sm:$0xff]
        %v1110 = vld [vmem:[%s9 + $0x10] sm:$0xff]
        %v1111 = vld [vmem:[%s9 + $0x18] sm:$0xff]
        %v1112 = vld [vmem:[%s9 + $0x20] sm:$0xff]
        %v1113 = vld [vmem:[%s9 + $0x28] sm:$0xff]
        %v1114 = vld [vmem:[%s9 + $0x30] sm:$0xff]
        %v1115 = vld [vmem:[%s9 + $0x38] sm:$0xff]
        %v1116 = vld [vmem:[%s9 + $0x40] sm:$0xff]
        %v1117 = vld [vmem:[%s9 + $0x48] sm:$0xff]
        %v1118 = vld [vmem:[%s9 + $0x50] sm:$0xff]
        %v1119 = vld [vmem:[%s9 + $0x58] sm:$0xff]
        %v1120 = vld [vmem:[%s9 + $0x60] sm:$0xff]
        %v1121 = vld [vmem:[%s9 + $0x68] sm:$0xff]
        %v1122 = vld [vmem:[%s9 + $0x70] sm:$0xff]
        %v1123 = vld [vmem:[%s9 + $0x78] sm:$0xff]
        %v1124 = vld [vmem:[%s9 + $0x80] sm:$0xff]
        %v1125 = vld [vmem:[%s9 + $0x88] sm:$0xff]
        %v1126 = vld [vmem:[%s9 + $0x90] sm:$0xff]
        %v1127 = vld [vmem:[%s9 + $0x98] sm:$0xff]
        %v1128 = vld [vmem:[%s9 + $0xa0] sm:$0xff]
        %v1129 = vld [vmem:[%s9 + $0xa8] sm:$0xff]
        %v1130 = vld [vmem:[%s9 + $0xb0] sm:$0xff]
        %v1131 = vld [vmem:[%s9 + $0xb8] sm:$0xff]
        %v1132 = vld [vmem:[%s9 + $0xc0] sm:$0xff]
        %v1133 = vld [vmem:[%s9 + $0xc8] sm:$0xff]
        %v1134 = vld [vmem:[%s9 + $0xd0] sm:$0xff]
        %v1135 = vld [vmem:[%s9 + $0xd8] sm:$0xff]
        %v1136 = vld [vmem:[%s9 + $0xe0] sm:$0xff]
        %v1137 = vld [vmem:[%s9 + $0xe8] sm:$0xff]
        %v1138 = vld [vmem:[%s9 + $0xf0] sm:$0xff]
        %v1139 = vld [vmem:[%s9 + $0xf8] sm:$0xff]
        %1140 = vmatpush.msra.mxu0 %v1138
        %1141 = vmatpush.msra.mxu0 %v1136
        %1142 = vmatpush.msra.mxu0 %v1134
        %1143 = vmatpush.msra.mxu0 %v1132
        %1144 = vmatpush.msra.mxu0 %v1130
        %1145 = vmatpush.msra.mxu0 %v1128
        %1146 = vmatpush.msra.mxu0 %v1126
        %1147 = vmatpush.msra.mxu0 %v1124
        %1148 = vmatpush.msra.mxu0 %v1122
        %1149 = vmatpush.msra.mxu0 %v1120
        %1150 = vmatpush.msra.mxu0 %v1118
        %1151 = vmatpush.msra.mxu0 %v1116
        %1152 = vmatpush.msra.mxu0 %v1114
        %1153 = vmatpush.msra.mxu0 %v1112
        %1154 = vmatpush.msra.mxu0 %v1110
        %1155 = vmatpush.msra.mxu0 %v1108
        %1156 = vmatmul.f32.gmra.mxu0 %v1059
        %v1157 = vpop.f32.mrf.mxu0
        %v1158 = vadd.f32 0.0, %v1157
        %1159 = vmatmul.f32.gmra.mxu0 %v1060
        %v1160 = vpop.f32.mrf.mxu0
        %v1161 = vadd.f32 0.0, %v1160
        %1162 = vmatmul.f32.gmra.mxu0 %v1061
        %v1163 = vpop.f32.mrf.mxu0
        %v1164 = vadd.f32 0.0, %v1163
        %1165 = vmatmul.f32.gmra.mxu0 %v1062
        %v1166 = vpop.f32.mrf.mxu0
        %v1167 = vadd.f32 0.0, %v1166
        %1168 = vmatmul.f32.gmra.mxu0 %v1063
        %v1169 = vpop.f32.mrf.mxu0
        %v1170 = vadd.f32 0.0, %v1169
        %1171 = vmatmul.f32.gmra.mxu0 %v1064
        %v1172 = vpop.f32.mrf.mxu0
        %v1173 = vadd.f32 0.0, %v1172
        %1174 = vmatmul.f32.gmra.mxu0 %v1065
        %v1175 = vpop.f32.mrf.mxu0
        %v1176 = vadd.f32 0.0, %v1175
        %1177 = vmatmul.f32.gmra.mxu0 %v1066
        %v1178 = vpop.f32.mrf.mxu0
        %v1179 = vadd.f32 0.0, %v1178
        %1180 = vdwg.mxu0
        %1181 = vmatpush.msra.mxu0 %v1139
        %1182 = vmatpush.msra.mxu0 %v1137
        %1183 = vmatpush.msra.mxu0 %v1135
        %1184 = vmatpush.msra.mxu0 %v1133
        %1185 = vmatpush.msra.mxu0 %v1131
        %1186 = vmatpush.msra.mxu0 %v1129
        %1187 = vmatpush.msra.mxu0 %v1127
        %1188 = vmatpush.msra.mxu0 %v1125
        %1189 = vmatpush.msra.mxu0 %v1123
        %1190 = vmatpush.msra.mxu0 %v1121
        %1191 = vmatpush.msra.mxu0 %v1119
        %1192 = vmatpush.msra.mxu0 %v1117
        %1193 = vmatpush.msra.mxu0 %v1115
        %1194 = vmatpush.msra.mxu0 %v1113
        %1195 = vmatpush.msra.mxu0 %v1111
        %1196 = vmatpush.msra.mxu0 %v1109
        %1197 = vmatmul.f32.gmra.mxu0 %v1059
        %v1198 = vpop.f32.mrf.mxu0
        %v1199 = vadd.f32 0.0, %v1198
        %1200 = vmatmul.f32.gmra.mxu0 %v1060
        %v1201 = vpop.f32.mrf.mxu0
        %v1202 = vadd.f32 0.0, %v1201
        %1203 = vmatmul.f32.gmra.mxu0 %v1061
        %v1204 = vpop.f32.mrf.mxu0
        %v1205 = vadd.f32 0.0, %v1204
        %1206 = vmatmul.f32.gmra.mxu0 %v1062
        %v1207 = vpop.f32.mrf.mxu0
        %v1208 = vadd.f32 0.0, %v1207
        %1209 = vmatmul.f32.gmra.mxu0 %v1063
        %v1210 = vpop.f32.mrf.mxu0
        %v1211 = vadd.f32 0.0, %v1210
        %1212 = vmatmul.f32.gmra.mxu0 %v1064
        %v1213 = vpop.f32.mrf.mxu0
        %v1214 = vadd.f32 0.0, %v1213
        %1215 = vmatmul.f32.gmra.mxu0 %v1065
        %v1216 = vpop.f32.mrf.mxu0
        %v1217 = vadd.f32 0.0, %v1216
        %1218 = vmatmul.f32.gmra.mxu0 %v1066
        %v1219 = vpop.f32.mrf.mxu0
        %v1220 = vadd.f32 0.0, %v1219
        %1221 = vdwg.mxu0
        %v1222 = vld [vmem:[%s10] sm:$0xff]
        %v1223 = vld [vmem:[%s10 + $0x8] sm:$0xff]
        %v1224 = vld [vmem:[%s10 + $0x10] sm:$0xff]
        %v1225 = vld [vmem:[%s10 + $0x18] sm:$0xff]
        %v1226 = vld [vmem:[%s10 + $0x20] sm:$0xff]
        %v1227 = vld [vmem:[%s10 + $0x28] sm:$0xff]
        %v1228 = vld [vmem:[%s10 + $0x30] sm:$0xff]
        %v1229 = vld [vmem:[%s10 + $0x38] sm:$0xff]
        %v1230 = vld [vmem:[%s10 + $0x40] sm:$0xff]
        %v1231 = vld [vmem:[%s10 + $0x48] sm:$0xff]
        %v1232 = vld [vmem:[%s10 + $0x50] sm:$0xff]
        %v1233 = vld [vmem:[%s10 + $0x58] sm:$0xff]
        %v1234 = vld [vmem:[%s10 + $0x60] sm:$0xff]
        %v1235 = vld [vmem:[%s10 + $0x68] sm:$0xff]
        %v1236 = vld [vmem:[%s10 + $0x70] sm:$0xff]
        %v1237 = vld [vmem:[%s10 + $0x78] sm:$0xff]
        %vm1238 = vcmask 523264
        %v1240 = vsel %vm1238, %v1106, 0
        %v1243 = vsel %vm1238, %v1107, 0
        %v1246 = vsel %vm1238, %v1158, 0
        %v1249 = vsel %vm1238, %v1161, 0
        %v1252 = vsel %vm1238, %v1164, 0
        %v1255 = vsel %vm1238, %v1167, 0
        %v1258 = vsel %vm1238, %v1170, 0
        %v1261 = vsel %vm1238, %v1173, 0
        %v1264 = vsel %vm1238, %v1176, 0
        %v1267 = vsel %vm1238, %v1179, 0
        %1269 = vmatpush.xpose.msra.mxu0 0.0
        %1270 = vmatpush.xpose.msra.mxu0 0.0
        %1271 = vmatpush.xpose.msra.mxu0 0.0
        %1272 = vmatpush.xpose.msra.mxu0 0.0
        %1273 = vmatpush.xpose.msra.mxu0 0.0
        %1274 = vmatpush.xpose.msra.mxu0 0.0
        %1275 = vmatpush.xpose.msra.mxu0 0.0
        %1276 = vmatpush.xpose.msra.mxu0 0.0
        %1277 = vmatpush.xpose.msra.mxu0 %v1267
        %1278 = vmatpush.xpose.msra.mxu0 %v1264
        %1279 = vmatpush.xpose.msra.mxu0 %v1261
        %1280 = vmatpush.xpose.msra.mxu0 %v1258
        %1281 = vmatpush.xpose.msra.mxu0 %v1255
        %1282 = vmatpush.xpose.msra.mxu0 %v1252
        %1283 = vmatpush.xpose.msra.mxu0 %v1249
        %1284 = vmatpush.xpose.msra.mxu0 %v1246
        %1285 = vmatmul.f32.gmra.mxu0 %v1240
        %v1286 = vpop.f32.mrf.mxu0
        %v1287 = vadd.f32 0.0, %v1286
        %1288 = vmatmul.f32.gmra.mxu0 %v1243
        %v1289 = vpop.f32.mrf.mxu0
        %v1290 = vadd.f32 0.0, %v1289
        %1291 = vdwg.mxu0
        %v1292 = vsel %vm1238, %v1287, -inf
        %1293 = vmax.xlane.f32.xlu0 %v1292
        %v1294 = vpop.xlane.xlu0 %1293
        %v1295 = vsel %vm1238, %v1290, -inf
        %1296 = vmax.xlane.f32.xlu0 %v1295
        %v1297 = vpop.xlane.xlu0 %1296
        %v1298 = vsub.f32 %v1287, %v1294
        %v1299 = vsub.f32 %v1290, %v1297
        %v1300 = vmul.f32 %v1298, 1.442695
        %v1301 = vpow.pop %v1300
        %v1302 = vmul.f32 %v1299, 1.442695
        %v1303 = vpow.pop %v1302
        %v1304 = vsel %vm1238, %v1301, 0.0
        %1305 = vadd.xlane.f32.xlu0 %v1304
        %v1306 = vpop.xlane.xlu0 %1305
        %v1307 = vsel %vm1238, %v1303, 0.0
        %1308 = vadd.xlane.f32.xlu0 %v1307
        %v1309 = vpop.xlane.xlu0 %1308
        %v1310 = vrcp.pop %v1306
        %v1311 = vrcp.pop %v1309
        %v1312 = vmul.f32 %v1301, %v1310
        %v1313 = vmul.f32 %v1303, %v1311
        %v1315 = vsel %vm1238, %v1312, 0
        %v1318 = vsel %vm1238, %v1313, 0
        %1320 = vmatpush.msra.mxu0 0.0
        %1321 = vmatpush.msra.mxu0 0.0
        %1322 = vmatpush.msra.mxu0 0.0
        %1323 = vmatpush.msra.mxu0 0.0
        %1324 = vmatpush.msra.mxu0 0.0
        %1325 = vmatpush.msra.mxu0 0.0
        %1326 = vmatpush.msra.mxu0 0.0
        %1327 = vmatpush.msra.mxu0 0.0
        %1328 = vmatpush.msra.mxu0 %v1220
        %1329 = vmatpush.msra.mxu0 %v1217
        %1330 = vmatpush.msra.mxu0 %v1214
        %1331 = vmatpush.msra.mxu0 %v1211
        %1332 = vmatpush.msra.mxu0 %v1208
        %1333 = vmatpush.msra.mxu0 %v1205
        %1334 = vmatpush.msra.mxu0 %v1202
        %1335 = vmatpush.msra.mxu0 %v1199
        %1336 = vmatmul.f32.gmra.mxu0 %v1315
        %v1337 = vpop.f32.mrf.mxu0
        %v1338 = vadd.f32 0.0, %v1337
        %1339 = vmatmul.f32.gmra.mxu0 %v1318
        %v1340 = vpop.f32.mrf.mxu0
        %v1341 = vadd.f32 0.0, %v1340
        %1342 = vdwg.mxu0
        %1343 = vrot.lane.b32.xlu0 %v1106, 64
        %v1344 = vpop.permute.xlu0 %1343
        %1345 = vrot.lane.b32.xlu0 %v1107, 64
        %v1346 = vpop.permute.xlu0 %1345
        %1347 = vrot.lane.b32.xlu0 %v1158, 64
        %v1348 = vpop.permute.xlu0 %1347
        %1349 = vrot.lane.b32.xlu0 %v1161, 64
        %v1350 = vpop.permute.xlu0 %1349
        %1351 = vrot.lane.b32.xlu0 %v1164, 64
        %v1352 = vpop.permute.xlu0 %1351
        %1353 = vrot.lane.b32.xlu0 %v1167, 64
        %v1354 = vpop.permute.xlu0 %1353
        %1355 = vrot.lane.b32.xlu0 %v1170, 64
        %v1356 = vpop.permute.xlu0 %1355
        %1357 = vrot.lane.b32.xlu0 %v1173, 64
        %v1358 = vpop.permute.xlu0 %1357
        %1359 = vrot.lane.b32.xlu0 %v1176, 64
        %v1360 = vpop.permute.xlu0 %1359
        %1361 = vrot.lane.b32.xlu0 %v1179, 64
        %v1362 = vpop.permute.xlu0 %1361
        %v1363 = vsel %vm1238, %v1344, 0
        %v1365 = vsel %vm1238, %v1346, 0
        %v1367 = vsel %vm1238, %v1348, 0
        %v1369 = vsel %vm1238, %v1350, 0
        %v1371 = vsel %vm1238, %v1352, 0
        %v1373 = vsel %vm1238, %v1354, 0
        %v1375 = vsel %vm1238, %v1356, 0
        %v1377 = vsel %vm1238, %v1358, 0
        %v1379 = vsel %vm1238, %v1360, 0
        %v1381 = vsel %vm1238, %v1362, 0
        %1383 = vmatpush.xpose.msra.mxu0 0.0
        %1384 = vmatpush.xpose.msra.mxu0 0.0
        %1385 = vmatpush.xpose.msra.mxu0 0.0
        %1386 = vmatpush.xpose.msra.mxu0 0.0
        %1387 = vmatpush.xpose.msra.mxu0 0.0
        %1388 = vmatpush.xpose.msra.mxu0 0.0
        %1389 = vmatpush.xpose.msra.mxu0 0.0
        %1390 = vmatpush.xpose.msra.mxu0 0.0
        %1391 = vmatpush.xpose.msra.mxu0 %v1381
        %1392 = vmatpush.xpose.msra.mxu0 %v1379
        %1393 = vmatpush.xpose.msra.mxu0 %v1377
        %1394 = vmatpush.xpose.msra.mxu0 %v1375
        %1395 = vmatpush.xpose.msra.mxu0 %v1373
        %1396 = vmatpush.xpose.msra.mxu0 %v1371
        %1397 = vmatpush.xpose.msra.mxu0 %v1369
        %1398 = vmatpush.xpose.msra.mxu0 %v1367
        %1399 = vmatmul.f32.gmra.mxu0 %v1363
        %v1400 = vpop.f32.mrf.mxu0
        %v1401 = vadd.f32 0.0, %v1400
        %1402 = vmatmul.f32.gmra.mxu0 %v1365
        %v1403 = vpop.f32.mrf.mxu0
        %v1404 = vadd.f32 0.0, %v1403
        %1405 = vdwg.mxu0
        %v1406 = vsel %vm1238, %v1401, -inf
        %1407 = vmax.xlane.f32.xlu0 %v1406
        %v1408 = vpop.xlane.xlu0 %1407
        %v1409 = vsel %vm1238, %v1404, -inf
        %1410 = vmax.xlane.f32.xlu0 %v1409
        %v1411 = vpop.xlane.xlu0 %1410
        %v1412 = vsub.f32 %v1401, %v1408
        %v1413 = vsub.f32 %v1404, %v1411
        %v1414 = vmul.f32 %v1412, 1.442695
        %v1415 = vpow.pop %v1414
        %v1416 = vmul.f32 %v1413, 1.442695
        %v1417 = vpow.pop %v1416
        %v1418 = vsel %vm1238, %v1415, 0.0
        %1419 = vadd.xlane.f32.xlu0 %v1418
        %v1420 = vpop.xlane.xlu0 %1419
        %v1421 = vsel %vm1238, %v1417, 0.0
        %1422 = vadd.xlane.f32.xlu0 %v1421
        %v1423 = vpop.xlane.xlu0 %1422
        %v1424 = vrcp.pop %v1420
        %v1425 = vrcp.pop %v1423
        %v1426 = vmul.f32 %v1415, %v1424
        %v1427 = vmul.f32 %v1417, %v1425
        %1436 = vrot.lane.b32.xlu0 %v1199, 64
        %v1437 = vpop.permute.xlu0 %1436
        %1438 = vrot.lane.b32.xlu0 %v1202, 64
        %v1439 = vpop.permute.xlu0 %1438
        %1440 = vrot.lane.b32.xlu0 %v1205, 64
        %v1441 = vpop.permute.xlu0 %1440
        %1442 = vrot.lane.b32.xlu0 %v1208, 64
        %v1443 = vpop.permute.xlu0 %1442
        %1444 = vrot.lane.b32.xlu0 %v1211, 64
        %v1445 = vpop.permute.xlu0 %1444
        %1446 = vrot.lane.b32.xlu0 %v1214, 64
        %v1447 = vpop.permute.xlu0 %1446
        %1448 = vrot.lane.b32.xlu0 %v1217, 64
        %v1449 = vpop.permute.xlu0 %1448
        %1450 = vrot.lane.b32.xlu0 %v1220, 64
        %v1451 = vpop.permute.xlu0 %1450
        %v1461 = vsel %vm1238, %v1426, 0
        %v1464 = vsel %vm1238, %v1427, 0
        %1466 = vmatpush.msra.mxu0 0.0
        %1467 = vmatpush.msra.mxu0 0.0
        %1468 = vmatpush.msra.mxu0 0.0
        %1469 = vmatpush.msra.mxu0 0.0
        %1470 = vmatpush.msra.mxu0 0.0
        %1471 = vmatpush.msra.mxu0 0.0
        %1472 = vmatpush.msra.mxu0 0.0
        %1473 = vmatpush.msra.mxu0 0.0
        %1474 = vmatpush.msra.mxu0 %v1451
        %1475 = vmatpush.msra.mxu0 %v1449
        %1476 = vmatpush.msra.mxu0 %v1447
        %1477 = vmatpush.msra.mxu0 %v1445
        %1478 = vmatpush.msra.mxu0 %v1443
        %1479 = vmatpush.msra.mxu0 %v1441
        %1480 = vmatpush.msra.mxu0 %v1439
        %1481 = vmatpush.msra.mxu0 %v1437
        %1482 = vmatmul.f32.gmra.mxu0 %v1461
        %v1483 = vpop.f32.mrf.mxu0
        %v1484 = vadd.f32 0.0, %v1483
        %1485 = vmatmul.f32.gmra.mxu0 %v1464
        %v1486 = vpop.f32.mrf.mxu0
        %v1487 = vadd.f32 0.0, %v1486
        %1488 = vdwg.mxu0
        %v1490 = vsel %vm1238, %v1484, 0
        %v1493 = vsel %vm1238, %v1487, 0
        %1495 = vmatpush.msra.mxu0 0.0
        %1496 = vmatpush.msra.mxu0 0.0
        %1497 = vmatpush.msra.mxu0 0.0
        %1498 = vmatpush.msra.mxu0 0.0
        %1499 = vmatpush.msra.mxu0 0.0
        %1500 = vmatpush.msra.mxu0 0.0
        %1501 = vmatpush.msra.mxu0 0.0
        %1502 = vmatpush.msra.mxu0 0.0
        %1503 = vmatpush.msra.mxu0 %v1237
        %1504 = vmatpush.msra.mxu0 %v1236
        %1505 = vmatpush.msra.mxu0 %v1235
        %1506 = vmatpush.msra.mxu0 %v1234
        %1507 = vmatpush.msra.mxu0 %v1233
        %1508 = vmatpush.msra.mxu0 %v1232
        %1509 = vmatpush.msra.mxu0 %v1231
        %1510 = vmatpush.msra.mxu0 %v1230
        %1511 = vmatmul.f32.gmra.mxu0 %v1490
        %v1512 = vpop.f32.mrf.mxu0
        %v1513 = vadd.f32 0.0, %v1512
        %1514 = vmatmul.f32.gmra.mxu0 %v1493
        %v1515 = vpop.f32.mrf.mxu0
        %v1516 = vadd.f32 0.0, %v1515
        %1517 = vdwg.mxu0
        %v1519 = vsel %vm1238, %v1338, 0
        %v1522 = vsel %vm1238, %v1341, 0
        %1524 = vmatpush.msra.mxu0 0.0
        %1525 = vmatpush.msra.mxu0 0.0
        %1526 = vmatpush.msra.mxu0 0.0
        %1527 = vmatpush.msra.mxu0 0.0
        %1528 = vmatpush.msra.mxu0 0.0
        %1529 = vmatpush.msra.mxu0 0.0
        %1530 = vmatpush.msra.mxu0 0.0
        %1531 = vmatpush.msra.mxu0 0.0
        %1532 = vmatpush.msra.mxu0 %v1229
        %1533 = vmatpush.msra.mxu0 %v1228
        %1534 = vmatpush.msra.mxu0 %v1227
        %1535 = vmatpush.msra.mxu0 %v1226
        %1536 = vmatpush.msra.mxu0 %v1225
        %1537 = vmatpush.msra.mxu0 %v1224
        %1538 = vmatpush.msra.mxu0 %v1223
        %1539 = vmatpush.msra.mxu0 %v1222
        %1540 = vmatmul.f32.gmra.mxu0 %v1519
        %v1541 = vpop.f32.mrf.mxu0
        %v1542 = vadd.f32 %v1513, %v1541
        %1543 = vmatmul.f32.gmra.mxu0 %v1522
        %v1544 = vpop.f32.mrf.mxu0
        %v1545 = vadd.f32 %v1516, %v1544
        %1546 = vdwg.mxu0
        %v1547 = vld [vmem:[%s11] sm:$0x1]
        %v1549 = vperm.slane %v1547, 0
        %v1551 = vadd.f32 %v1542, %v1549
        %v1552 = vadd.f32 %v1545, %v1549
        %v1553 = vadd.f32 %v1551, %v873
        %v1554 = vadd.f32 %v1552, %v874
        %v1555 = vld [vmem:[%s12] sm:$0x1]
        %v1556 = vld [vmem:[%s13] sm:$0x1]
        %1557 = vadd.xlane.f32.xlu0 %v1553
        %v1558 = vpop.xlane.xlu0 %1557
        %1559 = vadd.xlane.f32.xlu0 %v1554
        %v1560 = vpop.xlane.xlu0 %1559
        %v1561 = vmul.f32 %v1558, %v828
        %v1562 = vmul.f32 %v1560, %v828
        %v1563 = vsub.f32 %v1553, %v1561
        %v1564 = vsub.f32 %v1554, %v1562
        %v1565 = vmul.f32 %v1563, %v1563
        %v1566 = vmul.f32 %v1564, %v1564
        %1567 = vadd.xlane.f32.xlu0 %v1565
        %v1568 = vpop.xlane.xlu0 %1567
        %1569 = vadd.xlane.f32.xlu0 %v1566
        %v1570 = vpop.xlane.xlu0 %1569
        %v1571 = vmul.f32 %v1568, %v828
        %v1572 = vmul.f32 %v1570, %v828
        %v1573 = vadd.f32 %v1571, 1e-05
        %v1574 = vadd.f32 %v1572, 1e-05
        %v1575 = vrsqrt.pop %v1573
        %v1576 = vmul.f32 %v1575, %v1573
        %v1577 = vmul.f32 %v1576, %v1575
        %v1578 = vmul.f32 0.5, %v1577
        %v1579 = vsub.f32 1.5, %v1578
        %v1580 = vmul.f32 %v1575, %v1579
        %vm1581 = vweird.f32 %v1573
        %vm1582 = vweird.f32 %v1575
        %vm1583 = vmor %vm1581, %vm1582
        %v1584 = vsel %vm1583, %v1575, %v1580
        %v1585 = vrsqrt.pop %v1574
        %v1586 = vmul.f32 %v1585, %v1574
        %v1587 = vmul.f32 %v1586, %v1585
        %v1588 = vmul.f32 0.5, %v1587
        %v1589 = vsub.f32 1.5, %v1588
        %v1590 = vmul.f32 %v1585, %v1589
        %vm1591 = vweird.f32 %v1574
        %vm1592 = vweird.f32 %v1585
        %vm1593 = vmor %vm1591, %vm1592
        %v1594 = vsel %vm1593, %v1585, %v1590
        %v1595 = vmul.f32 %v1563, %v1584
        %v1596 = vmul.f32 %v1564, %v1594
        %v1598 = vperm.slane %v1555, 0
        %v1600 = vmul.f32 %v1595, %v1598
        %v1601 = vmul.f32 %v1596, %v1598
        %v1603 = vperm.slane %v1556, 0
        %v1605 = vadd.f32 %v1600, %v1603
        %v1606 = vadd.f32 %v1601, %v1603
        %v1607 = vadd.f32 %v1605, %v1553
        %v1608 = vadd.f32 %v1606, %v1554
        %v1609 = vld [vmem:[%s14] sm:$0xff]
        %v1610 = vld [vmem:[%s14 + $0x8] sm:$0xff]
        %v1611 = vld [vmem:[%s14 + $0x10] sm:$0xff]
        %v1612 = vld [vmem:[%s14 + $0x18] sm:$0xff]
        %v1613 = vld [vmem:[%s14 + $0x20] sm:$0xff]
        %v1614 = vld [vmem:[%s14 + $0x28] sm:$0xff]
        %v1615 = vld [vmem:[%s14 + $0x30] sm:$0xff]
        %v1616 = vld [vmem:[%s14 + $0x38] sm:$0xff]
        %v1617 = vld [vmem:[%s14 + $0x40] sm:$0xff]
        %v1618 = vld [vmem:[%s14 + $0x48] sm:$0xff]
        %v1619 = vld [vmem:[%s14 + $0x50] sm:$0xff]
        %v1620 = vld [vmem:[%s14 + $0x58] sm:$0xff]
        %v1621 = vld [vmem:[%s14 + $0x60] sm:$0xff]
        %v1622 = vld [vmem:[%s14 + $0x68] sm:$0xff]
        %v1623 = vld [vmem:[%s14 + $0x70] sm:$0xff]
        %v1624 = vld [vmem:[%s14 + $0x78] sm:$0xff]
        %v1625 = vld [vmem:[%s15] sm:$0x1]
        %v1627 = vperm.slane %v1625, 0
        %1629 = vmatpush.msra.mxu0 %v1624
        %1630 = vmatpush.msra.mxu0 %v1623
        %1631 = vmatpush.msra.mxu0 %v1622
        %1632 = vmatpush.msra.mxu0 %v1621
        %1633 = vmatpush.msra.mxu0 %v1620
        %1634 = vmatpush.msra.mxu0 %v1619
        %1635 = vmatpush.msra.mxu0 %v1618
        %1636 = vmatpush.msra.mxu0 %v1617
        %1637 = vmatpush.msra.mxu0 %v1616
        %1638 = vmatpush.msra.mxu0 %v1615
        %1639 = vmatpush.msra.mxu0 %v1614
        %1640 = vmatpush.msra.mxu0 %v1613
        %1641 = vmatpush.msra.mxu0 %v1612
        %1642 = vmatpush.msra.mxu0 %v1611
        %1643 = vmatpush.msra.mxu0 %v1610
        %1644 = vmatpush.msra.mxu0 %v1609
        %1645 = vmatmul.f32.gmra.mxu0 %v1607
        %v1646 = vpop.f32.mrf.mxu0
        %v1647 = vadd.f32 %v1627, %v1646
        %1648 = vmatmul.f32.gmra.mxu0 %v1608
        %v1649 = vpop.f32.mrf.mxu0
        %v1650 = vadd.f32 %v1627, %v1649
        %1651 = vdwg.mxu0
        %v1652 = vmul.f32 %v1647, %v1647
        %v1653 = vmul.f32 %v1650, %v1650
        %v1654 = vmul.f32 %v1647, %v1652
        %v1655 = vmul.f32 %v1650, %v1653
        %v1656 = vmul.f32 %v1654, 0.044715
        %v1657 = vmul.f32 %v1655, 0.044715
        %v1658 = vadd.f32 %v1647, %v1656
        %v1659 = vadd.f32 %v1650, %v1657
        %v1660 = vmul.f32 %v1658, 0.7978846
        %v1661 = vmul.f32 %v1659, 0.7978846
        %v1662 = vtanh.pop %v1660
        %v1663 = vtanh.pop %v1661
        %v1664 = vadd.f32 %v1662, 1.0
        %v1665 = vadd.f32 %v1663, 1.0
        %v1666 = vmul.f32 %v1664, 0.5
        %v1667 = vmul.f32 %v1665, 0.5
        %v1668 = vmul.f32 %v1647, %v1666
        %v1669 = vmul.f32 %v1650, %v1667
        %v1670 = vld [vmem:[%s16] sm:$0xff]
        %v1671 = vld [vmem:[%s16 + $0x8] sm:$0xff]
        %v1672 = vld [vmem:[%s16 + $0x10] sm:$0xff]
        %v1673 = vld [vmem:[%s16 + $0x18] sm:$0xff]
        %v1674 = vld [vmem:[%s16 + $0x20] sm:$0xff]
        %v1675 = vld [vmem:[%s16 + $0x28] sm:$0xff]
        %v1676 = vld [vmem:[%s16 + $0x30] sm:$0xff]
        %v1677 = vld [vmem:[%s16 + $0x38] sm:$0xff]
        %v1678 = vld [vmem:[%s16 + $0x40] sm:$0xff]
        %v1679 = vld [vmem:[%s16 + $0x48] sm:$0xff]
        %v1680 = vld [vmem:[%s16 + $0x50] sm:$0xff]
        %v1681 = vld [vmem:[%s16 + $0x58] sm:$0xff]
        %v1682 = vld [vmem:[%s16 + $0x60] sm:$0xff]
        %v1683 = vld [vmem:[%s16 + $0x68] sm:$0xff]
        %v1684 = vld [vmem:[%s16 + $0x70] sm:$0xff]
        %v1685 = vld [vmem:[%s16 + $0x78] sm:$0xff]
        %v1686 = vld [vmem:[%s17] sm:$0x1]
        %v1688 = vperm.slane %v1686, 0
        %1690 = vmatpush.msra.mxu0 %v1685
        %1691 = vmatpush.msra.mxu0 %v1684
        %1692 = vmatpush.msra.mxu0 %v1683
        %1693 = vmatpush.msra.mxu0 %v1682
        %1694 = vmatpush.msra.mxu0 %v1681
        %1695 = vmatpush.msra.mxu0 %v1680
        %1696 = vmatpush.msra.mxu0 %v1679
        %1697 = vmatpush.msra.mxu0 %v1678
        %1698 = vmatpush.msra.mxu0 %v1677
        %1699 = vmatpush.msra.mxu0 %v1676
        %1700 = vmatpush.msra.mxu0 %v1675
        %1701 = vmatpush.msra.mxu0 %v1674
        %1702 = vmatpush.msra.mxu0 %v1673
        %1703 = vmatpush.msra.mxu0 %v1672
        %1704 = vmatpush.msra.mxu0 %v1671
        %1705 = vmatpush.msra.mxu0 %v1670
        %1706 = vmatmul.f32.gmra.mxu0 %v1668
        %v1707 = vpop.f32.mrf.mxu0
        %v1708 = vadd.f32 %v1688, %v1707
        %1709 = vmatmul.f32.gmra.mxu0 %v1669
        %v1710 = vpop.f32.mrf.mxu0
        %v1711 = vadd.f32 %v1688, %v1710
        %1712 = vdwg.mxu0
        %v1713 = vld [vmem:[%s18] sm:$0x1]
        %v1714 = vld [vmem:[%s19] sm:$0x1]
        %1715 = vadd.xlane.f32.xlu0 %v1708
        %v1716 = vpop.xlane.xlu0 %1715
        %1717 = vadd.xlane.f32.xlu0 %v1711
        %v1718 = vpop.xlane.xlu0 %1717
        %v1719 = vmul.f32 %v1716, %v828
        %v1720 = vmul.f32 %v1718, %v828
        %v1721 = vsub.f32 %v1708, %v1719
        %v1722 = vsub.f32 %v1711, %v1720
        %v1723 = vmul.f32 %v1721, %v1721
        %v1724 = vmul.f32 %v1722, %v1722
        %1725 = vadd.xlane.f32.xlu0 %v1723
        %v1726 = vpop.xlane.xlu0 %1725
        %1727 = vadd.xlane.f32.xlu0 %v1724
        %v1728 = vpop.xlane.xlu0 %1727
        %v1729 = vmul.f32 %v1726, %v828
        %v1730 = vmul.f32 %v1728, %v828
        %v1731 = vadd.f32 %v1729, 1e-05
        %v1732 = vadd.f32 %v1730, 1e-05
        %v1733 = vrsqrt.pop %v1731
        %v1734 = vmul.f32 %v1733, %v1731
        %v1735 = vmul.f32 %v1734, %v1733
        %v1736 = vmul.f32 0.5, %v1735
        %v1737 = vsub.f32 1.5, %v1736
        %v1738 = vmul.f32 %v1733, %v1737
        %vm1739 = vweird.f32 %v1731
        %vm1740 = vweird.f32 %v1733
        %vm1741 = vmor %vm1739, %vm1740
        %v1742 = vsel %vm1741, %v1733, %v1738
        %v1743 = vrsqrt.pop %v1732
        %v1744 = vmul.f32 %v1743, %v1732
        %v1745 = vmul.f32 %v1744, %v1743
        %v1746 = vmul.f32 0.5, %v1745
        %v1747 = vsub.f32 1.5, %v1746
        %v1748 = vmul.f32 %v1743, %v1747
        %vm1749 = vweird.f32 %v1732
        %vm1750 = vweird.f32 %v1743
        %vm1751 = vmor %vm1749, %vm1750
        %v1752 = vsel %vm1751, %v1743, %v1748
        %v1753 = vmul.f32 %v1721, %v1742
        %v1754 = vmul.f32 %v1722, %v1752
        %v1756 = vperm.slane %v1713, 0
        %v1758 = vmul.f32 %v1753, %v1756
        %v1759 = vmul.f32 %v1754, %v1756
        %v1761 = vperm.slane %v1714, 0
        %v1763 = vadd.f32 %v1758, %v1761
        %v1764 = vadd.f32 %v1759, %v1761
        %v1765 = vadd.f32 %v1763, %v1607
        %v1766 = vadd.f32 %v1764, %v1608
        %s1767 = scalar_lea.vmem %s8, 128
        %v1768 = vld [vmem:[%s1767] sm:$0xff]
        %v1769 = vld [vmem:[%s1767 + $0x8] sm:$0xff]
        %v1770 = vld [vmem:[%s1767 + $0x10] sm:$0xff]
        %v1771 = vld [vmem:[%s1767 + $0x18] sm:$0xff]
        %v1772 = vld [vmem:[%s1767 + $0x20] sm:$0xff]
        %v1773 = vld [vmem:[%s1767 + $0x28] sm:$0xff]
        %v1774 = vld [vmem:[%s1767 + $0x30] sm:$0xff]
        %v1775 = vld [vmem:[%s1767 + $0x38] sm:$0xff]
        %v1776 = vld [vmem:[%s1767 + $0x40] sm:$0xff]
        %v1777 = vld [vmem:[%s1767 + $0x48] sm:$0xff]
        %v1778 = vld [vmem:[%s1767 + $0x50] sm:$0xff]
        %v1779 = vld [vmem:[%s1767 + $0x58] sm:$0xff]
        %v1780 = vld [vmem:[%s1767 + $0x60] sm:$0xff]
        %v1781 = vld [vmem:[%s1767 + $0x68] sm:$0xff]
        %v1782 = vld [vmem:[%s1767 + $0x70] sm:$0xff]
        %v1783 = vld [vmem:[%s1767 + $0x78] sm:$0xff]
        %1784 = vmatpush.msra.mxu0 %v1783
        %1785 = vmatpush.msra.mxu0 %v1782
        %1786 = vmatpush.msra.mxu0 %v1781
        %1787 = vmatpush.msra.mxu0 %v1780
        %1788 = vmatpush.msra.mxu0 %v1779
        %1789 = vmatpush.msra.mxu0 %v1778
        %1790 = vmatpush.msra.mxu0 %v1777
        %1791 = vmatpush.msra.mxu0 %v1776
        %1792 = vmatpush.msra.mxu0 %v1775
        %1793 = vmatpush.msra.mxu0 %v1774
        %1794 = vmatpush.msra.mxu0 %v1773
        %1795 = vmatpush.msra.mxu0 %v1772
        %1796 = vmatpush.msra.mxu0 %v1771
        %1797 = vmatpush.msra.mxu0 %v1770
        %1798 = vmatpush.msra.mxu0 %v1769
        %1799 = vmatpush.msra.mxu0 %v1768
        %1800 = vmatmul.f32.gmra.mxu0 %v1765
        %v1801 = vpop.f32.mrf.mxu0
        %v1802 = vadd.f32 0.0, %v1801
        %1803 = vmatmul.f32.gmra.mxu0 %v1766
        %v1804 = vpop.f32.mrf.mxu0
        %v1805 = vadd.f32 0.0, %v1804
        %1806 = vdwg.mxu0
        %v1807 = vmul.f32 %v1802, 0.125
        %v1808 = vmul.f32 %v1805, 0.125
        %s1809 = scalar_lea.vmem %s9, 256
        %v1810 = vld [vmem:[%s1809] sm:$0xff]
        %v1811 = vld [vmem:[%s1809 + $0x8] sm:$0xff]
        %v1812 = vld [vmem:[%s1809 + $0x10] sm:$0xff]
        %v1813 = vld [vmem:[%s1809 + $0x18] sm:$0xff]
        %v1814 = vld [vmem:[%s1809 + $0x20] sm:$0xff]
        %v1815 = vld [vmem:[%s1809 + $0x28] sm:$0xff]
        %v1816 = vld [vmem:[%s1809 + $0x30] sm:$0xff]
        %v1817 = vld [vmem:[%s1809 + $0x38] sm:$0xff]
        %v1818 = vld [vmem:[%s1809 + $0x40] sm:$0xff]
        %v1819 = vld [vmem:[%s1809 + $0x48] sm:$0xff]
        %v1820 = vld [vmem:[%s1809 + $0x50] sm:$0xff]
        %v1821 = vld [vmem:[%s1809 + $0x58] sm:$0xff]
        %v1822 = vld [vmem:[%s1809 + $0x60] sm:$0xff]
        %v1823 = vld [vmem:[%s1809 + $0x68] sm:$0xff]
        %v1824 = vld [vmem:[%s1809 + $0x70] sm:$0xff]
        %v1825 = vld [vmem:[%s1809 + $0x78] sm:$0xff]
        %v1826 = vld [vmem:[%s1809 + $0x80] sm:$0xff]
        %v1827 = vld [vmem:[%s1809 + $0x88] sm:$0xff]
        %v1828 = vld [vmem:[%s1809 + $0x90] sm:$0xff]
        %v1829 = vld [vmem:[%s1809 + $0x98] sm:$0xff]
        %v1830 = vld [vmem:[%s1809 + $0xa0] sm:$0xff]
        %v1831 = vld [vmem:[%s1809 + $0xa8] sm:$0xff]
        %v1832 = vld [vmem:[%s1809 + $0xb0] sm:$0xff]
        %v1833 = vld [vmem:[%s1809 + $0xb8] sm:$0xff]
        %v1834 = vld [vmem:[%s1809 + $0xc0] sm:$0xff]
        %v1835 = vld [vmem:[%s1809 + $0xc8] sm:$0xff]
        %v1836 = vld [vmem:[%s1809 + $0xd0] sm:$0xff]
        %v1837 = vld [vmem:[%s1809 + $0xd8] sm:$0xff]
        %v1838 = vld [vmem:[%s1809 + $0xe0] sm:$0xff]
        %v1839 = vld [vmem:[%s1809 + $0xe8] sm:$0xff]
        %v1840 = vld [vmem:[%s1809 + $0xf0] sm:$0xff]
        %v1841 = vld [vmem:[%s1809 + $0xf8] sm:$0xff]
        %1842 = vmatpush.msra.mxu0 %v1840
        %1843 = vmatpush.msra.mxu0 %v1838
        %1844 = vmatpush.msra.mxu0 %v1836
        %1845 = vmatpush.msra.mxu0 %v1834
        %1846 = vmatpush.msra.mxu0 %v1832
        %1847 = vmatpush.msra.mxu0 %v1830
        %1848 = vmatpush.msra.mxu0 %v1828
        %1849 = vmatpush.msra.mxu0 %v1826
        %1850 = vmatpush.msra.mxu0 %v1824
        %1851 = vmatpush.msra.mxu0 %v1822
        %1852 = vmatpush.msra.mxu0 %v1820
        %1853 = vmatpush.msra.mxu0 %v1818
        %1854 = vmatpush.msra.mxu0 %v1816
        %1855 = vmatpush.msra.mxu0 %v1814
        %1856 = vmatpush.msra.mxu0 %v1812
        %1857 = vmatpush.msra.mxu0 %v1810
        %1858 = vmatmul.f32.gmra.mxu0 %v1059
        %v1859 = vpop.f32.mrf.mxu0
        %v1860 = vadd.f32 0.0, %v1859
        %1861 = vmatmul.f32.gmra.mxu0 %v1060
        %v1862 = vpop.f32.mrf.mxu0
        %v1863 = vadd.f32 0.0, %v1862
        %1864 = vmatmul.f32.gmra.mxu0 %v1061
        %v1865 = vpop.f32.mrf.mxu0
        %v1866 = vadd.f32 0.0, %v1865
        %1867 = vmatmul.f32.gmra.mxu0 %v1062
        %v1868 = vpop.f32.mrf.mxu0
        %v1869 = vadd.f32 0.0, %v1868
        %1870 = vmatmul.f32.gmra.mxu0 %v1063
        %v1871 = vpop.f32.mrf.mxu0
        %v1872 = vadd.f32 0.0, %v1871
        %1873 = vmatmul.f32.gmra.mxu0 %v1064
        %v1874 = vpop.f32.mrf.mxu0
        %v1875 = vadd.f32 0.0, %v1874
        %1876 = vmatmul.f32.gmra.mxu0 %v1065
        %v1877 = vpop.f32.mrf.mxu0
        %v1878 = vadd.f32 0.0, %v1877
        %1879 = vmatmul.f32.gmra.mxu0 %v1066
        %v1880 = vpop.f32.mrf.mxu0
        %v1881 = vadd.f32 0.0, %v1880
        %1882 = vdwg.mxu0
        %1883 = vmatpush.msra.mxu0 %v1841
        %1884 = vmatpush.msra.mxu0 %v1839
        %1885 = vmatpush.msra.mxu0 %v1837
        %1886 = vmatpush.msra.mxu0 %v1835
        %1887 = vmatpush.msra.mxu0 %v1833
        %1888 = vmatpush.msra.mxu0 %v1831
        %1889 = vmatpush.msra.mxu0 %v1829
        %1890 = vmatpush.msra.mxu0 %v1827
        %1891 = vmatpush.msra.mxu0 %v1825
        %1892 = vmatpush.msra.mxu0 %v1823
        %1893 = vmatpush.msra.mxu0 %v1821
        %1894 = vmatpush.msra.mxu0 %v1819
        %1895 = vmatpush.msra.mxu0 %v1817
        %1896 = vmatpush.msra.mxu0 %v1815
        %1897 = vmatpush.msra.mxu0 %v1813
        %1898 = vmatpush.msra.mxu0 %v1811
        %1899 = vmatmul.f32.gmra.mxu0 %v1059
        %v1900 = vpop.f32.mrf.mxu0
        %v1901 = vadd.f32 0.0, %v1900
        %1902 = vmatmul.f32.gmra.mxu0 %v1060
        %v1903 = vpop.f32.mrf.mxu0
        %v1904 = vadd.f32 0.0, %v1903
        %1905 = vmatmul.f32.gmra.mxu0 %v1061
        %v1906 = vpop.f32.mrf.mxu0
        %v1907 = vadd.f32 0.0, %v1906
        %1908 = vmatmul.f32.gmra.mxu0 %v1062
        %v1909 = vpop.f32.mrf.mxu0
        %v1910 = vadd.f32 0.0, %v1909
        %1911 = vmatmul.f32.gmra.mxu0 %v1063
        %v1912 = vpop.f32.mrf.mxu0
        %v1913 = vadd.f32 0.0, %v1912
        %1914 = vmatmul.f32.gmra.mxu0 %v1064
        %v1915 = vpop.f32.mrf.mxu0
        %v1916 = vadd.f32 0.0, %v1915
        %1917 = vmatmul.f32.gmra.mxu0 %v1065
        %v1918 = vpop.f32.mrf.mxu0
        %v1919 = vadd.f32 0.0, %v1918
        %1920 = vmatmul.f32.gmra.mxu0 %v1066
        %v1921 = vpop.f32.mrf.mxu0
        %v1922 = vadd.f32 0.0, %v1921
        %1923 = vdwg.mxu0
        %s1924 = scalar_lea.vmem %s10, 128
        %v1925 = vld [vmem:[%s1924] sm:$0xff]
        %v1926 = vld [vmem:[%s1924 + $0x8] sm:$0xff]
        %v1927 = vld [vmem:[%s1924 + $0x10] sm:$0xff]
        %v1928 = vld [vmem:[%s1924 + $0x18] sm:$0xff]
        %v1929 = vld [vmem:[%s1924 + $0x20] sm:$0xff]
        %v1930 = vld [vmem:[%s1924 + $0x28] sm:$0xff]
        %v1931 = vld [vmem:[%s1924 + $0x30] sm:$0xff]
        %v1932 = vld [vmem:[%s1924 + $0x38] sm:$0xff]
        %v1933 = vld [vmem:[%s1924 + $0x40] sm:$0xff]
        %v1934 = vld [vmem:[%s1924 + $0x48] sm:$0xff]
        %v1935 = vld [vmem:[%s1924 + $0x50] sm:$0xff]
        %v1936 = vld [vmem:[%s1924 + $0x58] sm:$0xff]
        %v1937 = vld [vmem:[%s1924 + $0x60] sm:$0xff]
        %v1938 = vld [vmem:[%s1924 + $0x68] sm:$0xff]
        %v1939 = vld [vmem:[%s1924 + $0x70] sm:$0xff]
        %v1940 = vld [vmem:[%s1924 + $0x78] sm:$0xff]
        %v1942 = vsel %vm1238, %v1807, 0
        %v1945 = vsel %vm1238, %v1808, 0
        %v1948 = vsel %vm1238, %v1860, 0
        %v1951 = vsel %vm1238, %v1863, 0
        %v1954 = vsel %vm1238, %v1866, 0
        %v1957 = vsel %vm1238, %v1869, 0
        %v1960 = vsel %vm1238, %v1872, 0
        %v1963 = vsel %vm1238, %v1875, 0
        %v1966 = vsel %vm1238, %v1878, 0
        %v1969 = vsel %vm1238, %v1881, 0
        %1971 = vmatpush.xpose.msra.mxu0 0.0
        %1972 = vmatpush.xpose.msra.mxu0 0.0
        %1973 = vmatpush.xpose.msra.mxu0 0.0
        %1974 = vmatpush.xpose.msra.mxu0 0.0
        %1975 = vmatpush.xpose.msra.mxu0 0.0
        %1976 = vmatpush.xpose.msra.mxu0 0.0
        %1977 = vmatpush.xpose.msra.mxu0 0.0
        %1978 = vmatpush.xpose.msra.mxu0 0.0
        %1979 = vmatpush.xpose.msra.mxu0 %v1969
        %1980 = vmatpush.xpose.msra.mxu0 %v1966
        %1981 = vmatpush.xpose.msra.mxu0 %v1963
        %1982 = vmatpush.xpose.msra.mxu0 %v1960
        %1983 = vmatpush.xpose.msra.mxu0 %v1957
        %1984 = vmatpush.xpose.msra.mxu0 %v1954
        %1985 = vmatpush.xpose.msra.mxu0 %v1951
        %1986 = vmatpush.xpose.msra.mxu0 %v1948
        %1987 = vmatmul.f32.gmra.mxu0 %v1942
        %v1988 = vpop.f32.mrf.mxu0
        %v1989 = vadd.f32 0.0, %v1988
        %1990 = vmatmul.f32.gmra.mxu0 %v1945
        %v1991 = vpop.f32.mrf.mxu0
        %v1992 = vadd.f32 0.0, %v1991
        %1993 = vdwg.mxu0
        %v1994 = vsel %vm1238, %v1989, -inf
        %1995 = vmax.xlane.f32.xlu0 %v1994
        %v1996 = vpop.xlane.xlu0 %1995
        %v1997 = vsel %vm1238, %v1992, -inf
        %1998 = vmax.xlane.f32.xlu0 %v1997
        %v1999 = vpop.xlane.xlu0 %1998
        %v2000 = vsub.f32 %v1989, %v1996
        %v2001 = vsub.f32 %v1992, %v1999
        %v2002 = vmul.f32 %v2000, 1.442695
        %v2003 = vpow.pop %v2002
        %v2004 = vmul.f32 %v2001, 1.442695
        %v2005 = vpow.pop %v2004
        %v2006 = vsel %vm1238, %v2003, 0.0
        %2007 = vadd.xlane.f32.xlu0 %v2006
        %v2008 = vpop.xlane.xlu0 %2007
        %v2009 = vsel %vm1238, %v2005, 0.0
        %2010 = vadd.xlane.f32.xlu0 %v2009
        %v2011 = vpop.xlane.xlu0 %2010
        %v2012 = vrcp.pop %v2008
        %v2013 = vrcp.pop %v2011
        %v2014 = vmul.f32 %v2003, %v2012
        %v2015 = vmul.f32 %v2005, %v2013
        %v2017 = vsel %vm1238, %v2014, 0
        %v2020 = vsel %vm1238, %v2015, 0
        %2022 = vmatpush.msra.mxu0 0.0
        %2023 = vmatpush.msra.mxu0 0.0
        %2024 = vmatpush.msra.mxu0 0.0
        %2025 = vmatpush.msra.mxu0 0.0
        %2026 = vmatpush.msra.mxu0 0.0
        %2027 = vmatpush.msra.mxu0 0.0
        %2028 = vmatpush.msra.mxu0 0.0
        %2029 = vmatpush.msra.mxu0 0.0
        %2030 = vmatpush.msra.mxu0 %v1922
        %2031 = vmatpush.msra.mxu0 %v1919
        %2032 = vmatpush.msra.mxu0 %v1916
        %2033 = vmatpush.msra.mxu0 %v1913
        %2034 = vmatpush.msra.mxu0 %v1910
        %2035 = vmatpush.msra.mxu0 %v1907
        %2036 = vmatpush.msra.mxu0 %v1904
        %2037 = vmatpush.msra.mxu0 %v1901
        %2038 = vmatmul.f32.gmra.mxu0 %v2017
        %v2039 = vpop.f32.mrf.mxu0
        %v2040 = vadd.f32 0.0, %v2039
        %2041 = vmatmul.f32.gmra.mxu0 %v2020
        %v2042 = vpop.f32.mrf.mxu0
        %v2043 = vadd.f32 0.0, %v2042
        %2044 = vdwg.mxu0
        %2045 = vrot.lane.b32.xlu0 %v1807, 64
        %v2046 = vpop.permute.xlu0 %2045
        %2047 = vrot.lane.b32.xlu0 %v1808, 64
        %v2048 = vpop.permute.xlu0 %2047
        %2049 = vrot.lane.b32.xlu0 %v1860, 64
        %v2050 = vpop.permute.xlu0 %2049
        %2051 = vrot.lane.b32.xlu0 %v1863, 64
        %v2052 = vpop.permute.xlu0 %2051
        %2053 = vrot.lane.b32.xlu0 %v1866, 64
        %v2054 = vpop.permute.xlu0 %2053
        %2055 = vrot.lane.b32.xlu0 %v1869, 64
        %v2056 = vpop.permute.xlu0 %2055
        %2057 = vrot.lane.b32.xlu0 %v1872, 64
        %v2058 = vpop.permute.xlu0 %2057
        %2059 = vrot.lane.b32.xlu0 %v1875, 64
        %v2060 = vpop.permute.xlu0 %2059
        %2061 = vrot.lane.b32.xlu0 %v1878, 64
        %v2062 = vpop.permute.xlu0 %2061
        %2063 = vrot.lane.b32.xlu0 %v1881, 64
        %v2064 = vpop.permute.xlu0 %2063
        %v2065 = vsel %vm1238, %v2046, 0
        %v2067 = vsel %vm1238, %v2048, 0
        %v2069 = vsel %vm1238, %v2050, 0
        %v2071 = vsel %vm1238, %v2052, 0
        %v2073 = vsel %vm1238, %v2054, 0
        %v2075 = vsel %vm1238, %v2056, 0
        %v2077 = vsel %vm1238, %v2058, 0
        %v2079 = vsel %vm1238, %v2060, 0
        %v2081 = vsel %vm1238, %v2062, 0
        %v2083 = vsel %vm1238, %v2064, 0
        %2085 = vmatpush.xpose.msra.mxu0 0.0
        %2086 = vmatpush.xpose.msra.mxu0 0.0
        %2087 = vmatpush.xpose.msra.mxu0 0.0
        %2088 = vmatpush.xpose.msra.mxu0 0.0
        %2089 = vmatpush.xpose.msra.mxu0 0.0
        %2090 = vmatpush.xpose.msra.mxu0 0.0
        %2091 = vmatpush.xpose.msra.mxu0 0.0
        %2092 = vmatpush.xpose.msra.mxu0 0.0
        %2093 = vmatpush.xpose.msra.mxu0 %v2083
        %2094 = vmatpush.xpose.msra.mxu0 %v2081
        %2095 = vmatpush.xpose.msra.mxu0 %v2079
        %2096 = vmatpush.xpose.msra.mxu0 %v2077
        %2097 = vmatpush.xpose.msra.mxu0 %v2075
        %2098 = vmatpush.xpose.msra.mxu0 %v2073
        %2099 = vmatpush.xpose.msra.mxu0 %v2071
        %2100 = vmatpush.xpose.msra.mxu0 %v2069
        %2101 = vmatmul.f32.gmra.mxu0 %v2065
        %v2102 = vpop.f32.mrf.mxu0
        %v2103 = vadd.f32 0.0, %v2102
        %2104 = vmatmul.f32.gmra.mxu0 %v2067
        %v2105 = vpop.f32.mrf.mxu0
        %v2106 = vadd.f32 0.0, %v2105
        %2107 = vdwg.mxu0
        %v2108 = vsel %vm1238, %v2103, -inf
        %2109 = vmax.xlane.f32.xlu0 %v2108
        %v2110 = vpop.xlane.xlu0 %2109
        %v2111 = vsel %vm1238, %v2106, -inf
        %2112 = vmax.xlane.f32.xlu0 %v2111
        %v2113 = vpop.xlane.xlu0 %2112
        %v2114 = vsub.f32 %v2103, %v2110
        %v2115 = vsub.f32 %v2106, %v2113
        %v2116 = vmul.f32 %v2114, 1.442695
        %v2117 = vpow.pop %v2116
        %v2118 = vmul.f32 %v2115, 1.442695
        %v2119 = vpow.pop %v2118
        %v2120 = vsel %vm1238, %v2117, 0.0
        %2121 = vadd.xlane.f32.xlu0 %v2120
        %v2122 = vpop.xlane.xlu0 %2121
        %v2123 = vsel %vm1238, %v2119, 0.0
        %2124 = vadd.xlane.f32.xlu0 %v2123
        %v2125 = vpop.xlane.xlu0 %2124
        %v2126 = vrcp.pop %v2122
        %v2127 = vrcp.pop %v2125
        %v2128 = vmul.f32 %v2117, %v2126
        %v2129 = vmul.f32 %v2119, %v2127
        %2138 = vrot.lane.b32.xlu0 %v1901, 64
        %v2139 = vpop.permute.xlu0 %2138
        %2140 = vrot.lane.b32.xlu0 %v1904, 64
        %v2141 = vpop.permute.xlu0 %2140
        %2142 = vrot.lane.b32.xlu0 %v1907, 64
        %v2143 = vpop.permute.xlu0 %2142
        %2144 = vrot.lane.b32.xlu0 %v1910, 64
        %v2145 = vpop.permute.xlu0 %2144
        %2146 = vrot.lane.b32.xlu0 %v1913, 64
        %v2147 = vpop.permute.xlu0 %2146
        %2148 = vrot.lane.b32.xlu0 %v1916, 64
        %v2149 = vpop.permute.xlu0 %2148
        %2150 = vrot.lane.b32.xlu0 %v1919, 64
        %v2151 = vpop.permute.xlu0 %2150
        %2152 = vrot.lane.b32.xlu0 %v1922, 64
        %v2153 = vpop.permute.xlu0 %2152
        %v2163 = vsel %vm1238, %v2128, 0
        %v2166 = vsel %vm1238, %v2129, 0
        %2168 = vmatpush.msra.mxu0 0.0
        %2169 = vmatpush.msra.mxu0 0.0
        %2170 = vmatpush.msra.mxu0 0.0
        %2171 = vmatpush.msra.mxu0 0.0
        %2172 = vmatpush.msra.mxu0 0.0
        %2173 = vmatpush.msra.mxu0 0.0
        %2174 = vmatpush.msra.mxu0 0.0
        %2175 = vmatpush.msra.mxu0 0.0
        %2176 = vmatpush.msra.mxu0 %v2153
        %2177 = vmatpush.msra.mxu0 %v2151
        %2178 = vmatpush.msra.mxu0 %v2149
        %2179 = vmatpush.msra.mxu0 %v2147
        %2180 = vmatpush.msra.mxu0 %v2145
        %2181 = vmatpush.msra.mxu0 %v2143
        %2182 = vmatpush.msra.mxu0 %v2141
        %2183 = vmatpush.msra.mxu0 %v2139
        %2184 = vmatmul.f32.gmra.mxu0 %v2163
        %v2185 = vpop.f32.mrf.mxu0
        %v2186 = vadd.f32 0.0, %v2185
        %2187 = vmatmul.f32.gmra.mxu0 %v2166
        %v2188 = vpop.f32.mrf.mxu0
        %v2189 = vadd.f32 0.0, %v2188
        %2190 = vdwg.mxu0
        %v2192 = vsel %vm1238, %v2186, 0
        %v2195 = vsel %vm1238, %v2189, 0
        %2197 = vmatpush.msra.mxu0 0.0
        %2198 = vmatpush.msra.mxu0 0.0
        %2199 = vmatpush.msra.mxu0 0.0
        %2200 = vmatpush.msra.mxu0 0.0
        %2201 = vmatpush.msra.mxu0 0.0
        %2202 = vmatpush.msra.mxu0 0.0
        %2203 = vmatpush.msra.mxu0 0.0
        %2204 = vmatpush.msra.mxu0 0.0
        %2205 = vmatpush.msra.mxu0 %v1940
        %2206 = vmatpush.msra.mxu0 %v1939
        %2207 = vmatpush.msra.mxu0 %v1938
        %2208 = vmatpush.msra.mxu0 %v1937
        %2209 = vmatpush.msra.mxu0 %v1936
        %2210 = vmatpush.msra.mxu0 %v1935
        %2211 = vmatpush.msra.mxu0 %v1934
        %2212 = vmatpush.msra.mxu0 %v1933
        %2213 = vmatmul.f32.gmra.mxu0 %v2192
        %v2214 = vpop.f32.mrf.mxu0
        %v2215 = vadd.f32 0.0, %v2214
        %2216 = vmatmul.f32.gmra.mxu0 %v2195
        %v2217 = vpop.f32.mrf.mxu0
        %v2218 = vadd.f32 0.0, %v2217
        %2219 = vdwg.mxu0
        %v2221 = vsel %vm1238, %v2040, 0
        %v2224 = vsel %vm1238, %v2043, 0
        %2226 = vmatpush.msra.mxu0 0.0
        %2227 = vmatpush.msra.mxu0 0.0
        %2228 = vmatpush.msra.mxu0 0.0
        %2229 = vmatpush.msra.mxu0 0.0
        %2230 = vmatpush.msra.mxu0 0.0
        %2231 = vmatpush.msra.mxu0 0.0
        %2232 = vmatpush.msra.mxu0 0.0
        %2233 = vmatpush.msra.mxu0 0.0
        %2234 = vmatpush.msra.mxu0 %v1932
        %2235 = vmatpush.msra.mxu0 %v1931
        %2236 = vmatpush.msra.mxu0 %v1930
        %2237 = vmatpush.msra.mxu0 %v1929
        %2238 = vmatpush.msra.mxu0 %v1928
        %2239 = vmatpush.msra.mxu0 %v1927
        %2240 = vmatpush.msra.mxu0 %v1926
        %2241 = vmatpush.msra.mxu0 %v1925
        %2242 = vmatmul.f32.gmra.mxu0 %v2221
        %v2243 = vpop.f32.mrf.mxu0
        %v2244 = vadd.f32 %v2215, %v2243
        %2245 = vmatmul.f32.gmra.mxu0 %v2224
        %v2246 = vpop.f32.mrf.mxu0
        %v2247 = vadd.f32 %v2218, %v2246
        %2248 = vdwg.mxu0
        %s2249 = scalar_lea.vmem %s11, 1
        %v2250 = vld [vmem:[%s2249] sm:$0x1]
        %v2252 = vperm.slane %v2250, 0
        %v2254 = vadd.f32 %v2244, %v2252
        %v2255 = vadd.f32 %v2247, %v2252
        %v2256 = vadd.f32 %v2254, %v1765
        %v2257 = vadd.f32 %v2255, %v1766
        %s2258 = scalar_lea.vmem %s12, 1
        %v2259 = vld [vmem:[%s2258] sm:$0x1]
        %s2260 = scalar_lea.vmem %s13, 1
        %v2261 = vld [vmem:[%s2260] sm:$0x1]
        %2262 = vadd.xlane.f32.xlu0 %v2256
        %v2263 = vpop.xlane.xlu0 %2262
        %2264 = vadd.xlane.f32.xlu0 %v2257
        %v2265 = vpop.xlane.xlu0 %2264
        %v2266 = vmul.f32 %v2263, %v828
        %v2267 = vmul.f32 %v2265, %v828
        %v2268 = vsub.f32 %v2256, %v2266
        %v2269 = vsub.f32 %v2257, %v2267
        %v2270 = vmul.f32 %v2268, %v2268
        %v2271 = vmul.f32 %v2269, %v2269
        %2272 = vadd.xlane.f32.xlu0 %v2270
        %v2273 = vpop.xlane.xlu0 %2272
        %2274 = vadd.xlane.f32.xlu0 %v2271
        %v2275 = vpop.xlane.xlu0 %2274
        %v2276 = vmul.f32 %v2273, %v828
        %v2277 = vmul.f32 %v2275, %v828
        %v2278 = vadd.f32 %v2276, 1e-05
        %v2279 = vadd.f32 %v2277, 1e-05
        %v2280 = vrsqrt.pop %v2278
        %v2281 = vmul.f32 %v2280, %v2278
        %v2282 = vmul.f32 %v2281, %v2280
        %v2283 = vmul.f32 0.5, %v2282
        %v2284 = vsub.f32 1.5, %v2283
        %v2285 = vmul.f32 %v2280, %v2284
        %vm2286 = vweird.f32 %v2278
        %vm2287 = vweird.f32 %v2280
        %vm2288 = vmor %vm2286, %vm2287
        %v2289 = vsel %vm2288, %v2280, %v2285
        %v2290 = vrsqrt.pop %v2279
        %v2291 = vmul.f32 %v2290, %v2279
        %v2292 = vmul.f32 %v2291, %v2290
        %v2293 = vmul.f32 0.5, %v2292
        %v2294 = vsub.f32 1.5, %v2293
        %v2295 = vmul.f32 %v2290, %v2294
        %vm2296 = vweird.f32 %v2279
        %vm2297 = vweird.f32 %v2290
        %vm2298 = vmor %vm2296, %vm2297
        %v2299 = vsel %vm2298, %v2290, %v2295
        %v2300 = vmul.f32 %v2268, %v2289
        %v2301 = vmul.f32 %v2269, %v2299
        %v2303 = vperm.slane %v2259, 0
        %v2305 = vmul.f32 %v2300, %v2303
        %v2306 = vmul.f32 %v2301, %v2303
        %v2308 = vperm.slane %v2261, 0
        %v2310 = vadd.f32 %v2305, %v2308
        %v2311 = vadd.f32 %v2306, %v2308
        %v2312 = vadd.f32 %v2310, %v2256
        %v2313 = vadd.f32 %v2311, %v2257
        %s2314 = scalar_lea.vmem %s14, 128
        %v2315 = vld [vmem:[%s2314] sm:$0xff]
        %v2316 = vld [vmem:[%s2314 + $0x8] sm:$0xff]
        %v2317 = vld [vmem:[%s2314 + $0x10] sm:$0xff]
        %v2318 = vld [vmem:[%s2314 + $0x18] sm:$0xff]
        %v2319 = vld [vmem:[%s2314 + $0x20] sm:$0xff]
        %v2320 = vld [vmem:[%s2314 + $0x28] sm:$0xff]
        %v2321 = vld [vmem:[%s2314 + $0x30] sm:$0xff]
        %v2322 = vld [vmem:[%s2314 + $0x38] sm:$0xff]
        %v2323 = vld [vmem:[%s2314 + $0x40] sm:$0xff]
        %v2324 = vld [vmem:[%s2314 + $0x48] sm:$0xff]
        %v2325 = vld [vmem:[%s2314 + $0x50] sm:$0xff]
        %v2326 = vld [vmem:[%s2314 + $0x58] sm:$0xff]
        %v2327 = vld [vmem:[%s2314 + $0x60] sm:$0xff]
        %v2328 = vld [vmem:[%s2314 + $0x68] sm:$0xff]
        %v2329 = vld [vmem:[%s2314 + $0x70] sm:$0xff]
        %v2330 = vld [vmem:[%s2314 + $0x78] sm:$0xff]
        %s2331 = scalar_lea.vmem %s15, 1
        %v2332 = vld [vmem:[%s2331] sm:$0x1]
        %v2334 = vperm.slane %v2332, 0
        %2336 = vmatpush.msra.mxu0 %v2330
        %2337 = vmatpush.msra.mxu0 %v2329
        %2338 = vmatpush.msra.mxu0 %v2328
        %2339 = vmatpush.msra.mxu0 %v2327
        %2340 = vmatpush.msra.mxu0 %v2326
        %2341 = vmatpush.msra.mxu0 %v2325
        %2342 = vmatpush.msra.mxu0 %v2324
        %2343 = vmatpush.msra.mxu0 %v2323
        %2344 = vmatpush.msra.mxu0 %v2322
        %2345 = vmatpush.msra.mxu0 %v2321
        %2346 = vmatpush.msra.mxu0 %v2320
        %2347 = vmatpush.msra.mxu0 %v2319
        %2348 = vmatpush.msra.mxu0 %v2318
        %2349 = vmatpush.msra.mxu0 %v2317
        %2350 = vmatpush.msra.mxu0 %v2316
        %2351 = vmatpush.msra.mxu0 %v2315
        %2352 = vmatmul.f32.gmra.mxu0 %v2312
        %v2353 = vpop.f32.mrf.mxu0
        %v2354 = vadd.f32 %v2334, %v2353
        %2355 = vmatmul.f32.gmra.mxu0 %v2313
        %v2356 = vpop.f32.mrf.mxu0
        %v2357 = vadd.f32 %v2334, %v2356
        %2358 = vdwg.mxu0
        %v2359 = vmul.f32 %v2354, %v2354
        %v2360 = vmul.f32 %v2357, %v2357
        %v2361 = vmul.f32 %v2354, %v2359
        %v2362 = vmul.f32 %v2357, %v2360
        %v2363 = vmul.f32 %v2361, 0.044715
        %v2364 = vmul.f32 %v2362, 0.044715
        %v2365 = vadd.f32 %v2354, %v2363
        %v2366 = vadd.f32 %v2357, %v2364
        %v2367 = vmul.f32 %v2365, 0.7978846
        %v2368 = vmul.f32 %v2366, 0.7978846
        %v2369 = vtanh.pop %v2367
        %v2370 = vtanh.pop %v2368
        %v2371 = vadd.f32 %v2369, 1.0
        %v2372 = vadd.f32 %v2370, 1.0
        %v2373 = vmul.f32 %v2371, 0.5
        %v2374 = vmul.f32 %v2372, 0.5
        %v2375 = vmul.f32 %v2354, %v2373
        %v2376 = vmul.f32 %v2357, %v2374
        %s2377 = scalar_lea.vmem %s16, 128
        %v2378 = vld [vmem:[%s2377] sm:$0xff]
        %v2379 = vld [vmem:[%s2377 + $0x8] sm:$0xff]
        %v2380 = vld [vmem:[%s2377 + $0x10] sm:$0xff]
        %v2381 = vld [vmem:[%s2377 + $0x18] sm:$0xff]
        %v2382 = vld [vmem:[%s2377 + $0x20] sm:$0xff]
        %v2383 = vld [vmem:[%s2377 + $0x28] sm:$0xff]
        %v2384 = vld [vmem:[%s2377 + $0x30] sm:$0xff]
        %v2385 = vld [vmem:[%s2377 + $0x38] sm:$0xff]
        %v2386 = vld [vmem:[%s2377 + $0x40] sm:$0xff]
        %v2387 = vld [vmem:[%s2377 + $0x48] sm:$0xff]
        %v2388 = vld [vmem:[%s2377 + $0x50] sm:$0xff]
        %v2389 = vld [vmem:[%s2377 + $0x58] sm:$0xff]
        %v2390 = vld [vmem:[%s2377 + $0x60] sm:$0xff]
        %v2391 = vld [vmem:[%s2377 + $0x68] sm:$0xff]
        %v2392 = vld [vmem:[%s2377 + $0x70] sm:$0xff]
        %v2393 = vld [vmem:[%s2377 + $0x78] sm:$0xff]
        %s2394 = scalar_lea.vmem %s17, 1
        %v2395 = vld [vmem:[%s2394] sm:$0x1]
        %v2397 = vperm.slane %v2395, 0
        %2399 = vmatpush.msra.mxu0 %v2393
        %2400 = vmatpush.msra.mxu0 %v2392
        %2401 = vmatpush.msra.mxu0 %v2391
        %2402 = vmatpush.msra.mxu0 %v2390
        %2403 = vmatpush.msra.mxu0 %v2389
        %2404 = vmatpush.msra.mxu0 %v2388
        %2405 = vmatpush.msra.mxu0 %v2387
        %2406 = vmatpush.msra.mxu0 %v2386
        %2407 = vmatpush.msra.mxu0 %v2385
        %2408 = vmatpush.msra.mxu0 %v2384
        %2409 = vmatpush.msra.mxu0 %v2383
        %2410 = vmatpush.msra.mxu0 %v2382
        %2411 = vmatpush.msra.mxu0 %v2381
        %2412 = vmatpush.msra.mxu0 %v2380
        %2413 = vmatpush.msra.mxu0 %v2379
        %2414 = vmatpush.msra.mxu0 %v2378
        %2415 = vmatmul.f32.gmra.mxu0 %v2375
        %v2416 = vpop.f32.mrf.mxu0
        %v2417 = vadd.f32 %v2397, %v2416
        %2418 = vmatmul.f32.gmra.mxu0 %v2376
        %v2419 = vpop.f32.mrf.mxu0
        %v2420 = vadd.f32 %v2397, %v2419
        %2421 = vdwg.mxu0
        %s2422 = scalar_lea.vmem %s18, 1
        %v2423 = vld [vmem:[%s2422] sm:$0x1]
        %s2424 = scalar_lea.vmem %s19, 1
        %v2425 = vld [vmem:[%s2424] sm:$0x1]
        %2426 = vadd.xlane.f32.xlu0 %v2417
        %v2427 = vpop.xlane.xlu0 %2426
        %2428 = vadd.xlane.f32.xlu0 %v2420
        %v2429 = vpop.xlane.xlu0 %2428
        %v2430 = vmul.f32 %v2427, %v828
        %v2431 = vmul.f32 %v2429, %v828
        %v2432 = vsub.f32 %v2417, %v2430
        %v2433 = vsub.f32 %v2420, %v2431
        %v2434 = vmul.f32 %v2432, %v2432
        %v2435 = vmul.f32 %v2433, %v2433
        %2436 = vadd.xlane.f32.xlu0 %v2434
        %v2437 = vpop.xlane.xlu0 %2436
        %2438 = vadd.xlane.f32.xlu0 %v2435
        %v2439 = vpop.xlane.xlu0 %2438
        %v2440 = vmul.f32 %v2437, %v828
        %v2441 = vmul.f32 %v2439, %v828
        %v2442 = vadd.f32 %v2440, 1e-05
        %v2443 = vadd.f32 %v2441, 1e-05
        %v2444 = vrsqrt.pop %v2442
        %v2445 = vmul.f32 %v2444, %v2442
        %v2446 = vmul.f32 %v2445, %v2444
        %v2447 = vmul.f32 0.5, %v2446
        %v2448 = vsub.f32 1.5, %v2447
        %v2449 = vmul.f32 %v2444, %v2448
        %vm2450 = vweird.f32 %v2442
        %vm2451 = vweird.f32 %v2444
        %vm2452 = vmor %vm2450, %vm2451
        %v2453 = vsel %vm2452, %v2444, %v2449
        %v2454 = vrsqrt.pop %v2443
        %v2455 = vmul.f32 %v2454, %v2443
        %v2456 = vmul.f32 %v2455, %v2454
        %v2457 = vmul.f32 0.5, %v2456
        %v2458 = vsub.f32 1.5, %v2457
        %v2459 = vmul.f32 %v2454, %v2458
        %vm2460 = vweird.f32 %v2443
        %vm2461 = vweird.f32 %v2454
        %vm2462 = vmor %vm2460, %vm2461
        %v2463 = vsel %vm2462, %v2454, %v2459
        %v2464 = vmul.f32 %v2432, %v2453
        %v2465 = vmul.f32 %v2433, %v2463
        %v2467 = vperm.slane %v2423, 0
        %v2469 = vmul.f32 %v2464, %v2467
        %v2470 = vmul.f32 %v2465, %v2467
        %v2472 = vperm.slane %v2425, 0
        %v2474 = vadd.f32 %v2469, %v2472
        %v2475 = vadd.f32 %v2470, %v2472
        %v2476 = vadd.f32 %v2474, %v2312
        %v2477 = vadd.f32 %v2475, %v2313
        %v2478 = vadd.f32 %v2476, %v873
        %v2479 = vadd.f32 %v2477, %v874
        %2480 = vst [vmem:[%s637] sm:$0xff] %v2478
        %2481 = vst [vmem:[%s637 + $0x8] sm:$0xff] %v2479
        %s2482 = sand.u32 %s472, 1
        %s2483 = scalar_lea.sflag [#allocation3], %s2482
        %s2484 = sand.u32 %s472, 1
        %s2485 = smul.addr %s2484, 16
        %s2486 = scalar_lea.vmem [#allocation2], %s2485
        // Predicated region
        $region101: #{convtransformer_forward.1} parent=99 // pred_check
          %p2487 = pneg %p482
        $region102: #{convtransformer_forward.1} parent=99 // pred_check_branch
          %2489 = sbr.rel (%p2487) target = $region104
        $region103: #{convtransformer_forward.1} parent=99 // pred_region
          %2491 = vsyncadd %s2483, 0
          %s2492 = smul.addr %s34, 2
          %s2493 = smul.addr %s2492, 8
          %s2494 = scalar_lea.hbm %s20, %s2493
          %s2495 = sshll.u32 %s2486, 4
          %s2496 = int_to_ptr.vmem [resolvable:$true] %s2495
          %s2497 = sshll.u32 %s2494, 4
          %s2498 = int_to_ptr.hbm [resolvable:$true] %s2497
          %2503 = dma.vmem_to_hbm [thread:$0]  %s2496, 256, %s2498, %s2483, 128, 128, 8
        $region104: #{convtransformer_forward.1} parent=99 // pred_fallthru
          _
      $region100: #{convtransformer_forward.1} parent=5 // pred_fallthru
        _
      %p2504 = scmp.le.s32.totalorder 2, %s29
      // Predicated region
      $region105: #{convtransformer_forward.1} parent=5 // pred_check
        %p2505 = pneg %p2504
      $region106: #{convtransformer_forward.1} parent=5 // pred_check_branch
        %2507 = sbr.rel (%p2505) target = $region108
      $region107: #{convtransformer_forward.1} parent=5 // pred_region
        %s2508 = ssub.s32 %s29, 2
        // Predicated region
        $region109: #{convtransformer_forward.1} parent=107 // pred_check
          %p2509 = pneg %p488
        $region110: #{convtransformer_forward.1} parent=107 // pred_check_branch
          %2511 = sbr.rel (%p2509) target = $region112
        $region111: #{convtransformer_forward.1} parent=107 // pred_region
          %s2512 = sand.u32 %s473, 1
          %s2513 = scalar_lea.sflag [#allocation3], %s2512
          %s2514 = sand.u32 %s473, 1
          %s2515 = smul.addr %s2514, 16
          %s2516 = scalar_lea.vmem [#allocation2], %s2515
          %2518 = dma.done %s2513, 256
        $region112: #{convtransformer_forward.1} parent=107 // pred_fallthru
          _
      $region108: #{convtransformer_forward.1} parent=5 // pred_fallthru
        _
    $region6: #{convtransformer_forward.1} parent=1 // loop_footer
      %s33 = sadd.s32 1, %s29
    $region7: #{convtransformer_forward.1} parent=1 // loop_footer_branch
      %28 = sbr.rel target = $region3
    $region8: #{convtransformer_forward.1} parent=1 // loop_exit
      _
    %2519 = vsyncpa [#allocation3], 1
    %s2520 = scalar_lea.sflag [#allocation3], 1
    %2521 = vsyncpa %s2520, 1

</llo_original>
